<compile_context>
chip_gen: v5e
topology: v5e:2x2
jax: 0.10.0
libtpu: 0.0.40
codegen_flags: <defaults>
</compile_context>

<pallas_src>
from functools import partial

import numpy as np
import jax
import jax.numpy as jnp
from jax.experimental import pallas as pl
from jax.experimental.pallas import tpu as pltpu


_LANE = 128          # lane width: bottleneck output channels padded to this
_LPAD = 8            # left/right halo pad in the W (sublane) dim


def _round_up(x, m):
    return ((x + m - 1) // m) * m


# ----------------------------------------------------------------------------
# Exact linear operators for AdaptiveAvgPool2d and bilinear upsample
# ----------------------------------------------------------------------------
def adaptive_avg_pool_matrix(in_size, out_size):
    """Row i averages input bins exactly as torch.nn.AdaptiveAvgPool2d."""
    P = np.zeros((out_size, in_size), dtype=np.float32)
    for i in range(out_size):
        start = (i * in_size) // out_size
        end = -(-((i + 1) * in_size) // out_size)   # ceil
        P[i, start:end] = 1.0 / (end - start)
    return P


def bilinear_interp_matrix(out_size, in_size):
    """F.interpolate(mode='bilinear', align_corners=False) as a matrix."""
    B = np.zeros((out_size, in_size), dtype=np.float32)
    if in_size == 1:
        B[:, 0] = 1.0
        return B
    scale = in_size / out_size
    for o in range(out_size):
        src = max((o + 0.5) * scale - 0.5, 0.0)
        x0 = min(int(np.floor(src)), in_size - 1)
        x1 = min(x0 + 1, in_size - 1)
        l1 = src - x0
        B[o, x0] += 1.0 - l1
        B[o, x1] += l1
    return B


# ----------------------------------------------------------------------------
# The fused Pallas kernel (whole PPM forward for one batch image)
# ----------------------------------------------------------------------------
def _ppm_fused_kernel(x_ref, p2_ref, b2_ref, wcat_ref, bi_ref, mask_ref,
                      wb_ref, bbi_ref, o_ref, xpad_ref, *, H, W):
    # x_ref   : (1, H*W, Cin)   bf16  NHWC input, flattened spatial
    # p2_ref  : (SSp, H*W)      bf16  merged adaptive-avg-pool operator
    # b2_ref  : (H*W, SSp)      bf16  merged bilinear upsample operator
    # wcat_ref: (Cin, ns*Co)    bf16  stage 1x1 weights (BN scale folded), concat
    # bi_ref  : (1, ns*Co)      f32   stage BN bias (per stage block)
    # mask_ref: (SSp, ns*Co)    f32   block-diagonal stage mask (pad rows = 0)
    # wb_ref  : (9, Ctot, Cop)  bf16  3x3 bottleneck weights (BN scale folded)
    # bbi_ref : (1, Cop)        f32   bottleneck BN bias (padded with zeros)
    # o_ref   : (1, H*W, Cop)   f32   lane-dense output (Cop % 128 == 0)
    # xpad_ref: (H+2, W+2*_LPAD, Ctot) bf16  halo / concat-slab scratch
    HW = H * W
    Cin = x_ref.shape[2]
    Ctot = xpad_ref.shape[2]
    Wp = xpad_ref.shape[1]
    Cop = o_ref.shape[2]
    ns_co = Ctot - Cin

    xb = x_ref[0]                                                # (HW, Cin) bf16

    # ---- pyramid stages (merged): pool -> 1x1(scale folded) -> +bias -> ReLU
    #      -> stage mask -> bilinear upsample.  Three bf16 MXU matmuls total.
    pooled = jnp.dot(p2_ref[...], xb, preferred_element_type=jnp.float32)
    y = jnp.dot(pooled.astype(jnp.bfloat16), wcat_ref[...],
                preferred_element_type=jnp.float32)              # (SSp, ns*Co)
    y = jnp.maximum(y + bi_ref[...], 0.0) * mask_ref[...]
    up = jnp.dot(b2_ref[...], y.astype(jnp.bfloat16),
                 preferred_element_type=jnp.float32)             # (HW, ns*Co)

    # ---- halo border zeroing (border only; interior is rewritten each step).
    # Not done once under program_id==0 because with "parallel" batch semantics
    # each TensorCore has its own scratch instance.
    zrow = jnp.zeros((1, Wp, Ctot), xpad_ref.dtype)
    zcol = jnp.zeros((H, _LPAD, Ctot), xpad_ref.dtype)
    xpad_ref[pl.ds(0, 1), :, :] = zrow
    xpad_ref[pl.ds(H + 1, 1), :, :] = zrow
    xpad_ref[pl.ds(1, H), pl.ds(0, _LPAD), :] = zcol
    xpad_ref[pl.ds(1, H), pl.ds(_LPAD + W, _LPAD), :] = zcol

    # ---- concat slab = interior of the halo scratch (bf16, cast once).
    # Channel-slice stores replace the old identity / placement matmuls.
    xpad_ref[pl.ds(1, H), pl.ds(_LPAD, W), pl.ds(0, Cin)] = xb.reshape(H, W, Cin)
    xpad_ref[pl.ds(1, H), pl.ds(_LPAD, W), pl.ds(Cin, ns_co)] = (
        up.astype(jnp.bfloat16).reshape(H, W, ns_co))

    # ---- bottleneck 3x3 conv (BN scale folded into wb) + bias + ReLU ---------
    # bf16 MXU operands, f32 value accumulation; single lane-dense store.
    acc = jnp.zeros((HW, Cop), jnp.float32)
    for ky in range(3):
        for kx in range(3):
            win = xpad_ref[pl.ds(ky, H), pl.ds(_LPAD - 1 + kx, W), :]
            acc = acc + jnp.dot(win.reshape(HW, Ctot), wb_ref[ky * 3 + kx],
                                preferred_element_type=jnp.float32)
    o_ref[0] = jnp.maximum(acc + bbi_ref[...], 0.0).astype(o_ref.dtype)


def ppm_fused(x2_bf, p2, b2, wcat, bi, mask, wb, bbi, *, H, W):
    N, HW, Cin = x2_bf.shape
    assert HW == H * W
    SSp = p2.shape[0]
    ns_co = wcat.shape[1]
    Ctot, Cop = wb.shape[1], wb.shape[2]
    Wp = W + 2 * _LPAD

    # computed VMEM budget (double-buffered operands + scratch + headroom)
    blk_bytes = (HW * Cin * 2 + 2 * SSp * HW * 2 + Cin * ns_co * 2 +
                 ns_co * 4 + SSp * ns_co * 4 + 9 * Ctot * Cop * 2 +
                 Cop * 4 + HW * Cop * 4)
    scratch_bytes = (H + 2) * Wp * Ctot * 2
    vmem_limit = int(min(max(4 * (2 * blk_bytes + scratch_bytes), 16 * 2**20),
                         48 * 2**20))

    return pl.pallas_call(
        partial(_ppm_fused_kernel, H=H, W=W),
        out_shape=jax.ShapeDtypeStruct((N, HW, Cop), jnp.float32),
        grid=(N,),
        in_specs=[
            pl.BlockSpec((1, HW, Cin), lambda n: (n, 0, 0)),
            pl.BlockSpec((SSp, HW), lambda n: (0, 0)),
            pl.BlockSpec((HW, SSp), lambda n: (0, 0)),
            pl.BlockSpec((Cin, ns_co), lambda n: (0, 0)),
            pl.BlockSpec((1, ns_co), lambda n: (0, 0)),
            pl.BlockSpec((SSp, ns_co), lambda n: (0, 0)),
            pl.BlockSpec((9, Ctot, Cop), lambda n: (0, 0, 0)),
            pl.BlockSpec((1, Cop), lambda n: (0, 0)),
        ],
        out_specs=pl.BlockSpec((1, HW, Cop), lambda n: (n, 0, 0)),
        scratch_shapes=[pltpu.VMEM((H + 2, Wp, Ctot), jnp.bfloat16)],
        compiler_params=pltpu.CompilerParams(
            dimension_semantics=("parallel",),
            vmem_limit_bytes=vmem_limit),
    )(x2_bf, p2, b2, wcat, bi, mask, wb, bbi)


# ----------------------------------------------------------------------------
# Parameters (deterministic, synthetic) — BatchNorm folded to scale/bias
# ----------------------------------------------------------------------------
def folded_bn_params(key, c_out, eps=1e-5):
    k1, k2, k3, k4 = jax.random.split(key, 4)
    gamma = jax.random.uniform(k1, (c_out,), minval=0.5, maxval=1.5)
    beta = jax.random.normal(k2, (c_out,)) * 0.1
    mean = jax.random.normal(k3, (c_out,)) * 0.1
    var = jax.random.uniform(k4, (c_out,), minval=0.5, maxval=1.5)
    scale = gamma / jnp.sqrt(var + eps)
    bias = beta - mean * scale
    return scale.astype(jnp.float32), bias.astype(jnp.float32)


def init_params(key, in_channels, out_channels, pool_sizes):
    ns = len(pool_sizes)
    keys = jax.random.split(key, 2 * ns + 2)
    w_stage = jnp.stack([
        jax.random.normal(keys[2 * i], (in_channels, out_channels)) * 0.1
        for i in range(ns)]).astype(jnp.float32)                  # (ns, Cin, Co)
    bn = [folded_bn_params(keys[2 * i + 1], out_channels) for i in range(ns)]
    sc_stage = jnp.stack([s for s, _ in bn])[:, None, :]          # (ns, 1, Co)
    bi_stage = jnp.stack([b for _, b in bn])[:, None, :]          # (ns, 1, Co)
    c_tot = in_channels + ns * out_channels
    wb = (jax.random.normal(keys[-2], (3, 3, c_tot, out_channels)) * 0.1
          ).astype(jnp.float32)                                   # (3,3,Ctot,Co)
    bsc, bbi = folded_bn_params(keys[-1], out_channels)           # (Co,), (Co,)
    return dict(w_stage=w_stage, sc_stage=sc_stage, bi_stage=bi_stage,
                wb=wb, bsc=bsc, bbi=bbi)


def prepare_ppm(params, in_channels, out_channels, pool_sizes, H, W):
    """One-time preprocessing: merged ragged spatial operators, BN-scale-folded
    bf16 weights, stage block mask, lane-padded bottleneck output channels."""
    ns = len(pool_sizes)
    Cin, Co = in_channels, out_channels
    Ctot = Cin + ns * Co
    Cop = _round_up(Co, _LANE)

    sizes = [max(s, 2) for s in pool_sizes]      # matches the PyTorch module
    ss = [s * s for s in sizes]
    offs = np.concatenate([[0], np.cumsum(ss)]).astype(int)
    ss_tot = int(offs[-1])
    ssp = _round_up(ss_tot, 8)                   # sublane-pad the ragged axis

    P2 = np.zeros((ssp, H * W), np.float32)      # pad rows are all-zero
    B2 = np.zeros((H * W, ssp), np.float32)      # matching columns all-zero
    M = np.zeros((ssp, ns * Co), np.float32)     # block-diagonal stage mask
    for i, S in enumerate(sizes):
        ph = adaptive_avg_pool_matrix(H, S)
        pw = adaptive_avg_pool_matrix(W, S)
        bh = bilinear_interp_matrix(H, S)
        bw = bilinear_interp_matrix(W, S)
        r0, r1 = offs[i], offs[i + 1]
        P2[r0:r1] = np.kron(ph, pw)
        B2[:, r0:r1] = np.kron(bh, bw)
        M[r0:r1, i * Co:(i + 1) * Co] = 1.0

    # stage 1x1 conv weights with BN scale folded; concat along out-channels
    w_stage = np.asarray(params["w_stage"], np.float32)   # (ns, Cin, Co)
    sc_stage = np.asarray(params["sc_stage"], np.float32)  # (ns, 1, Co)
    bi_stage = np.asarray(params["bi_stage"], np.float32)  # (ns, 1, Co)
    wcat = np.concatenate([w_stage[i] * sc_stage[i] for i in range(ns)], axis=1)
    bi_all = np.concatenate([bi_stage[i] for i in range(ns)], axis=1)  # (1,nsCo)

    # bottleneck 3x3 weights with BN scale folded; lane-pad output channels
    wb = (np.asarray(params["wb"], np.float32) *
          np.asarray(params["bsc"], np.float32)[None, None, None, :])
    wb9 = np.zeros((9, Ctot, Cop), np.float32)
    wb9[:, :, :Co] = wb.reshape(9, Ctot, Co)
    bbi = np.zeros((1, Cop), np.float32)
    bbi[0, :Co] = np.asarray(params["bbi"], np.float32)

    bf = jnp.bfloat16
    return dict(p2=jnp.asarray(P2, bf), b2=jnp.asarray(B2, bf),
                wcat=jnp.asarray(wcat, bf), bi=jnp.asarray(bi_all),
                mask=jnp.asarray(M), wb=jnp.asarray(wb9, bf),
                bbi=jnp.asarray(bbi))


# ----------------------------------------------------------------------------
# Forward pass (matches PyramidPoolingModule.forward, inference-mode BN)
# ----------------------------------------------------------------------------
@partial(jax.jit, static_argnames=("out_channels",))
def pyramid_pooling_forward(x_nchw, prep, *, out_channels):
    N, Cin, H, W = x_nchw.shape
    # TODO(synk): in an NHWC end-to-end pipeline these boundary transposes vanish.
    x2 = jnp.transpose(x_nchw, (0, 2, 3, 1)).reshape(N, H * W, Cin
                                                     ).astype(jnp.bfloat16)
    out = ppm_fused(x2, prep["p2"], prep["b2"], prep["wcat"], prep["bi"],
                    prep["mask"], prep["wb"], prep["bbi"], H=H, W=W)
    out = out.reshape(N, H, W, -1)[..., :out_channels]
    return jnp.transpose(out, (0, 3, 1, 2))                       # NCHW


# ----------------------------------------------------------------------------
# References for correctness checks
# ----------------------------------------------------------------------------
def reference_bf16(x_nchw, prep, out_channels):
    """Mirrors the kernel's exact math (same prep tensors, same bf16 casts)."""
    N, Cin, H, W = x_nchw.shape
    HW = H * W
    f32 = lambda a: jnp.asarray(a, jnp.float32)
    xb = f32(jnp.transpose(x_nchw, (0, 2, 3, 1)).reshape(N, HW, Cin
                                                         ).astype(jnp.bfloat16))
    pooled = jnp.einsum("sp,npc->nsc", f32(prep["p2"]), xb)
    y = jnp.einsum("nsc,cd->nsd", f32(pooled.astype(jnp.bfloat16)),
                   f32(prep["wcat"]))
    y = jnp.maximum(y + prep["bi"][None], 0.0) * prep["mask"][None]
    up = jnp.einsum("ps,nsd->npd", f32(prep["b2"]), f32(y.astype(jnp.bfloat16)))
    cat = jnp.concatenate([xb, f32(up.astype(jnp.bfloat16))],
                          axis=-1).reshape(N, H, W, -1)
    catp = jnp.pad(cat, ((0, 0), (1, 1), (1, 1), (0, 0)))
    wb = f32(prep["wb"])
    Cop = wb.shape[-1]
    acc = jnp.zeros((N, HW, Cop), jnp.float32)
    for ky in range(3):
        for kx in range(3):
            win = catp[:, ky:ky + H, kx:kx + W, :].reshape(N, HW, -1)
            acc = acc + jnp.einsum("npc,co->npo", win, wb[ky * 3 + kx])
    out = jnp.maximum(acc + prep["bbi"][None], 0.0)
    out = out.reshape(N, H, W, Cop)[..., :out_channels]
    return jnp.transpose(out, (0, 3, 1, 2))


def reference_f32(x_nchw, params, pool_sizes):
    """Pure f32 reference built from the raw (unfolded) parameters."""
    N, Cin, H, W = x_nchw.shape
    x = jnp.transpose(x_nchw, (0, 2, 3, 1)).astype(jnp.float32)
    feats = [x]
    for i, size in enumerate(pool_sizes):
        S = max(size, 2)
        Ph = jnp.asarray(adaptive_avg_pool_matrix(H, S))
        Pw = jnp.asarray(adaptive_avg_pool_matrix(W, S))
        pooled = jnp.einsum("sh,nhwc,tw->nstc", Ph, x, Pw)
        y = jnp.einsum("nstc,cd->nstd", pooled, params["w_stage"][i])
        y = jnp.maximum(y * params["sc_stage"][i, 0] + params["bi_stage"][i, 0],
                        0.0)
        Bh = jnp.asarray(bilinear_interp_matrix(H, S))
        Bw = jnp.asarray(bilinear_interp_matrix(W, S))
        feats.append(jnp.einsum("hs,nstd,wt->nhwd", Bh, y, Bw))
    cat = jnp.concatenate(feats, axis=-1)
    catp = jnp.pad(cat, ((0, 0), (1, 1), (1, 1), (0, 0)))
    Co = params["wb"].shape[-1]
    acc = jnp.zeros((N, H, W, Co), jnp.float32)
    for ky in range(3):
        for kx in range(3):
            acc = acc + jnp.einsum("nhwc,cd->nhwd",
                                   catp[:, ky:ky + H, kx:kx + W, :],
                                   params["wb"][ky, kx])
    out = jnp.maximum(acc * params["bsc"] + params["bbi"], 0.0)
    return jnp.transpose(out, (0, 3, 1, 2))


# ----------------------------------------------------------------------------
if __name__ == "__main__":
    key = jax.random.PRNGKey(0)
    k_x, k_p = jax.random.split(key)

    N, C_in, H, W = 2, 4, 16, 16
    C_out = 8
    pool_sizes = (1, 2, 3, 6)   # pool_size=1 -> 2x2 adaptive pool (PyTorch ref)

    x = jax.random.normal(k_x, (N, C_in, H, W), dtype=jnp.float32)
    params = init_params(k_p, C_in, C_out, pool_sizes)
    prep = prepare_ppm(params, C_in, C_out, pool_sizes, H, W)

    out = jax.block_until_ready(
        pyramid_pooling_forward(x, prep, out_channels=C_out))

    assert out.shape == (N, C_out, H, W), out.shape
    assert bool(jnp.all(jnp.isfinite(out)))

    # Primary (tight) check: a reference that mirrors the kernel's bf16 casts,
    # so any placement / halo / indexing bug shows up well above the tolerance.
    ref_bf = jax.block_until_ready(reference_bf16(x, prep, C_out))
    err_tight = float(jnp.max(jnp.abs(out - ref_bf)))
    assert err_tight < 5e-3, f"tight check failed: max |out - ref_bf16| = {err_tight}"

    # Secondary (loose) sanity check against the pure-f32, unfolded reference:
    # bounds the total bf16-rounding error and validates the prep-time folding.
    ref32 = jax.block_until_ready(reference_f32(x, params, pool_sizes))
    err_loose = float(jnp.max(jnp.abs(out - ref32)))
    assert err_loose < 1e-1, f"loose check failed: max |out - ref_f32| = {err_loose}"

    print("KERNEL_OK")
</pallas_src>

<mosaic_0001>
module attributes {stable_mosaic.version = 11 : i64} {
  func.func @_ppm_fused_kernel(%arg0: i32, %arg1: memref<1x256x4xbf16, #tpu.memory_space<vmem>>, %arg2: memref<56x256xbf16, #tpu.memory_space<vmem>>, %arg3: memref<256x56xbf16, #tpu.memory_space<vmem>>, %arg4: memref<4x32xbf16, #tpu.memory_space<vmem>>, %arg5: memref<1x32xf32, #tpu.memory_space<vmem>>, %arg6: memref<56x32xf32, #tpu.memory_space<vmem>>, %arg7: memref<9x36x128xbf16, #tpu.memory_space<vmem>>, %arg8: memref<1x128xf32, #tpu.memory_space<vmem>>, %arg9: memref<1x256x128xf32, #tpu.memory_space<vmem>>, %arg10: memref<18x32x36xbf16, #tpu.memory_space<vmem>>) attributes {dimension_semantics = [#tpu.dimension_semantics<parallel>], iteration_bounds = array<i64: 2>, scalar_prefetch = 0 : i64, scratch_operands = 1 : i64, tpu.core_type = #tpu.core_type<tc>, window_params = [{transform_indices = @transform_0, window_bounds = array<i64: 1, 256, 4>}, {pipeline_mode = #tpu.pipeline_mode<synchronous>, transform_indices = @transform_1, window_bounds = array<i64: 56, 256>}, {pipeline_mode = #tpu.pipeline_mode<synchronous>, transform_indices = @transform_2, window_bounds = array<i64: 256, 56>}, {pipeline_mode = #tpu.pipeline_mode<synchronous>, transform_indices = @transform_3, window_bounds = array<i64: 4, 32>}, {pipeline_mode = #tpu.pipeline_mode<synchronous>, transform_indices = @transform_4, window_bounds = array<i64: 1, 32>}, {pipeline_mode = #tpu.pipeline_mode<synchronous>, transform_indices = @transform_5, window_bounds = array<i64: 56, 32>}, {pipeline_mode = #tpu.pipeline_mode<synchronous>, transform_indices = @transform_6, window_bounds = array<i64: 9, 36, 128>}, {pipeline_mode = #tpu.pipeline_mode<synchronous>, transform_indices = @transform_7, window_bounds = array<i64: 1, 128>}, {transform_indices = @transform_8, window_bounds = array<i64: 1, 256, 128>}]} {
    %c0 = arith.constant 0 : index
    %c0_0 = arith.constant 0 : index
    %c0_1 = arith.constant 0 : index
    %0 = vector.load %arg1[%c0, %c0_0, %c0_1] : memref<1x256x4xbf16, #tpu.memory_space<vmem>>, vector<1x256x4xbf16>
    %1 = vector.shape_cast %0 : vector<1x256x4xbf16> to vector<256x4xbf16>
    %c0_2 = arith.constant 0 : index
    %c0_3 = arith.constant 0 : index
    %2 = vector.load %arg2[%c0_2, %c0_3] : memref<56x256xbf16, #tpu.memory_space<vmem>>, vector<56x256xbf16>
    %cst = arith.constant dense<0.000000e+00> : vector<56x4xf32>
    %3 = tpu.matmul %2, %1, %cst {dimension_numbers = #tpu.dot_dimension_numbers<[1], [0], [0], [1], [0, 0, 1, 1], [], []>} : vector<56x256xbf16>, vector<256x4xbf16>, vector<56x4xf32> -> vector<56x4xf32>
    %4 = arith.truncf %3 : vector<56x4xf32> to vector<56x4xbf16>
    %c0_4 = arith.constant 0 : index
    %c0_5 = arith.constant 0 : index
    %5 = vector.load %arg4[%c0_4, %c0_5] : memref<4x32xbf16, #tpu.memory_space<vmem>>, vector<4x32xbf16>
    %cst_6 = arith.constant dense<0.000000e+00> : vector<56x32xf32>
    %6 = tpu.matmul %4, %5, %cst_6 {dimension_numbers = #tpu.dot_dimension_numbers<[1], [0], [0], [1], [0, 0, 1, 1], [], []>} : vector<56x4xbf16>, vector<4x32xbf16>, vector<56x32xf32> -> vector<56x32xf32>
    %c0_7 = arith.constant 0 : index
    %c0_8 = arith.constant 0 : index
    %7 = vector.load %arg5[%c0_7, %c0_8] : memref<1x32xf32, #tpu.memory_space<vmem>>, vector<1x32xf32>
    %8 = vector.broadcast %7 : vector<1x32xf32> to vector<56x32xf32>
    %9 = arith.addf %6, %8 : vector<56x32xf32>
    %cst_9 = arith.constant 0.000000e+00 : f32
    %10 = vector.broadcast %cst_9 : f32 to vector<56x32xf32>
    %11 = arith.maximumf %9, %10 : vector<56x32xf32>
    %c0_10 = arith.constant 0 : index
    %c0_11 = arith.constant 0 : index
    %12 = vector.load %arg6[%c0_10, %c0_11] : memref<56x32xf32, #tpu.memory_space<vmem>>, vector<56x32xf32>
    %13 = arith.mulf %11, %12 : vector<56x32xf32>
    %c0_12 = arith.constant 0 : index
    %c0_13 = arith.constant 0 : index
    %14 = vector.load %arg3[%c0_12, %c0_13] : memref<256x56xbf16, #tpu.memory_space<vmem>>, vector<256x56xbf16>
    %15 = arith.truncf %13 : vector<56x32xf32> to vector<56x32xbf16>
    %cst_14 = arith.constant dense<0.000000e+00> : vector<256x32xf32>
    %16 = tpu.matmul %14, %15, %cst_14 {dimension_numbers = #tpu.dot_dimension_numbers<[1], [0], [0], [1], [0, 0, 1, 1], [], []>} : vector<256x56xbf16>, vector<56x32xbf16>, vector<256x32xf32> -> vector<256x32xf32>
    %cst_15 = arith.constant 0.000000e+00 : bf16
    %17 = vector.broadcast %cst_15 : bf16 to vector<1x32x36xbf16>
    %cst_16 = arith.constant 0.000000e+00 : bf16
    %18 = vector.broadcast %cst_16 : bf16 to vector<16x8x36xbf16>
    %c0_17 = arith.constant 0 : index
    %c0_18 = arith.constant 0 : index
    %c0_19 = arith.constant 0 : index
    %19 = vector.load %arg10[%c0_17, %c0_18, %c0_19] : memref<18x32x36xbf16, #tpu.memory_space<vmem>>, vector<1x32x36xbf16>
    tpu.vector_store %arg10[%c0_17, %c0_18, %c0_19], %17 {strides = array<i32>} : memref<18x32x36xbf16, #tpu.memory_space<vmem>>, vector<1x32x36xbf16>,
    %c17 = arith.constant 17 : index
    %c0_20 = arith.constant 0 : index
    %c0_21 = arith.constant 0 : index
    %20 = vector.load %arg10[%c17, %c0_20, %c0_21] : memref<18x32x36xbf16, #tpu.memory_space<vmem>>, vector<1x32x36xbf16>
    tpu.vector_store %arg10[%c17, %c0_20, %c0_21], %17 {strides = array<i32>} : memref<18x32x36xbf16, #tpu.memory_space<vmem>>, vector<1x32x36xbf16>,
    %c1 = arith.constant 1 : index
    %c0_22 = arith.constant 0 : index
    %c0_23 = arith.constant 0 : index
    %21 = vector.load %arg10[%c1, %c0_22, %c0_23] : memref<18x32x36xbf16, #tpu.memory_space<vmem>>, vector<16x8x36xbf16>
    tpu.vector_store %arg10[%c1, %c0_22, %c0_23], %18 {strides = array<i32>} : memref<18x32x36xbf16, #tpu.memory_space<vmem>>, vector<16x8x36xbf16>,
    %c1_24 = arith.constant 1 : index
    %c24 = arith.constant 24 : index
    %c0_25 = arith.constant 0 : index
    %22 = vector.load %arg10[%c1_24, %c24, %c0_25] : memref<18x32x36xbf16, #tpu.memory_space<vmem>>, vector<16x8x36xbf16>
    tpu.vector_store %arg10[%c1_24, %c24, %c0_25], %18 {strides = array<i32>} : memref<18x32x36xbf16, #tpu.memory_space<vmem>>, vector<16x8x36xbf16>,
    %23 = vector.shape_cast %1 : vector<256x4xbf16> to vector<16x16x4xbf16>
    %c1_26 = arith.constant 1 : index
    %c8 = arith.constant 8 : index
    %c0_27 = arith.constant 0 : index
    %24 = vector.load %arg10[%c1_26, %c8, %c0_27] : memref<18x32x36xbf16, #tpu.memory_space<vmem>>, vector<16x16x4xbf16>
    tpu.vector_store %arg10[%c1_26, %c8, %c0_27], %23 {strides = array<i32>} : memref<18x32x36xbf16, #tpu.memory_space<vmem>>, vector<16x16x4xbf16>,
    %25 = arith.truncf %16 : vector<256x32xf32> to vector<256x32xbf16>
    %26 = vector.shape_cast %25 : vector<256x32xbf16> to vector<16x16x32xbf16>
    %c1_28 = arith.constant 1 : index
    %c8_29 = arith.constant 8 : index
    %c4 = arith.constant 4 : index
    %27 = vector.load %arg10[%c1_28, %c8_29, %c4] : memref<18x32x36xbf16, #tpu.memory_space<vmem>>, vector<16x16x32xbf16>
    tpu.vector_store %arg10[%c1_28, %c8_29, %c4], %26 {strides = array<i32>} : memref<18x32x36xbf16, #tpu.memory_space<vmem>>, vector<16x16x32xbf16>,
    %cst_30 = arith.constant 0.000000e+00 : f32
    %28 = vector.broadcast %cst_30 : f32 to vector<256x128xf32>
    %c0_31 = arith.constant 0 : index
    %c7 = arith.constant 7 : index
    %c0_32 = arith.constant 0 : index
    %29 = vector.load %arg10[%c0_31, %c7, %c0_32] : memref<18x32x36xbf16, #tpu.memory_space<vmem>>, vector<16x16x36xbf16>
    %30 = vector.shape_cast %29 : vector<16x16x36xbf16> to vector<256x36xbf16>
    %c0_33 = arith.constant 0 : index
    %c0_34 = arith.constant 0 : index
    %c0_35 = arith.constant 0 : index
    %31 = vector.load %arg7[%c0_33, %c0_34, %c0_35] : memref<9x36x128xbf16, #tpu.memory_space<vmem>>, vector<1x36x128xbf16>
    %32 = vector.shape_cast %31 : vector<1x36x128xbf16> to vector<36x128xbf16>
    %cst_36 = arith.constant dense<0.000000e+00> : vector<256x128xf32>
    %33 = tpu.matmul %30, %32, %cst_36 {dimension_numbers = #tpu.dot_dimension_numbers<[1], [0], [0], [1], [0, 0, 1, 1], [], []>} : vector<256x36xbf16>, vector<36x128xbf16>, vector<256x128xf32> -> vector<256x128xf32>
    %34 = arith.addf %28, %33 : vector<256x128xf32>
    %c0_37 = arith.constant 0 : index
    %c8_38 = arith.constant 8 : index
    %c0_39 = arith.constant 0 : index
    %35 = vector.load %arg10[%c0_37, %c8_38, %c0_39] : memref<18x32x36xbf16, #tpu.memory_space<vmem>>, vector<16x16x36xbf16>
    %36 = vector.shape_cast %35 : vector<16x16x36xbf16> to vector<256x36xbf16>
    %c1_40 = arith.constant 1 : index
    %c0_41 = arith.constant 0 : index
    %c0_42 = arith.constant 0 : index
    %37 = vector.load %arg7[%c1_40, %c0_41, %c0_42] : memref<9x36x128xbf16, #tpu.memory_space<vmem>>, vector<1x36x128xbf16>
    %38 = vector.shape_cast %37 : vector<1x36x128xbf16> to vector<36x128xbf16>
    %cst_43 = arith.constant dense<0.000000e+00> : vector<256x128xf32>
    %39 = tpu.matmul %36, %38, %cst_43 {dimension_numbers = #tpu.dot_dimension_numbers<[1], [0], [0], [1], [0, 0, 1, 1], [], []>} : vector<256x36xbf16>, vector<36x128xbf16>, vector<256x128xf32> -> vector<256x128xf32>
    %40 = arith.addf %34, %39 : vector<256x128xf32>
    %c0_44 = arith.constant 0 : index
    %c9 = arith.constant 9 : index
    %c0_45 = arith.constant 0 : index
    %41 = vector.load %arg10[%c0_44, %c9, %c0_45] : memref<18x32x36xbf16, #tpu.memory_space<vmem>>, vector<16x16x36xbf16>
    %42 = vector.shape_cast %41 : vector<16x16x36xbf16> to vector<256x36xbf16>
    %c2 = arith.constant 2 : index
    %c0_46 = arith.constant 0 : index
    %c0_47 = arith.constant 0 : index
    %43 = vector.load %arg7[%c2, %c0_46, %c0_47] : memref<9x36x128xbf16, #tpu.memory_space<vmem>>, vector<1x36x128xbf16>
    %44 = vector.shape_cast %43 : vector<1x36x128xbf16> to vector<36x128xbf16>
    %cst_48 = arith.constant dense<0.000000e+00> : vector<256x128xf32>
    %45 = tpu.matmul %42, %44, %cst_48 {dimension_numbers = #tpu.dot_dimension_numbers<[1], [0], [0], [1], [0, 0, 1, 1], [], []>} : vector<256x36xbf16>, vector<36x128xbf16>, vector<256x128xf32> -> vector<256x128xf32>
    %46 = arith.addf %40, %45 : vector<256x128xf32>
    %c1_49 = arith.constant 1 : index
    %c7_50 = arith.constant 7 : index
    %c0_51 = arith.constant 0 : index
    %47 = vector.load %arg10[%c1_49, %c7_50, %c0_51] : memref<18x32x36xbf16, #tpu.memory_space<vmem>>, vector<16x16x36xbf16>
    %48 = vector.shape_cast %47 : vector<16x16x36xbf16> to vector<256x36xbf16>
    %c3 = arith.constant 3 : index
    %c0_52 = arith.constant 0 : index
    %c0_53 = arith.constant 0 : index
    %49 = vector.load %arg7[%c3, %c0_52, %c0_53] : memref<9x36x128xbf16, #tpu.memory_space<vmem>>, vector<1x36x128xbf16>
    %50 = vector.shape_cast %49 : vector<1x36x128xbf16> to vector<36x128xbf16>
    %cst_54 = arith.constant dense<0.000000e+00> : vector<256x128xf32>
    %51 = tpu.matmul %48, %50, %cst_54 {dimension_numbers = #tpu.dot_dimension_numbers<[1], [0], [0], [1], [0, 0, 1, 1], [], []>} : vector<256x36xbf16>, vector<36x128xbf16>, vector<256x128xf32> -> vector<256x128xf32>
    %52 = arith.addf %46, %51 : vector<256x128xf32>
    %c1_55 = arith.constant 1 : index
    %c8_56 = arith.constant 8 : index
    %c0_57 = arith.constant 0 : index
    %53 = vector.load %arg10[%c1_55, %c8_56, %c0_57] : memref<18x32x36xbf16, #tpu.memory_space<vmem>>, vector<16x16x36xbf16>
    %54 = vector.shape_cast %53 : vector<16x16x36xbf16> to vector<256x36xbf16>
    %c4_58 = arith.constant 4 : index
    %c0_59 = arith.constant 0 : index
    %c0_60 = arith.constant 0 : index
    %55 = vector.load %arg7[%c4_58, %c0_59, %c0_60] : memref<9x36x128xbf16, #tpu.memory_space<vmem>>, vector<1x36x128xbf16>
    %56 = vector.shape_cast %55 : vector<1x36x128xbf16> to vector<36x128xbf16>
    %cst_61 = arith.constant dense<0.000000e+00> : vector<256x128xf32>
    %57 = tpu.matmul %54, %56, %cst_61 {dimension_numbers = #tpu.dot_dimension_numbers<[1], [0], [0], [1], [0, 0, 1, 1], [], []>} : vector<256x36xbf16>, vector<36x128xbf16>, vector<256x128xf32> -> vector<256x128xf32>
    %58 = arith.addf %52, %57 : vector<256x128xf32>
    %c1_62 = arith.constant 1 : index
    %c9_63 = arith.constant 9 : index
    %c0_64 = arith.constant 0 : index
    %59 = vector.load %arg10[%c1_62, %c9_63, %c0_64] : memref<18x32x36xbf16, #tpu.memory_space<vmem>>, vector<16x16x36xbf16>
    %60 = vector.shape_cast %59 : vector<16x16x36xbf16> to vector<256x36xbf16>
    %c5 = arith.constant 5 : index
    %c0_65 = arith.constant 0 : index
    %c0_66 = arith.constant 0 : index
    %61 = vector.load %arg7[%c5, %c0_65, %c0_66] : memref<9x36x128xbf16, #tpu.memory_space<vmem>>, vector<1x36x128xbf16>
    %62 = vector.shape_cast %61 : vector<1x36x128xbf16> to vector<36x128xbf16>
    %cst_67 = arith.constant dense<0.000000e+00> : vector<256x128xf32>
    %63 = tpu.matmul %60, %62, %cst_67 {dimension_numbers = #tpu.dot_dimension_numbers<[1], [0], [0], [1], [0, 0, 1, 1], [], []>} : vector<256x36xbf16>, vector<36x128xbf16>, vector<256x128xf32> -> vector<256x128xf32>
    %64 = arith.addf %58, %63 : vector<256x128xf32>
    %c2_68 = arith.constant 2 : index
    %c7_69 = arith.constant 7 : index
    %c0_70 = arith.constant 0 : index
    %65 = vector.load %arg10[%c2_68, %c7_69, %c0_70] : memref<18x32x36xbf16, #tpu.memory_space<vmem>>, vector<16x16x36xbf16>
    %66 = vector.shape_cast %65 : vector<16x16x36xbf16> to vector<256x36xbf16>
    %c6 = arith.constant 6 : index
    %c0_71 = arith.constant 0 : index
    %c0_72 = arith.constant 0 : index
    %67 = vector.load %arg7[%c6, %c0_71, %c0_72] : memref<9x36x128xbf16, #tpu.memory_space<vmem>>, vector<1x36x128xbf16>
    %68 = vector.shape_cast %67 : vector<1x36x128xbf16> to vector<36x128xbf16>
    %cst_73 = arith.constant dense<0.000000e+00> : vector<256x128xf32>
    %69 = tpu.matmul %66, %68, %cst_73 {dimension_numbers = #tpu.dot_dimension_numbers<[1], [0], [0], [1], [0, 0, 1, 1], [], []>} : vector<256x36xbf16>, vector<36x128xbf16>, vector<256x128xf32> -> vector<256x128xf32>
    %70 = arith.addf %64, %69 : vector<256x128xf32>
    %c2_74 = arith.constant 2 : index
    %c8_75 = arith.constant 8 : index
    %c0_76 = arith.constant 0 : index
    %71 = vector.load %arg10[%c2_74, %c8_75, %c0_76] : memref<18x32x36xbf16, #tpu.memory_space<vmem>>, vector<16x16x36xbf16>
    %72 = vector.shape_cast %71 : vector<16x16x36xbf16> to vector<256x36xbf16>
    %c7_77 = arith.constant 7 : index
    %c0_78 = arith.constant 0 : index
    %c0_79 = arith.constant 0 : index
    %73 = vector.load %arg7[%c7_77, %c0_78, %c0_79] : memref<9x36x128xbf16, #tpu.memory_space<vmem>>, vector<1x36x128xbf16>
    %74 = vector.shape_cast %73 : vector<1x36x128xbf16> to vector<36x128xbf16>
    %cst_80 = arith.constant dense<0.000000e+00> : vector<256x128xf32>
    %75 = tpu.matmul %72, %74, %cst_80 {dimension_numbers = #tpu.dot_dimension_numbers<[1], [0], [0], [1], [0, 0, 1, 1], [], []>} : vector<256x36xbf16>, vector<36x128xbf16>, vector<256x128xf32> -> vector<256x128xf32>
    %76 = arith.addf %70, %75 : vector<256x128xf32>
    %c2_81 = arith.constant 2 : index
    %c9_82 = arith.constant 9 : index
    %c0_83 = arith.constant 0 : index
    %77 = vector.load %arg10[%c2_81, %c9_82, %c0_83] : memref<18x32x36xbf16, #tpu.memory_space<vmem>>, vector<16x16x36xbf16>
    %78 = vector.shape_cast %77 : vector<16x16x36xbf16> to vector<256x36xbf16>
    %c8_84 = arith.constant 8 : index
    %c0_85 = arith.constant 0 : index
    %c0_86 = arith.constant 0 : index
    %79 = vector.load %arg7[%c8_84, %c0_85, %c0_86] : memref<9x36x128xbf16, #tpu.memory_space<vmem>>, vector<1x36x128xbf16>
    %80 = vector.shape_cast %79 : vector<1x36x128xbf16> to vector<36x128xbf16>
    %cst_87 = arith.constant dense<0.000000e+00> : vector<256x128xf32>
    %81 = tpu.matmul %78, %80, %cst_87 {dimension_numbers = #tpu.dot_dimension_numbers<[1], [0], [0], [1], [0, 0, 1, 1], [], []>} : vector<256x36xbf16>, vector<36x128xbf16>, vector<256x128xf32> -> vector<256x128xf32>
    %82 = arith.addf %76, %81 : vector<256x128xf32>
    %c0_88 = arith.constant 0 : index
    %c0_89 = arith.constant 0 : index
    %83 = vector.load %arg8[%c0_88, %c0_89] : memref<1x128xf32, #tpu.memory_space<vmem>>, vector<1x128xf32>
    %84 = vector.broadcast %83 : vector<1x128xf32> to vector<256x128xf32>
    %85 = arith.addf %82, %84 : vector<256x128xf32>
    %cst_90 = arith.constant 0.000000e+00 : f32
    %86 = vector.broadcast %cst_90 : f32 to vector<256x128xf32>
    %87 = arith.maximumf %85, %86 : vector<256x128xf32>
    %c0_91 = arith.constant 0 : index
    %c0_92 = arith.constant 0 : index
    %c0_93 = arith.constant 0 : index
    %88 = vector.load %arg9[%c0_91, %c0_92, %c0_93] : memref<1x256x128xf32, #tpu.memory_space<vmem>>, vector<1x256x128xf32>
    %89 = vector.shape_cast %88 : vector<1x256x128xf32> to vector<256x128xf32>
    %90 = vector.shape_cast %87 : vector<256x128xf32> to vector<1x256x128xf32>
    tpu.vector_store %arg9[%c0_91, %c0_92, %c0_93], %90 {strides = array<i32>} : memref<1x256x128xf32, #tpu.memory_space<vmem>>, vector<1x256x128xf32>,
    return
  }
  func.func @transform_0(%arg0: i32) -> (i32, i32, i32) {
    %c0_i32 = arith.constant 0 : i32
    %c0_i32_0 = arith.constant 0 : i32
    %c0_i32_1 = arith.constant 0 : i32
    return %arg0, %c0_i32, %c0_i32_0 : i32, i32, i32
  }
  func.func @transform_1(%arg0: i32) -> (i32, i32) {
    %c0_i32 = arith.constant 0 : i32
    %c0_i32_0 = arith.constant 0 : i32
    %c0_i32_1 = arith.constant 0 : i32
    return %c0_i32, %c0_i32_0 : i32, i32
  }
  func.func @transform_2(%arg0: i32) -> (i32, i32) {
    %c0_i32 = arith.constant 0 : i32
    %c0_i32_0 = arith.constant 0 : i32
    %c0_i32_1 = arith.constant 0 : i32
    return %c0_i32, %c0_i32_0 : i32, i32
  }
  func.func @transform_3(%arg0: i32) -> (i32, i32) {
    %c0_i32 = arith.constant 0 : i32
    %c0_i32_0 = arith.constant 0 : i32
    %c0_i32_1 = arith.constant 0 : i32
    return %c0_i32, %c0_i32_0 : i32, i32
  }
  func.func @transform_4(%arg0: i32) -> (i32, i32) {
    %c0_i32 = arith.constant 0 : i32
    %c0_i32_0 = arith.constant 0 : i32
    %c0_i32_1 = arith.constant 0 : i32
    return %c0_i32, %c0_i32_0 : i32, i32
  }
  func.func @transform_5(%arg0: i32) -> (i32, i32) {
    %c0_i32 = arith.constant 0 : i32
    %c0_i32_0 = arith.constant 0 : i32
    %c0_i32_1 = arith.constant 0 : i32
    return %c0_i32, %c0_i32_0 : i32, i32
  }
  func.func @transform_6(%arg0: i32) -> (i32, i32, i32) {
    %c0_i32 = arith.constant 0 : i32
    %c0_i32_0 = arith.constant 0 : i32
    %c0_i32_1 = arith.constant 0 : i32
    %c0_i32_2 = arith.constant 0 : i32
    return %c0_i32, %c0_i32_0, %c0_i32_1 : i32, i32, i32
  }
  func.func @transform_7(%arg0: i32) -> (i32, i32) {
    %c0_i32 = arith.constant 0 : i32
    %c0_i32_0 = arith.constant 0 : i32
    %c0_i32_1 = arith.constant 0 : i32
    return %c0_i32, %c0_i32_0 : i32, i32
  }
  func.func @transform_8(%arg0: i32) -> (i32, i32, i32) {
    %c0_i32 = arith.constant 0 : i32
    %c0_i32_0 = arith.constant 0 : i32
    %c0_i32_1 = arith.constant 0 : i32
    return %arg0, %c0_i32, %c0_i32_0 : i32, i32, i32
  }
}

</mosaic_0001>

<llo_original>
// kernel: pyramid_pooling_forward.1
$region0: #{pyramid_pooling_forward.1}
  #allocation0 [shape = 'u32[]', space=smem, size = 0x4, offset = 0x4, fixed_abs, tag = 'smem constant byte address 0x4 - core index']
  #allocation1 [shape = 'u32[72,128]{1,0:T(1,128)}', space=vmem, size = 0x9000, scoped, tag = 'internal scratch']
  #allocation2 [shape = 'bf16[18,32,36]{2,1,0:T(8,128)(2,1)}', space=vmem, size = 0x24000, scoped, tag = 'scratch operand']
  %s0 = inlined_call_operand.vmem [shape: bf16[2,256,4], index: 0, kind: input, shape index: {}]
  %s1 = inlined_call_operand.vmem [shape: bf16[56,256], index: 1, kind: input, shape index: {}]
  %s2 = inlined_call_operand.vmem [shape: bf16[256,56], index: 2, kind: input, shape index: {}]
  %s3 = inlined_call_operand.vmem [shape: bf16[4,32], index: 3, kind: input, shape index: {}]
  %s4 = inlined_call_operand.vmem [shape: f32[1,32], index: 4, kind: input, shape index: {}]
  %s5 = inlined_call_operand.vmem [shape: f32[56,32], index: 5, kind: input, shape index: {}]
  %s6 = inlined_call_operand.vmem [shape: bf16[9,36,128], index: 6, kind: input, shape index: {}]
  %s7 = inlined_call_operand.vmem [shape: f32[1,128], index: 7, kind: input, shape index: {}]
  %s8 = inlined_call_operand.vmem [shape: f32[2,256,128], index: 8, kind: output, shape index: {}]
  %s9 = sld [smem:[#allocation0]]
  $region65: #{pyramid_pooling_forward.1} parent=0
    _
  %s11 = ssub.s32 1, %s9
  %s12 = scalar_select 0, %s11, %s9
  loop: start=0, step=1, limit=4
  $region2: #{pyramid_pooling_forward.1} parent=0 // loop_pre_header
    _
  $region3: #{pyramid_pooling_forward.1} parent=0 // loop_header
    %s14 = sphi 0, %s18
    %p15 = scmp.ge.s32.totalorder %s14, 4
    %s24 = sphi 0, %s26
    %s27 = sphi 0, %s24
    %s28 = sphi 0, %s27
    %s44 = sphi 0, %s28
    %s48 = sphi 0, %s48
    %s50 = sphi 0, %s48
    %s51 = sphi 0, %s50
    %s65 = sphi 0, %s51
    %s69 = sphi 0, %s69
    %s71 = sphi 0, %s69
    %s72 = sphi 0, %s71
    %s86 = sphi 0, %s72
    %s90 = sphi 0, %s90
    %s92 = sphi 0, %s90
    %s93 = sphi 0, %s92
    %s107 = sphi 0, %s93
    %s111 = sphi 0, %s111
    %s113 = sphi 0, %s111
    %s114 = sphi 0, %s113
    %s128 = sphi 0, %s114
    %s132 = sphi 0, %s132
    %s134 = sphi 0, %s132
    %s135 = sphi 0, %s134
    %s149 = sphi 0, %s135
    %s153 = sphi 0, %s153
    %s155 = sphi 0, %s153
    %s156 = sphi 0, %s155
    %s170 = sphi 0, %s156
    %s174 = sphi 0, %s174
    %s176 = sphi 0, %s174
    %s177 = sphi 0, %s176
    %s191 = sphi 0, %s177
    %s197 = sphi 0, %s199
    %s200 = sphi 0, %s197
    %s201 = sphi 0, %s200
    %s217 = sphi 0, %s201
  $region4: #{pyramid_pooling_forward.1} parent=0 // loop_header_branch
    %17 = sbr.rel (%p15) target = $region8
  $region5: #{pyramid_pooling_forward.1} parent=0 // loop_body
    %s19 = ssub.s32 %s14, 1
    %s20 = ssub.s32 %s14, 2
    %s21 = sadd.s32 %s14, 1
    %s22 = ssub.s32 %s14, %s21
    %p23 = scmp.eq.s32.totalorder %s22, 0
    %s25 = sadd.s32 %s24, 1
    %s26 = scalar_select %p23, %s24, %s25
    %p29 = pneg %p23
    %p30 = scmp.eq.s32.totalorder %s14, 1
    %p31 = por %p29, %p30
    %p32 = scmp.ne.s32.totalorder %s24, %s27
    %p33 = scmp.eq.s32.totalorder %s14, 0
    %p34 = por %p32, %p33
    %p35 = scmp.ne.s32.totalorder %s24, %s27
    %p36 = scmp.eq.s32.totalorder %s19, 1
    %p37 = por %p35, %p36
    %p38 = scmp.ne.s32.totalorder %s27, %s28
    %p39 = scmp.eq.s32.totalorder %s19, 0
    %p40 = por %p38, %p39
    %p41 = scmp.ne.s32.totalorder %s27, %s28
    %p42 = scmp.eq.s32.totalorder %s20, 1
    %p43 = por %p41, %p42
    %p45 = scmp.ne.s32.totalorder %s28, %s44
    %p46 = scmp.eq.s32.totalorder %s20, 0
    %p47 = por %p45, %p46
    %s49 = sadd.s32 %s48, 1
    %p52 = scmp.eq.s32.totalorder %s14, 1
    %p53 = scmp.ne.s32.totalorder %s48, %s50
    %p54 = scmp.eq.s32.totalorder %s14, 0
    %p55 = por %p53, %p54
    %p56 = scmp.ne.s32.totalorder %s48, %s50
    %p57 = scmp.eq.s32.totalorder %s19, 1
    %p58 = por %p56, %p57
    %p59 = scmp.ne.s32.totalorder %s50, %s51
    %p60 = scmp.eq.s32.totalorder %s19, 0
    %p61 = por %p59, %p60
    %p62 = scmp.ne.s32.totalorder %s50, %s51
    %p63 = scmp.eq.s32.totalorder %s20, 1
    %p64 = por %p62, %p63
    %p66 = scmp.ne.s32.totalorder %s51, %s65
    %p67 = scmp.eq.s32.totalorder %s20, 0
    %p68 = por %p66, %p67
    %s70 = sadd.s32 %s69, 1
    %p73 = scmp.eq.s32.totalorder %s14, 1
    %p74 = scmp.ne.s32.totalorder %s69, %s71
    %p75 = scmp.eq.s32.totalorder %s14, 0
    %p76 = por %p74, %p75
    %p77 = scmp.ne.s32.totalorder %s69, %s71
    %p78 = scmp.eq.s32.totalorder %s19, 1
    %p79 = por %p77, %p78
    %p80 = scmp.ne.s32.totalorder %s71, %s72
    %p81 = scmp.eq.s32.totalorder %s19, 0
    %p82 = por %p80, %p81
    %p83 = scmp.ne.s32.totalorder %s71, %s72
    %p84 = scmp.eq.s32.totalorder %s20, 1
    %p85 = por %p83, %p84
    %p87 = scmp.ne.s32.totalorder %s72, %s86
    %p88 = scmp.eq.s32.totalorder %s20, 0
    %p89 = por %p87, %p88
    %s91 = sadd.s32 %s90, 1
    %p94 = scmp.eq.s32.totalorder %s14, 1
    %p95 = scmp.ne.s32.totalorder %s90, %s92
    %p96 = scmp.eq.s32.totalorder %s14, 0
    %p97 = por %p95, %p96
    %p98 = scmp.ne.s32.totalorder %s90, %s92
    %p99 = scmp.eq.s32.totalorder %s19, 1
    %p100 = por %p98, %p99
    %p101 = scmp.ne.s32.totalorder %s92, %s93
    %p102 = scmp.eq.s32.totalorder %s19, 0
    %p103 = por %p101, %p102
    %p104 = scmp.ne.s32.totalorder %s92, %s93
    %p105 = scmp.eq.s32.totalorder %s20, 1
    %p106 = por %p104, %p105
    %p108 = scmp.ne.s32.totalorder %s93, %s107
    %p109 = scmp.eq.s32.totalorder %s20, 0
    %p110 = por %p108, %p109
    %s112 = sadd.s32 %s111, 1
    %p115 = scmp.eq.s32.totalorder %s14, 1
    %p116 = scmp.ne.s32.totalorder %s111, %s113
    %p117 = scmp.eq.s32.totalorder %s14, 0
    %p118 = por %p116, %p117
    %p119 = scmp.ne.s32.totalorder %s111, %s113
    %p120 = scmp.eq.s32.totalorder %s19, 1
    %p121 = por %p119, %p120
    %p122 = scmp.ne.s32.totalorder %s113, %s114
    %p123 = scmp.eq.s32.totalorder %s19, 0
    %p124 = por %p122, %p123
    %p125 = scmp.ne.s32.totalorder %s113, %s114
    %p126 = scmp.eq.s32.totalorder %s20, 1
    %p127 = por %p125, %p126
    %p129 = scmp.ne.s32.totalorder %s114, %s128
    %p130 = scmp.eq.s32.totalorder %s20, 0
    %p131 = por %p129, %p130
    %s133 = sadd.s32 %s132, 1
    %p136 = scmp.eq.s32.totalorder %s14, 1
    %p137 = scmp.ne.s32.totalorder %s132, %s134
    %p138 = scmp.eq.s32.totalorder %s14, 0
    %p139 = por %p137, %p138
    %p140 = scmp.ne.s32.totalorder %s132, %s134
    %p141 = scmp.eq.s32.totalorder %s19, 1
    %p142 = por %p140, %p141
    %p143 = scmp.ne.s32.totalorder %s134, %s135
    %p144 = scmp.eq.s32.totalorder %s19, 0
    %p145 = por %p143, %p144
    %p146 = scmp.ne.s32.totalorder %s134, %s135
    %p147 = scmp.eq.s32.totalorder %s20, 1
    %p148 = por %p146, %p147
    %p150 = scmp.ne.s32.totalorder %s135, %s149
    %p151 = scmp.eq.s32.totalorder %s20, 0
    %p152 = por %p150, %p151
    %s154 = sadd.s32 %s153, 1
    %p157 = scmp.eq.s32.totalorder %s14, 1
    %p158 = scmp.ne.s32.totalorder %s153, %s155
    %p159 = scmp.eq.s32.totalorder %s14, 0
    %p160 = por %p158, %p159
    %p161 = scmp.ne.s32.totalorder %s153, %s155
    %p162 = scmp.eq.s32.totalorder %s19, 1
    %p163 = por %p161, %p162
    %p164 = scmp.ne.s32.totalorder %s155, %s156
    %p165 = scmp.eq.s32.totalorder %s19, 0
    %p166 = por %p164, %p165
    %p167 = scmp.ne.s32.totalorder %s155, %s156
    %p168 = scmp.eq.s32.totalorder %s20, 1
    %p169 = por %p167, %p168
    %p171 = scmp.ne.s32.totalorder %s156, %s170
    %p172 = scmp.eq.s32.totalorder %s20, 0
    %p173 = por %p171, %p172
    %s175 = sadd.s32 %s174, 1
    %p178 = scmp.eq.s32.totalorder %s14, 1
    %p179 = scmp.ne.s32.totalorder %s174, %s176
    %p180 = scmp.eq.s32.totalorder %s14, 0
    %p181 = por %p179, %p180
    %p182 = scmp.ne.s32.totalorder %s174, %s176
    %p183 = scmp.eq.s32.totalorder %s19, 1
    %p184 = por %p182, %p183
    %p185 = scmp.ne.s32.totalorder %s176, %s177
    %p186 = scmp.eq.s32.totalorder %s19, 0
    %p187 = por %p185, %p186
    %p188 = scmp.ne.s32.totalorder %s176, %s177
    %p189 = scmp.eq.s32.totalorder %s20, 1
    %p190 = por %p188, %p189
    %p192 = scmp.ne.s32.totalorder %s177, %s191
    %p193 = scmp.eq.s32.totalorder %s20, 0
    %p194 = por %p192, %p193
    %s195 = ssub.s32 %s14, %s21
    %p196 = scmp.eq.s32.totalorder %s195, 0
    %s198 = sadd.s32 %s197, 1
    %s199 = scalar_select %p196, %s197, %s198
    %p202 = pneg %p196
    %p203 = scmp.eq.s32.totalorder %s14, 1
    %p204 = por %p202, %p203
    %p205 = scmp.ne.s32.totalorder %s197, %s200
    %p206 = scmp.eq.s32.totalorder %s14, 0
    %p207 = por %p205, %p206
    %p208 = scmp.ne.s32.totalorder %s197, %s200
    %p209 = scmp.eq.s32.totalorder %s19, 1
    %p210 = por %p208, %p209
    %p211 = scmp.ne.s32.totalorder %s200, %s201
    %p212 = scmp.eq.s32.totalorder %s19, 0
    %p213 = por %p211, %p212
    %p214 = scmp.ne.s32.totalorder %s200, %s201
    %p215 = scmp.eq.s32.totalorder %s20, 1
    %p216 = por %p214, %p215
    %p218 = scmp.ne.s32.totalorder %s201, %s217
    %p219 = scmp.eq.s32.totalorder %s20, 0
    %p220 = por %p218, %p219
    %p221 = scmp.le.s32.totalorder 1, %s14
    %p222 = scmp.lt.s32.totalorder %s14, 3
    %p223 = pnand %p221, %p222
    %p224 = pneg %p223
    // Predicated region
    $region9: #{pyramid_pooling_forward.1} parent=5 // pred_check
      _
    $region10: #{pyramid_pooling_forward.1} parent=5 // pred_check_branch
      %226 = sbr.rel (%p223) target = $region12
    $region11: #{pyramid_pooling_forward.1} parent=5 // pred_region
      %s227 = ssub.s32 %s14, 1
      // Predicated region
      $region13: #{pyramid_pooling_forward.1} parent=11 // pred_check
        %p228 = pneg %p61
      $region14: #{pyramid_pooling_forward.1} parent=11 // pred_check_branch
        %230 = sbr.rel (%p228) target = $region16
      $region15: #{pyramid_pooling_forward.1} parent=11 // pred_region
        _
      $region16: #{pyramid_pooling_forward.1} parent=11 // pred_fallthru
        _
      // Predicated region
      $region17: #{pyramid_pooling_forward.1} parent=11 // pred_check
        %p231 = pneg %p82
      $region18: #{pyramid_pooling_forward.1} parent=11 // pred_check_branch
        %233 = sbr.rel (%p231) target = $region20
      $region19: #{pyramid_pooling_forward.1} parent=11 // pred_region
        _
      $region20: #{pyramid_pooling_forward.1} parent=11 // pred_fallthru
        _
      // Predicated region
      $region21: #{pyramid_pooling_forward.1} parent=11 // pred_check
        %p234 = pneg %p103
      $region22: #{pyramid_pooling_forward.1} parent=11 // pred_check_branch
        %236 = sbr.rel (%p234) target = $region24
      $region23: #{pyramid_pooling_forward.1} parent=11 // pred_region
        _
      $region24: #{pyramid_pooling_forward.1} parent=11 // pred_fallthru
        _
      // Predicated region
      $region25: #{pyramid_pooling_forward.1} parent=11 // pred_check
        %p237 = pneg %p124
      $region26: #{pyramid_pooling_forward.1} parent=11 // pred_check_branch
        %239 = sbr.rel (%p237) target = $region28
      $region27: #{pyramid_pooling_forward.1} parent=11 // pred_region
        _
      $region28: #{pyramid_pooling_forward.1} parent=11 // pred_fallthru
        _
      // Predicated region
      $region29: #{pyramid_pooling_forward.1} parent=11 // pred_check
        %p240 = pneg %p145
      $region30: #{pyramid_pooling_forward.1} parent=11 // pred_check_branch
        %242 = sbr.rel (%p240) target = $region32
      $region31: #{pyramid_pooling_forward.1} parent=11 // pred_region
        _
      $region32: #{pyramid_pooling_forward.1} parent=11 // pred_fallthru
        _
      // Predicated region
      $region33: #{pyramid_pooling_forward.1} parent=11 // pred_check
        %p243 = pneg %p166
      $region34: #{pyramid_pooling_forward.1} parent=11 // pred_check_branch
        %245 = sbr.rel (%p243) target = $region36
      $region35: #{pyramid_pooling_forward.1} parent=11 // pred_region
        _
      $region36: #{pyramid_pooling_forward.1} parent=11 // pred_fallthru
        _
      // Predicated region
      $region37: #{pyramid_pooling_forward.1} parent=11 // pred_check
        %p246 = pneg %p187
      $region38: #{pyramid_pooling_forward.1} parent=11 // pred_check_branch
        %248 = sbr.rel (%p246) target = $region40
      $region39: #{pyramid_pooling_forward.1} parent=11 // pred_region
        _
      $region40: #{pyramid_pooling_forward.1} parent=11 // pred_fallthru
        _
    $region12: #{pyramid_pooling_forward.1} parent=5 // pred_fallthru
      _
    %p249 = scmp.lt.s32.totalorder %s14, 2
    // Predicated region
    $region41: #{pyramid_pooling_forward.1} parent=5 // pred_check
      %p250 = pneg %p249
    $region42: #{pyramid_pooling_forward.1} parent=5 // pred_check_branch
      %252 = sbr.rel (%p250) target = $region44
    $region43: #{pyramid_pooling_forward.1} parent=5 // pred_region
      // Predicated region
      $region45: #{pyramid_pooling_forward.1} parent=43 // pred_check
        %p253 = pneg %p34
      $region46: #{pyramid_pooling_forward.1} parent=43 // pred_check_branch
        %255 = sbr.rel (%p253) target = $region48
      $region47: #{pyramid_pooling_forward.1} parent=43 // pred_region
        %p256 = scmp.lt.s32.totalorder %s14, 1
        %s257 = scalar_select %p256, %s14, 1
        %s258 = smul.addr %s257, 32
        %s259 = smul.addr %s258, 4
        %s260 = scalar_lea.vmem %s0, %s259
      $region48: #{pyramid_pooling_forward.1} parent=43 // pred_fallthru
        _
    $region44: #{pyramid_pooling_forward.1} parent=5 // pred_fallthru
      _
    %p261 = scmp.le.s32.totalorder 1, %s14
    %p262 = scmp.lt.s32.totalorder %s14, 3
    %p263 = pnand %p261, %p262
    %p264 = pneg %p263
    // Predicated region
    $region49: #{pyramid_pooling_forward.1} parent=5 // pred_check
      _
    $region50: #{pyramid_pooling_forward.1} parent=5 // pred_check_branch
      %266 = sbr.rel (%p263) target = $region52
    $region51: #{pyramid_pooling_forward.1} parent=5 // pred_region
      %s267 = ssub.s32 %s14, 1
      %p268 = scmp.lt.s32.totalorder %s19, 1
      %s269 = scalar_select %p268, %s19, 1
      %s270 = smul.addr %s269, 32
      %s271 = smul.addr %s270, 4
      %s272 = scalar_lea.vmem %s0, %s271
      %p273 = pneg %p40
      %p274 = pneg %p37
      %p275 = pneg %p61
      %p276 = pneg %p58
      %p277 = pneg %p82
      %p278 = pneg %p79
      %p279 = pneg %p103
      %p280 = pneg %p100
      %p281 = pneg %p124
      %p282 = pneg %p121
      %p283 = pneg %p145
      %p284 = pneg %p142
      %p285 = pneg %p166
      %p286 = pneg %p163
      %p287 = pneg %p187
      %p288 = pneg %p184
      %p289 = pneg %p213
      %p290 = pneg %p210
      %p291 = scmp.lt.s32.totalorder %s19, 1
      %s292 = scalar_select %p291, %s19, 1
      %s293 = smul.addr %s292, 32
      %s294 = smul.addr %s293, 8
      %s295 = scalar_lea.vmem %s8, %s294
      %p296 = scmp.lt.s32.totalorder %s19, 1
      %s297 = scalar_select %p296, %s19, 1
      %s298 = smul.addr %s297, 32
      %s299 = smul.addr %s298, 4
      %s300 = scalar_lea.vmem %s0, %s299
      %p301 = scmp.lt.s32.totalorder %s19, 1
      %s302 = scalar_select %p301, %s19, 1
      %s303 = smul.addr %s302, 32
      %s304 = smul.addr %s303, 8
      %s305 = scalar_lea.vmem %s8, %s304
      %v307 = vld [vmem:[%s300] sm:$0xf]
      %v308 = vld [vmem:[%s300 + $0x4] sm:$0xf]
      %v309 = vld [vmem:[%s300 + $0x8] sm:$0xf]
      %v310 = vld [vmem:[%s300 + $0xc] sm:$0xf]
      %v311 = vld [vmem:[%s300 + $0x10] sm:$0xf]
      %v312 = vld [vmem:[%s300 + $0x14] sm:$0xf]
      %v313 = vld [vmem:[%s300 + $0x18] sm:$0xf]
      %v314 = vld [vmem:[%s300 + $0x1c] sm:$0xf]
      %v315 = vld [vmem:[%s300 + $0x20] sm:$0xf]
      %v316 = vld [vmem:[%s300 + $0x24] sm:$0xf]
      %v317 = vld [vmem:[%s300 + $0x28] sm:$0xf]
      %v318 = vld [vmem:[%s300 + $0x2c] sm:$0xf]
      %v319 = vld [vmem:[%s300 + $0x30] sm:$0xf]
      %v320 = vld [vmem:[%s300 + $0x34] sm:$0xf]
      %v321 = vld [vmem:[%s300 + $0x38] sm:$0xf]
      %v322 = vld [vmem:[%s300 + $0x3c] sm:$0xf]
      %v323 = vld [vmem:[%s300 + $0x40] sm:$0xf]
      %v324 = vld [vmem:[%s300 + $0x44] sm:$0xf]
      %v325 = vld [vmem:[%s300 + $0x48] sm:$0xf]
      %v326 = vld [vmem:[%s300 + $0x4c] sm:$0xf]
      %v327 = vld [vmem:[%s300 + $0x50] sm:$0xf]
      %v328 = vld [vmem:[%s300 + $0x54] sm:$0xf]
      %v329 = vld [vmem:[%s300 + $0x58] sm:$0xf]
      %v330 = vld [vmem:[%s300 + $0x5c] sm:$0xf]
      %v331 = vld [vmem:[%s300 + $0x60] sm:$0xf]
      %v332 = vld [vmem:[%s300 + $0x64] sm:$0xf]
      %v333 = vld [vmem:[%s300 + $0x68] sm:$0xf]
      %v334 = vld [vmem:[%s300 + $0x6c] sm:$0xf]
      %v335 = vld [vmem:[%s300 + $0x70] sm:$0xf]
      %v336 = vld [vmem:[%s300 + $0x74] sm:$0xf]
      %v337 = vld [vmem:[%s300 + $0x78] sm:$0xf]
      %v338 = vld [vmem:[%s300 + $0x7c] sm:$0xf]
      %v339 = vld [vmem:[%s1] sm:$0xff]
      %v340 = vld [vmem:[%s1 + $0x8] sm:$0xff]
      %v341 = vld [vmem:[%s1 + $0x10] sm:$0xff]
      %v342 = vld [vmem:[%s1 + $0x18] sm:$0xff]
      %v343 = vld [vmem:[%s1 + $0x20] sm:$0xff]
      %v344 = vld [vmem:[%s1 + $0x28] sm:$0xff]
      %v345 = vld [vmem:[%s1 + $0x30] sm:$0xff]
      %v353 = vunpack.c.l.b16 %v339
      %v354 = vunpack.c.h.b16 %v339
      %v355 = vunpack.c.l.b16 %v340
      %v356 = vunpack.c.h.b16 %v340
      %v357 = vunpack.c.l.b16 %v341
      %v358 = vunpack.c.h.b16 %v341
      %v359 = vunpack.c.l.b16 %v342
      %v360 = vunpack.c.h.b16 %v342
      %v361 = vunpack.c.l.b16 %v343
      %v362 = vunpack.c.h.b16 %v343
      %v363 = vunpack.c.l.b16 %v344
      %v364 = vunpack.c.h.b16 %v344
      %v365 = vunpack.c.l.b16 %v345
      %v366 = vunpack.c.h.b16 %v345
      %v367 = vpack.c.b16 %v355, %v353
      %v368 = vpack.c.b16 %v356, %v354
      %v369 = vpack.c.b16 %v359, %v357
      %v370 = vpack.c.b16 %v360, %v358
      %v371 = vpack.c.b16 %v363, %v361
      %v372 = vpack.c.b16 %v364, %v362
      %v373 = vpack.c.b16 %v365, %v365
      %v374 = vpack.c.b16 %v366, %v366
      %v415 = vunpack.c.l.b16 %v307
      %v416 = vunpack.c.l.b16 %v308
      %v417 = vunpack.c.l.b16 %v309
      %v418 = vunpack.c.l.b16 %v310
      %v419 = vunpack.c.l.b16 %v311
      %v420 = vunpack.c.l.b16 %v312
      %v421 = vunpack.c.l.b16 %v313
      %v422 = vunpack.c.l.b16 %v314
      %v423 = vunpack.c.l.b16 %v315
      %v424 = vunpack.c.l.b16 %v316
      %v425 = vunpack.c.l.b16 %v317
      %v426 = vunpack.c.l.b16 %v318
      %v427 = vunpack.c.l.b16 %v319
      %v428 = vunpack.c.l.b16 %v320
      %v429 = vunpack.c.l.b16 %v321
      %v430 = vunpack.c.l.b16 %v322
      %v431 = vunpack.c.l.b16 %v323
      %v432 = vunpack.c.l.b16 %v324
      %v433 = vunpack.c.l.b16 %v325
      %v434 = vunpack.c.l.b16 %v326
      %v435 = vunpack.c.l.b16 %v327
      %v436 = vunpack.c.l.b16 %v328
      %v437 = vunpack.c.l.b16 %v329
      %v438 = vunpack.c.l.b16 %v330
      %v439 = vunpack.c.l.b16 %v331
      %v440 = vunpack.c.l.b16 %v332
      %v441 = vunpack.c.l.b16 %v333
      %v442 = vunpack.c.l.b16 %v334
      %v443 = vunpack.c.l.b16 %v335
      %v444 = vunpack.c.l.b16 %v336
      %v445 = vunpack.c.l.b16 %v337
      %v446 = vunpack.c.l.b16 %v338
      %v447 = vpack.c.b16 %v416, %v415
      %v448 = vpack.c.b16 %v418, %v417
      %v449 = vpack.c.b16 %v420, %v419
      %v450 = vpack.c.b16 %v422, %v421
      %v451 = vpack.c.b16 %v424, %v423
      %v452 = vpack.c.b16 %v426, %v425
      %v453 = vpack.c.b16 %v428, %v427
      %v454 = vpack.c.b16 %v430, %v429
      %v455 = vpack.c.b16 %v432, %v431
      %v456 = vpack.c.b16 %v434, %v433
      %v457 = vpack.c.b16 %v436, %v435
      %v458 = vpack.c.b16 %v438, %v437
      %v459 = vpack.c.b16 %v440, %v439
      %v460 = vpack.c.b16 %v442, %v441
      %v461 = vpack.c.b16 %v444, %v443
      %v462 = vpack.c.b16 %v446, %v445
      %479 = vmatpush.bf16.msra.mxu0 %v454
      %480 = vmatpush.bf16.msra.mxu0 %v453
      %481 = vmatpush.bf16.msra.mxu0 %v452
      %482 = vmatpush.bf16.msra.mxu0 %v451
      %483 = vmatpush.bf16.msra.mxu0 %v450
      %484 = vmatpush.bf16.msra.mxu0 %v449
      %485 = vmatpush.bf16.msra.mxu0 %v448
      %486 = vmatpush.bf16.msra.mxu0 %v447
      %487 = vmatmul.bf16.gmra.mxu0 %v367
      %v488 = vpop.f32.mrf.mxu0
      %v489 = vadd.f32 0.0, %v488
      %v490 = vpop.f32.mrf.mxu0
      %v491 = vadd.f32 0.0, %v490
      %492 = vmatmul.bf16.gmra.mxu0 %v369
      %v493 = vpop.f32.mrf.mxu0
      %v494 = vadd.f32 0.0, %v493
      %v495 = vpop.f32.mrf.mxu0
      %v496 = vadd.f32 0.0, %v495
      %497 = vmatmul.bf16.gmra.mxu0 %v371
      %v498 = vpop.f32.mrf.mxu0
      %v499 = vadd.f32 0.0, %v498
      %v500 = vpop.f32.mrf.mxu0
      %v501 = vadd.f32 0.0, %v500
      %502 = vmatmul.bf16.gmra.mxu0 %v373
      %v503 = vpop.f32.mrf.mxu0
      %v504 = vadd.f32 0.0, %v503
      %v505 = vpop.f32.mrf.mxu0
      %506 = vdwg.mxu0
      %507 = vmatpush.bf16.msra.mxu0 %v462
      %508 = vmatpush.bf16.msra.mxu0 %v461
      %509 = vmatpush.bf16.msra.mxu0 %v460
      %510 = vmatpush.bf16.msra.mxu0 %v459
      %511 = vmatpush.bf16.msra.mxu0 %v458
      %512 = vmatpush.bf16.msra.mxu0 %v457
      %513 = vmatpush.bf16.msra.mxu0 %v456
      %514 = vmatpush.bf16.msra.mxu0 %v455
      %515 = vmatmul.bf16.gmra.mxu0 %v368
      %v516 = vpop.f32.mrf.mxu0
      %v517 = vadd.f32 %v489, %v516
      %v518 = vpop.f32.mrf.mxu0
      %v519 = vadd.f32 %v491, %v518
      %520 = vmatmul.bf16.gmra.mxu0 %v370
      %v521 = vpop.f32.mrf.mxu0
      %v522 = vadd.f32 %v494, %v521
      %v523 = vpop.f32.mrf.mxu0
      %v524 = vadd.f32 %v496, %v523
      %525 = vmatmul.bf16.gmra.mxu0 %v372
      %v526 = vpop.f32.mrf.mxu0
      %v527 = vadd.f32 %v499, %v526
      %v528 = vpop.f32.mrf.mxu0
      %v529 = vadd.f32 %v501, %v528
      %530 = vmatmul.bf16.gmra.mxu0 %v374
      %v531 = vpop.f32.mrf.mxu0
      %v532 = vadd.f32 %v504, %v531
      %v533 = vpop.f32.mrf.mxu0
      %534 = vdwg.mxu0
      %v535 = vpack.c.bf16 %v519, %v517
      %v536 = vpack.c.bf16 %v524, %v522
      %v537 = vpack.c.bf16 %v529, %v527
      %v538 = vpack.c.bf16 %v532, %v532
      %v539 = vld [vmem:[%s3] sm:$0x3]
      %v540 = vld [vmem:[%s4] sm:$0x1]
      %v542 = vperm.slane %v540, 0
      %vm544 = vcmask 31744
      %v546 = vsel %vm544, %v535, 0
      %v549 = vsel %vm544, %v536, 0
      %v552 = vsel %vm544, %v537, 0
      %v555 = vsel %vm544, %v538, 0
      %vm557 = vcmask 1041408
      %v559 = vsel %vm557, %v539, 0
      %561 = vmatpush.bf16.msra.mxu0 0
      %562 = vmatpush.bf16.msra.mxu0 0
      %563 = vmatpush.bf16.msra.mxu0 0
      %564 = vmatpush.bf16.msra.mxu0 0
      %565 = vmatpush.bf16.msra.mxu0 0
      %566 = vmatpush.bf16.msra.mxu0 0
      %567 = vmatpush.bf16.msra.mxu0 0
      %568 = vmatpush.bf16.msra.mxu0 %v559
      %569 = vmatmul.bf16.gmra.mxu0 %v546
      %v570 = vpop.f32.mrf.mxu0
      %v571 = vadd.f32 %v542, %v570
      %v572 = vpop.f32.mrf.mxu0
      %v573 = vadd.f32 %v542, %v572
      %574 = vmatmul.bf16.gmra.mxu0 %v549
      %v575 = vpop.f32.mrf.mxu0
      %v576 = vadd.f32 %v542, %v575
      %v577 = vpop.f32.mrf.mxu0
      %v578 = vadd.f32 %v542, %v577
      %579 = vmatmul.bf16.gmra.mxu0 %v552
      %v580 = vpop.f32.mrf.mxu0
      %v581 = vadd.f32 %v542, %v580
      %v582 = vpop.f32.mrf.mxu0
      %v583 = vadd.f32 %v542, %v582
      %584 = vmatmul.bf16.gmra.mxu0 %v555
      %v585 = vpop.f32.mrf.mxu0
      %v586 = vadd.f32 %v542, %v585
      %v587 = vpop.f32.mrf.mxu0
      %588 = vdwg.mxu0
      %v589 = vmax.f32 %v571, 0.0
      %v590 = vmax.f32 %v573, 0.0
      %v591 = vmax.f32 %v576, 0.0
      %v592 = vmax.f32 %v578, 0.0
      %v593 = vmax.f32 %v581, 0.0
      %v594 = vmax.f32 %v583, 0.0
      %v595 = vmax.f32 %v586, 0.0
      %v596 = vld [vmem:[%s5] sm:$0xff]
      %v597 = vld [vmem:[%s5 + $0x8] sm:$0xff]
      %v598 = vld [vmem:[%s5 + $0x10] sm:$0xff]
      %v599 = vld [vmem:[%s5 + $0x18] sm:$0xff]
      %v600 = vld [vmem:[%s5 + $0x20] sm:$0xff]
      %v601 = vld [vmem:[%s5 + $0x28] sm:$0xff]
      %v602 = vld [vmem:[%s5 + $0x30] sm:$0xff]
      %v603 = vmul.f32 %v589, %v596
      %v604 = vmul.f32 %v590, %v597
      %v605 = vmul.f32 %v591, %v598
      %v606 = vmul.f32 %v592, %v599
      %v607 = vmul.f32 %v593, %v600
      %v608 = vmul.f32 %v594, %v601
      %v609 = vmul.f32 %v595, %v602
      %v610 = vld [vmem:[%s2] sm:$0xf]
      %v611 = vld [vmem:[%s2 + $0x4] sm:$0xf]
      %v612 = vld [vmem:[%s2 + $0x8] sm:$0xf]
      %v613 = vld [vmem:[%s2 + $0xc] sm:$0xf]
      %v614 = vld [vmem:[%s2 + $0x10] sm:$0xf]
      %v615 = vld [vmem:[%s2 + $0x14] sm:$0xf]
      %v616 = vld [vmem:[%s2 + $0x18] sm:$0xf]
      %v617 = vld [vmem:[%s2 + $0x1c] sm:$0xf]
      %v618 = vld [vmem:[%s2 + $0x20] sm:$0xf]
      %v619 = vld [vmem:[%s2 + $0x24] sm:$0xf]
      %v620 = vld [vmem:[%s2 + $0x28] sm:$0xf]
      %v621 = vld [vmem:[%s2 + $0x2c] sm:$0xf]
      %v622 = vld [vmem:[%s2 + $0x30] sm:$0xf]
      %v623 = vld [vmem:[%s2 + $0x34] sm:$0xf]
      %v624 = vld [vmem:[%s2 + $0x38] sm:$0xf]
      %v625 = vld [vmem:[%s2 + $0x3c] sm:$0xf]
      %v626 = vld [vmem:[%s2 + $0x40] sm:$0xf]
      %v627 = vld [vmem:[%s2 + $0x44] sm:$0xf]
      %v628 = vld [vmem:[%s2 + $0x48] sm:$0xf]
      %v629 = vld [vmem:[%s2 + $0x4c] sm:$0xf]
      %v630 = vld [vmem:[%s2 + $0x50] sm:$0xf]
      %v631 = vld [vmem:[%s2 + $0x54] sm:$0xf]
      %v632 = vld [vmem:[%s2 + $0x58] sm:$0xf]
      %v633 = vld [vmem:[%s2 + $0x5c] sm:$0xf]
      %v634 = vld [vmem:[%s2 + $0x60] sm:$0xf]
      %v635 = vld [vmem:[%s2 + $0x64] sm:$0xf]
      %v636 = vld [vmem:[%s2 + $0x68] sm:$0xf]
      %v637 = vld [vmem:[%s2 + $0x6c] sm:$0xf]
      %v638 = vld [vmem:[%s2 + $0x70] sm:$0xf]
      %v639 = vld [vmem:[%s2 + $0x74] sm:$0xf]
      %v640 = vld [vmem:[%s2 + $0x78] sm:$0xf]
      %v641 = vld [vmem:[%s2 + $0x7c] sm:$0xf]
      %v642 = vpack.c.bf16 %v604, %v603
      %v643 = vpack.c.bf16 %v606, %v605
      %v644 = vpack.c.bf16 %v608, %v607
      %v645 = vpack.c.bf16 %v609, %v609
      %v678 = vunpack.c.l.b16 %v610
      %v679 = vunpack.c.l.b16 %v611
      %v680 = vunpack.c.l.b16 %v612
      %v681 = vunpack.c.l.b16 %v613
      %v682 = vunpack.c.l.b16 %v614
      %v683 = vunpack.c.l.b16 %v615
      %v684 = vunpack.c.l.b16 %v616
      %v685 = vunpack.c.l.b16 %v617
      %v686 = vunpack.c.l.b16 %v618
      %v687 = vunpack.c.l.b16 %v619
      %v688 = vunpack.c.l.b16 %v620
      %v689 = vunpack.c.l.b16 %v621
      %v690 = vunpack.c.l.b16 %v622
      %v691 = vunpack.c.l.b16 %v623
      %v692 = vunpack.c.l.b16 %v624
      %v693 = vunpack.c.l.b16 %v625
      %v694 = vunpack.c.l.b16 %v626
      %v695 = vunpack.c.l.b16 %v627
      %v696 = vunpack.c.l.b16 %v628
      %v697 = vunpack.c.l.b16 %v629
      %v698 = vunpack.c.l.b16 %v630
      %v699 = vunpack.c.l.b16 %v631
      %v700 = vunpack.c.l.b16 %v632
      %v701 = vunpack.c.l.b16 %v633
      %v702 = vunpack.c.l.b16 %v634
      %v703 = vunpack.c.l.b16 %v635
      %v704 = vunpack.c.l.b16 %v636
      %v705 = vunpack.c.l.b16 %v637
      %v706 = vunpack.c.l.b16 %v638
      %v707 = vunpack.c.l.b16 %v639
      %v708 = vunpack.c.l.b16 %v640
      %v709 = vunpack.c.l.b16 %v641
      %v710 = vpack.c.b16 %v679, %v678
      %v711 = vpack.c.b16 %v681, %v680
      %v712 = vpack.c.b16 %v683, %v682
      %v713 = vpack.c.b16 %v685, %v684
      %v714 = vpack.c.b16 %v687, %v686
      %v715 = vpack.c.b16 %v689, %v688
      %v716 = vpack.c.b16 %v691, %v690
      %v717 = vpack.c.b16 %v693, %v692
      %v718 = vpack.c.b16 %v695, %v694
      %v719 = vpack.c.b16 %v697, %v696
      %v720 = vpack.c.b16 %v699, %v698
      %v721 = vpack.c.b16 %v701, %v700
      %v722 = vpack.c.b16 %v703, %v702
      %v723 = vpack.c.b16 %v705, %v704
      %v724 = vpack.c.b16 %v707, %v706
      %v725 = vpack.c.b16 %v709, %v708
      %vm726 = vcmask 457728
      %v728 = vsel %vm726, %v710, 0
      %v731 = vsel %vm726, %v711, 0
      %v734 = vsel %vm726, %v712, 0
      %v737 = vsel %vm726, %v713, 0
      %v740 = vsel %vm726, %v714, 0
      %v743 = vsel %vm726, %v715, 0
      %v746 = vsel %vm726, %v716, 0
      %v749 = vsel %vm726, %v717, 0
      %v752 = vsel %vm726, %v718, 0
      %v755 = vsel %vm726, %v719, 0
      %v758 = vsel %vm726, %v720, 0
      %v761 = vsel %vm726, %v721, 0
      %v764 = vsel %vm726, %v722, 0
      %v767 = vsel %vm726, %v723, 0
      %v770 = vsel %vm726, %v724, 0
      %v773 = vsel %vm726, %v725, 0
      %vm775 = vcmask 1043456
      %v777 = vsel %vm775, %v645, 0
      %779 = vmatpush.bf16.msra.mxu0 0
      %780 = vmatpush.bf16.msra.mxu0 0
      %781 = vmatpush.bf16.msra.mxu0 0
      %782 = vmatpush.bf16.msra.mxu0 0
      %783 = vmatpush.bf16.msra.mxu0 %v777
      %784 = vmatpush.bf16.msra.mxu0 %v644
      %785 = vmatpush.bf16.msra.mxu0 %v643
      %786 = vmatpush.bf16.msra.mxu0 %v642
      %787 = vmatmul.bf16.gmra.mxu0 %v728
      %v788 = vpop.f32.mrf.mxu0
      %v789 = vadd.f32 0.0, %v788
      %v790 = vpop.f32.mrf.mxu0
      %v791 = vadd.f32 0.0, %v790
      %792 = vmatmul.bf16.gmra.mxu0 %v731
      %v793 = vpop.f32.mrf.mxu0
      %v794 = vadd.f32 0.0, %v793
      %v795 = vpop.f32.mrf.mxu0
      %v796 = vadd.f32 0.0, %v795
      %797 = vmatmul.bf16.gmra.mxu0 %v734
      %v798 = vpop.f32.mrf.mxu0
      %v799 = vadd.f32 0.0, %v798
      %v800 = vpop.f32.mrf.mxu0
      %v801 = vadd.f32 0.0, %v800
      %802 = vmatmul.bf16.gmra.mxu0 %v737
      %v803 = vpop.f32.mrf.mxu0
      %v804 = vadd.f32 0.0, %v803
      %v805 = vpop.f32.mrf.mxu0
      %v806 = vadd.f32 0.0, %v805
      %807 = vmatmul.bf16.gmra.mxu0 %v740
      %v808 = vpop.f32.mrf.mxu0
      %v809 = vadd.f32 0.0, %v808
      %v810 = vpop.f32.mrf.mxu0
      %v811 = vadd.f32 0.0, %v810
      %812 = vmatmul.bf16.gmra.mxu0 %v743
      %v813 = vpop.f32.mrf.mxu0
      %v814 = vadd.f32 0.0, %v813
      %v815 = vpop.f32.mrf.mxu0
      %v816 = vadd.f32 0.0, %v815
      %817 = vmatmul.bf16.gmra.mxu0 %v746
      %v818 = vpop.f32.mrf.mxu0
      %v819 = vadd.f32 0.0, %v818
      %v820 = vpop.f32.mrf.mxu0
      %v821 = vadd.f32 0.0, %v820
      %822 = vmatmul.bf16.gmra.mxu0 %v749
      %v823 = vpop.f32.mrf.mxu0
      %v824 = vadd.f32 0.0, %v823
      %v825 = vpop.f32.mrf.mxu0
      %v826 = vadd.f32 0.0, %v825
      %827 = vmatmul.bf16.gmra.mxu0 %v752
      %v828 = vpop.f32.mrf.mxu0
      %v829 = vadd.f32 0.0, %v828
      %v830 = vpop.f32.mrf.mxu0
      %v831 = vadd.f32 0.0, %v830
      %832 = vmatmul.bf16.gmra.mxu0 %v755
      %v833 = vpop.f32.mrf.mxu0
      %v834 = vadd.f32 0.0, %v833
      %v835 = vpop.f32.mrf.mxu0
      %v836 = vadd.f32 0.0, %v835
      %837 = vmatmul.bf16.gmra.mxu0 %v758
      %v838 = vpop.f32.mrf.mxu0
      %v839 = vadd.f32 0.0, %v838
      %v840 = vpop.f32.mrf.mxu0
      %v841 = vadd.f32 0.0, %v840
      %842 = vmatmul.bf16.gmra.mxu0 %v761
      %v843 = vpop.f32.mrf.mxu0
      %v844 = vadd.f32 0.0, %v843
      %v845 = vpop.f32.mrf.mxu0
      %v846 = vadd.f32 0.0, %v845
      %847 = vmatmul.bf16.gmra.mxu0 %v764
      %v848 = vpop.f32.mrf.mxu0
      %v849 = vadd.f32 0.0, %v848
      %v850 = vpop.f32.mrf.mxu0
      %v851 = vadd.f32 0.0, %v850
      %852 = vmatmul.bf16.gmra.mxu0 %v767
      %v853 = vpop.f32.mrf.mxu0
      %v854 = vadd.f32 0.0, %v853
      %v855 = vpop.f32.mrf.mxu0
      %v856 = vadd.f32 0.0, %v855
      %857 = vmatmul.bf16.gmra.mxu0 %v770
      %v858 = vpop.f32.mrf.mxu0
      %v859 = vadd.f32 0.0, %v858
      %v860 = vpop.f32.mrf.mxu0
      %v861 = vadd.f32 0.0, %v860
      %862 = vmatmul.bf16.gmra.mxu0 %v773
      %v863 = vpop.f32.mrf.mxu0
      %v864 = vadd.f32 0.0, %v863
      %v865 = vpop.f32.mrf.mxu0
      %v866 = vadd.f32 0.0, %v865
      %867 = vdwg.mxu0
      %vm868 = vcmask 289792
      %869 = vst.msk [vmem:[#allocation2] sm:$0xf] %vm868, 0
      %870 = vst.msk [vmem:[#allocation2 + $0x4] sm:$0xf] %vm868, 0
      %871 = vst.msk [vmem:[#allocation2 + $0x8] sm:$0xf] %vm868, 0
      %872 = vst.msk [vmem:[#allocation2 + $0xc] sm:$0xf] %vm868, 0
      %s873 = scalar_lea.vmem [#allocation2], 272
      %874 = vst.msk [vmem:[%s873] sm:$0xf] %vm868, 0
      %875 = vst.msk [vmem:[%s873 + $0x4] sm:$0xf] %vm868, 0
      %876 = vst.msk [vmem:[%s873 + $0x8] sm:$0xf] %vm868, 0
      %877 = vst.msk [vmem:[%s873 + $0xc] sm:$0xf] %vm868, 0
      %s878 = scalar_lea.vmem [#allocation2], 16
      %879 = vst.msk [vmem:[%s878] sm:$0xf] %vm868, 0
      %880 = vst.msk [vmem:[%s878 + $0x10] sm:$0xf] %vm868, 0
      %881 = vst.msk [vmem:[%s878 + $0x20] sm:$0xf] %vm868, 0
      %882 = vst.msk [vmem:[%s878 + $0x30] sm:$0xf] %vm868, 0
      %883 = vst.msk [vmem:[%s878 + $0x40] sm:$0xf] %vm868, 0
      %884 = vst.msk [vmem:[%s878 + $0x50] sm:$0xf] %vm868, 0
      %885 = vst.msk [vmem:[%s878 + $0x60] sm:$0xf] %vm868, 0
      %886 = vst.msk [vmem:[%s878 + $0x70] sm:$0xf] %vm868, 0
      %887 = vst.msk [vmem:[%s878 + $0x80] sm:$0xf] %vm868, 0
      %888 = vst.msk [vmem:[%s878 + $0x90] sm:$0xf] %vm868, 0
      %889 = vst.msk [vmem:[%s878 + $0xa0] sm:$0xf] %vm868, 0
      %890 = vst.msk [vmem:[%s878 + $0xb0] sm:$0xf] %vm868, 0
      %891 = vst.msk [vmem:[%s878 + $0xc0] sm:$0xf] %vm868, 0
      %892 = vst.msk [vmem:[%s878 + $0xd0] sm:$0xf] %vm868, 0
      %893 = vst.msk [vmem:[%s878 + $0xe0] sm:$0xf] %vm868, 0
      %894 = vst.msk [vmem:[%s878 + $0xf0] sm:$0xf] %vm868, 0
      %895 = vst.msk [vmem:[%s878 + $0xc] sm:$0xf] %vm868, 0
      %896 = vst.msk [vmem:[%s878 + $0x1c] sm:$0xf] %vm868, 0
      %897 = vst.msk [vmem:[%s878 + $0x2c] sm:$0xf] %vm868, 0
      %898 = vst.msk [vmem:[%s878 + $0x3c] sm:$0xf] %vm868, 0
      %899 = vst.msk [vmem:[%s878 + $0x4c] sm:$0xf] %vm868, 0
      %900 = vst.msk [vmem:[%s878 + $0x5c] sm:$0xf] %vm868, 0
      %901 = vst.msk [vmem:[%s878 + $0x6c] sm:$0xf] %vm868, 0
      %902 = vst.msk [vmem:[%s878 + $0x7c] sm:$0xf] %vm868, 0
      %903 = vst.msk [vmem:[%s878 + $0x8c] sm:$0xf] %vm868, 0
      %904 = vst.msk [vmem:[%s878 + $0x9c] sm:$0xf] %vm868, 0
      %905 = vst.msk [vmem:[%s878 + $0xac] sm:$0xf] %vm868, 0
      %906 = vst.msk [vmem:[%s878 + $0xbc] sm:$0xf] %vm868, 0
      %907 = vst.msk [vmem:[%s878 + $0xcc] sm:$0xf] %vm868, 0
      %908 = vst.msk [vmem:[%s878 + $0xdc] sm:$0xf] %vm868, 0
      %909 = vst.msk [vmem:[%s878 + $0xec] sm:$0xf] %vm868, 0
      %910 = vst.msk [vmem:[%s878 + $0xfc] sm:$0xf] %vm868, 0
      %vm911 = vcmask 27648
      %912 = vst.msk [vmem:[%s878 + $0x4] sm:$0xf] %vm911, %v307
      %913 = vst.msk [vmem:[%s878 + $0x8] sm:$0xf] %vm911, %v308
      %914 = vst.msk [vmem:[%s878 + $0x14] sm:$0xf] %vm911, %v309
      %915 = vst.msk [vmem:[%s878 + $0x18] sm:$0xf] %vm911, %v310
      %916 = vst.msk [vmem:[%s878 + $0x24] sm:$0xf] %vm911, %v311
      %917 = vst.msk [vmem:[%s878 + $0x28] sm:$0xf] %vm911, %v312
      %918 = vst.msk [vmem:[%s878 + $0x34] sm:$0xf] %vm911, %v313
      %919 = vst.msk [vmem:[%s878 + $0x38] sm:$0xf] %vm911, %v314
      %920 = vst.msk [vmem:[%s878 + $0x44] sm:$0xf] %vm911, %v315
      %921 = vst.msk [vmem:[%s878 + $0x48] sm:$0xf] %vm911, %v316
      %922 = vst.msk [vmem:[%s878 + $0x54] sm:$0xf] %vm911, %v317
      %923 = vst.msk [vmem:[%s878 + $0x58] sm:$0xf] %vm911, %v318
      %924 = vst.msk [vmem:[%s878 + $0x64] sm:$0xf] %vm911, %v319
      %925 = vst.msk [vmem:[%s878 + $0x68] sm:$0xf] %vm911, %v320
      %926 = vst.msk [vmem:[%s878 + $0x74] sm:$0xf] %vm911, %v321
      %927 = vst.msk [vmem:[%s878 + $0x78] sm:$0xf] %vm911, %v322
      %928 = vst.msk [vmem:[%s878 + $0x84] sm:$0xf] %vm911, %v323
      %929 = vst.msk [vmem:[%s878 + $0x88] sm:$0xf] %vm911, %v324
      %930 = vst.msk [vmem:[%s878 + $0x94] sm:$0xf] %vm911, %v325
      %931 = vst.msk [vmem:[%s878 + $0x98] sm:$0xf] %vm911, %v326
      %932 = vst.msk [vmem:[%s878 + $0xa4] sm:$0xf] %vm911, %v327
      %933 = vst.msk [vmem:[%s878 + $0xa8] sm:$0xf] %vm911, %v328
      %934 = vst.msk [vmem:[%s878 + $0xb4] sm:$0xf] %vm911, %v329
      %935 = vst.msk [vmem:[%s878 + $0xb8] sm:$0xf] %vm911, %v330
      %936 = vst.msk [vmem:[%s878 + $0xc4] sm:$0xf] %vm911, %v331
      %937 = vst.msk [vmem:[%s878 + $0xc8] sm:$0xf] %vm911, %v332
      %938 = vst.msk [vmem:[%s878 + $0xd4] sm:$0xf] %vm911, %v333
      %939 = vst.msk [vmem:[%s878 + $0xd8] sm:$0xf] %vm911, %v334
      %940 = vst.msk [vmem:[%s878 + $0xe4] sm:$0xf] %vm911, %v335
      %941 = vst.msk [vmem:[%s878 + $0xe8] sm:$0xf] %vm911, %v336
      %942 = vst.msk [vmem:[%s878 + $0xf4] sm:$0xf] %vm911, %v337
      %943 = vst.msk [vmem:[%s878 + $0xf8] sm:$0xf] %vm911, %v338
      %v944 = vpack.c.bf16 %v789, %v789
      %v945 = vpack.c.bf16 %v791, %v791
      %v946 = vpack.c.bf16 %v794, %v794
      %v947 = vpack.c.bf16 %v796, %v796
      %v948 = vpack.c.bf16 %v799, %v799
      %v949 = vpack.c.bf16 %v801, %v801
      %v950 = vpack.c.bf16 %v804, %v804
      %v951 = vpack.c.bf16 %v806, %v806
      %v952 = vpack.c.bf16 %v809, %v809
      %v953 = vpack.c.bf16 %v811, %v811
      %v954 = vpack.c.bf16 %v814, %v814
      %v955 = vpack.c.bf16 %v816, %v816
      %v956 = vpack.c.bf16 %v819, %v819
      %v957 = vpack.c.bf16 %v821, %v821
      %v958 = vpack.c.bf16 %v824, %v824
      %v959 = vpack.c.bf16 %v826, %v826
      %v960 = vpack.c.bf16 %v829, %v829
      %v961 = vpack.c.bf16 %v831, %v831
      %v962 = vpack.c.bf16 %v834, %v834
      %v963 = vpack.c.bf16 %v836, %v836
      %v964 = vpack.c.bf16 %v839, %v839
      %v965 = vpack.c.bf16 %v841, %v841
      %v966 = vpack.c.bf16 %v844, %v844
      %v967 = vpack.c.bf16 %v846, %v846
      %v968 = vpack.c.bf16 %v849, %v849
      %v969 = vpack.c.bf16 %v851, %v851
      %v970 = vpack.c.bf16 %v854, %v854
      %v971 = vpack.c.bf16 %v856, %v856
      %v972 = vpack.c.bf16 %v859, %v859
      %v973 = vpack.c.bf16 %v861, %v861
      %v974 = vpack.c.bf16 %v864, %v864
      %v975 = vpack.c.bf16 %v866, %v866
      %1008 = vrot.lane.b32.xlu0 %v944, 4
      %v1009 = vpop.permute.xlu0 %1008
      %1010 = vrot.lane.b32.xlu0 %v945, 4
      %v1011 = vpop.permute.xlu0 %1010
      %1012 = vrot.lane.b32.xlu0 %v946, 4
      %v1013 = vpop.permute.xlu0 %1012
      %1014 = vrot.lane.b32.xlu0 %v947, 4
      %v1015 = vpop.permute.xlu0 %1014
      %1016 = vrot.lane.b32.xlu0 %v948, 4
      %v1017 = vpop.permute.xlu0 %1016
      %1018 = vrot.lane.b32.xlu0 %v949, 4
      %v1019 = vpop.permute.xlu0 %1018
      %1020 = vrot.lane.b32.xlu0 %v950, 4
      %v1021 = vpop.permute.xlu0 %1020
      %1022 = vrot.lane.b32.xlu0 %v951, 4
      %v1023 = vpop.permute.xlu0 %1022
      %1024 = vrot.lane.b32.xlu0 %v952, 4
      %v1025 = vpop.permute.xlu0 %1024
      %1026 = vrot.lane.b32.xlu0 %v953, 4
      %v1027 = vpop.permute.xlu0 %1026
      %1028 = vrot.lane.b32.xlu0 %v954, 4
      %v1029 = vpop.permute.xlu0 %1028
      %1030 = vrot.lane.b32.xlu0 %v955, 4
      %v1031 = vpop.permute.xlu0 %1030
      %1032 = vrot.lane.b32.xlu0 %v956, 4
      %v1033 = vpop.permute.xlu0 %1032
      %1034 = vrot.lane.b32.xlu0 %v957, 4
      %v1035 = vpop.permute.xlu0 %1034
      %1036 = vrot.lane.b32.xlu0 %v958, 4
      %v1037 = vpop.permute.xlu0 %1036
      %1038 = vrot.lane.b32.xlu0 %v959, 4
      %v1039 = vpop.permute.xlu0 %1038
      %1040 = vrot.lane.b32.xlu0 %v960, 4
      %v1041 = vpop.permute.xlu0 %1040
      %1042 = vrot.lane.b32.xlu0 %v961, 4
      %v1043 = vpop.permute.xlu0 %1042
      %1044 = vrot.lane.b32.xlu0 %v962, 4
      %v1045 = vpop.permute.xlu0 %1044
      %1046 = vrot.lane.b32.xlu0 %v963, 4
      %v1047 = vpop.permute.xlu0 %1046
      %1048 = vrot.lane.b32.xlu0 %v964, 4
      %v1049 = vpop.permute.xlu0 %1048
      %1050 = vrot.lane.b32.xlu0 %v965, 4
      %v1051 = vpop.permute.xlu0 %1050
      %1052 = vrot.lane.b32.xlu0 %v966, 4
      %v1053 = vpop.permute.xlu0 %1052
      %1054 = vrot.lane.b32.xlu0 %v967, 4
      %v1055 = vpop.permute.xlu0 %1054
      %1056 = vrot.lane.b32.xlu0 %v968, 4
      %v1057 = vpop.permute.xlu0 %1056
      %1058 = vrot.lane.b32.xlu0 %v969, 4
      %v1059 = vpop.permute.xlu0 %1058
      %1060 = vrot.lane.b32.xlu0 %v970, 4
      %v1061 = vpop.permute.xlu0 %1060
      %1062 = vrot.lane.b32.xlu0 %v971, 4
      %v1063 = vpop.permute.xlu0 %1062
      %1064 = vrot.lane.b32.xlu0 %v972, 4
      %v1065 = vpop.permute.xlu0 %1064
      %1066 = vrot.lane.b32.xlu0 %v973, 4
      %v1067 = vpop.permute.xlu0 %1066
      %1068 = vrot.lane.b32.xlu0 %v974, 4
      %v1069 = vpop.permute.xlu0 %1068
      %1070 = vrot.lane.b32.xlu0 %v975, 4
      %v1071 = vpop.permute.xlu0 %1070
      %vm1104 = vcmask 289824
      %1105 = vst.msk [vmem:[%s878 + $0x4] sm:$0xf] %vm1104, %v1009
      %1106 = vst.msk [vmem:[%s878 + $0x8] sm:$0xf] %vm1104, %v1011
      %1107 = vst.msk [vmem:[%s878 + $0x14] sm:$0xf] %vm1104, %v1013
      %1108 = vst.msk [vmem:[%s878 + $0x18] sm:$0xf] %vm1104, %v1015
      %1109 = vst.msk [vmem:[%s878 + $0x24] sm:$0xf] %vm1104, %v1017
      %1110 = vst.msk [vmem:[%s878 + $0x28] sm:$0xf] %vm1104, %v1019
      %1111 = vst.msk [vmem:[%s878 + $0x34] sm:$0xf] %vm1104, %v1021
      %1112 = vst.msk [vmem:[%s878 + $0x38] sm:$0xf] %vm1104, %v1023
      %1113 = vst.msk [vmem:[%s878 + $0x44] sm:$0xf] %vm1104, %v1025
      %1114 = vst.msk [vmem:[%s878 + $0x48] sm:$0xf] %vm1104, %v1027
      %1115 = vst.msk [vmem:[%s878 + $0x54] sm:$0xf] %vm1104, %v1029
      %1116 = vst.msk [vmem:[%s878 + $0x58] sm:$0xf] %vm1104, %v1031
      %1117 = vst.msk [vmem:[%s878 + $0x64] sm:$0xf] %vm1104, %v1033
      %1118 = vst.msk [vmem:[%s878 + $0x68] sm:$0xf] %vm1104, %v1035
      %1119 = vst.msk [vmem:[%s878 + $0x74] sm:$0xf] %vm1104, %v1037
      %1120 = vst.msk [vmem:[%s878 + $0x78] sm:$0xf] %vm1104, %v1039
      %1121 = vst.msk [vmem:[%s878 + $0x84] sm:$0xf] %vm1104, %v1041
      %1122 = vst.msk [vmem:[%s878 + $0x88] sm:$0xf] %vm1104, %v1043
      %1123 = vst.msk [vmem:[%s878 + $0x94] sm:$0xf] %vm1104, %v1045
      %1124 = vst.msk [vmem:[%s878 + $0x98] sm:$0xf] %vm1104, %v1047
      %1125 = vst.msk [vmem:[%s878 + $0xa4] sm:$0xf] %vm1104, %v1049
      %1126 = vst.msk [vmem:[%s878 + $0xa8] sm:$0xf] %vm1104, %v1051
      %1127 = vst.msk [vmem:[%s878 + $0xb4] sm:$0xf] %vm1104, %v1053
      %1128 = vst.msk [vmem:[%s878 + $0xb8] sm:$0xf] %vm1104, %v1055
      %1129 = vst.msk [vmem:[%s878 + $0xc4] sm:$0xf] %vm1104, %v1057
      %1130 = vst.msk [vmem:[%s878 + $0xc8] sm:$0xf] %vm1104, %v1059
      %1131 = vst.msk [vmem:[%s878 + $0xd4] sm:$0xf] %vm1104, %v1061
      %1132 = vst.msk [vmem:[%s878 + $0xd8] sm:$0xf] %vm1104, %v1063
      %1133 = vst.msk [vmem:[%s878 + $0xe4] sm:$0xf] %vm1104, %v1065
      %1134 = vst.msk [vmem:[%s878 + $0xe8] sm:$0xf] %vm1104, %v1067
      %1135 = vst.msk [vmem:[%s878 + $0xf4] sm:$0xf] %vm1104, %v1069
      %1136 = vst.msk [vmem:[%s878 + $0xf8] sm:$0xf] %vm1104, %v1071
      %v1137 = vld [vmem:[#allocation2] sm:$0x8]
      %v1138 = vld [vmem:[#allocation2 + $0x4] sm:$0xf]
      %v1139 = vld [vmem:[#allocation2 + $0x8] sm:$0xf]
      %v1140 = vld [vmem:[#allocation2 + $0x10] sm:$0x8]
      %v1141 = vld [vmem:[#allocation2 + $0x14] sm:$0xf]
      %v1142 = vld [vmem:[#allocation2 + $0x18] sm:$0xf]
      %v1143 = vld [vmem:[#allocation2 + $0x20] sm:$0x8]
      %v1144 = vld [vmem:[#allocation2 + $0x24] sm:$0xf]
      %v1145 = vld [vmem:[#allocation2 + $0x28] sm:$0xf]
      %v1146 = vld [vmem:[#allocation2 + $0x30] sm:$0x8]
      %v1147 = vld [vmem:[#allocation2 + $0x34] sm:$0xf]
      %v1148 = vld [vmem:[#allocation2 + $0x38] sm:$0xf]
      %v1149 = vld [vmem:[#allocation2 + $0x40] sm:$0x8]
      %v1150 = vld [vmem:[#allocation2 + $0x44] sm:$0xf]
      %v1151 = vld [vmem:[#allocation2 + $0x48] sm:$0xf]
      %v1152 = vld [vmem:[#allocation2 + $0x50] sm:$0x8]
      %v1153 = vld [vmem:[#allocation2 + $0x54] sm:$0xf]
      %v1154 = vld [vmem:[#allocation2 + $0x58] sm:$0xf]
      %v1155 = vld [vmem:[#allocation2 + $0x60] sm:$0x8]
      %v1156 = vld [vmem:[#allocation2 + $0x64] sm:$0xf]
      %v1157 = vld [vmem:[#allocation2 + $0x68] sm:$0xf]
      %v1158 = vld [vmem:[#allocation2 + $0x70] sm:$0x8]
      %v1159 = vld [vmem:[#allocation2 + $0x74] sm:$0xf]
      %v1160 = vld [vmem:[#allocation2 + $0x78] sm:$0xf]
      %v1161 = vld [vmem:[#allocation2 + $0x80] sm:$0x8]
      %v1162 = vld [vmem:[#allocation2 + $0x84] sm:$0xf]
      %v1163 = vld [vmem:[#allocation2 + $0x88] sm:$0xf]
      %v1164 = vld [vmem:[#allocation2 + $0x90] sm:$0x8]
      %v1165 = vld [vmem:[#allocation2 + $0x94] sm:$0xf]
      %v1166 = vld [vmem:[#allocation2 + $0x98] sm:$0xf]
      %v1167 = vld [vmem:[#allocation2 + $0xa0] sm:$0x8]
      %v1168 = vld [vmem:[#allocation2 + $0xa4] sm:$0xf]
      %v1169 = vld [vmem:[#allocation2 + $0xa8] sm:$0xf]
      %v1170 = vld [vmem:[#allocation2 + $0xb0] sm:$0x8]
      %v1171 = vld [vmem:[#allocation2 + $0xb4] sm:$0xf]
      %v1172 = vld [vmem:[#allocation2 + $0xb8] sm:$0xf]
      %v1173 = vld [vmem:[#allocation2 + $0xc0] sm:$0x8]
      %v1174 = vld [vmem:[#allocation2 + $0xc4] sm:$0xf]
      %v1175 = vld [vmem:[#allocation2 + $0xc8] sm:$0xf]
      %v1176 = vld [vmem:[#allocation2 + $0xd0] sm:$0x8]
      %v1177 = vld [vmem:[#allocation2 + $0xd4] sm:$0xf]
      %v1178 = vld [vmem:[#allocation2 + $0xd8] sm:$0xf]
      %v1179 = vld [vmem:[#allocation2 + $0xe0] sm:$0x8]
      %v1180 = vld [vmem:[#allocation2 + $0xe4] sm:$0xf]
      %v1181 = vld [vmem:[#allocation2 + $0xe8] sm:$0xf]
      %v1182 = vld [vmem:[#allocation2 + $0xf0] sm:$0x8]
      %v1183 = vld [vmem:[#allocation2 + $0xf4] sm:$0xf]
      %v1184 = vld [vmem:[#allocation2 + $0xf8] sm:$0xf]
      %vm1185 = vsmask.f32 256
      %vm1186 = vsmask.f32 4368
      %vm1187 = vmor %vm1185, %vm1186
      %v1189 = vshrl.u32 %v1137, 16
      %v1191 = vrot.slane %v1189, 7
      %v1192 = vrot.slane %v1191, 4
      %v1194 = vshrl.u32 %v1138, 16
      %v1196 = vrot.slane %v1194, 7
      %v1197 = vshll.u32 %v1138, 16
      %v1199 = vor.u32 %v1196, %v1197
      %v1200 = vsel %vm1187, %v1192, %v1199
      %v1201 = vrot.slane %v1196, 4
      %v1203 = vshrl.u32 %v1139, 16
      %v1205 = vrot.slane %v1203, 7
      %v1206 = vshll.u32 %v1139, 16
      %v1208 = vor.u32 %v1205, %v1206
      %v1209 = vsel %vm1187, %v1201, %v1208
      %v1211 = vshrl.u32 %v1140, 16
      %v1213 = vrot.slane %v1211, 7
      %v1214 = vrot.slane %v1213, 4
      %v1216 = vshrl.u32 %v1141, 16
      %v1218 = vrot.slane %v1216, 7
      %v1219 = vshll.u32 %v1141, 16
      %v1221 = vor.u32 %v1218, %v1219
      %v1222 = vsel %vm1187, %v1214, %v1221
      %v1223 = vrot.slane %v1218, 4
      %v1225 = vshrl.u32 %v1142, 16
      %v1227 = vrot.slane %v1225, 7
      %v1228 = vshll.u32 %v1142, 16
      %v1230 = vor.u32 %v1227, %v1228
      %v1231 = vsel %vm1187, %v1223, %v1230
      %v1233 = vshrl.u32 %v1143, 16
      %v1235 = vrot.slane %v1233, 7
      %v1236 = vrot.slane %v1235, 4
      %v1238 = vshrl.u32 %v1144, 16
      %v1240 = vrot.slane %v1238, 7
      %v1241 = vshll.u32 %v1144, 16
      %v1243 = vor.u32 %v1240, %v1241
      %v1244 = vsel %vm1187, %v1236, %v1243
      %v1245 = vrot.slane %v1240, 4
      %v1247 = vshrl.u32 %v1145, 16
      %v1249 = vrot.slane %v1247, 7
      %v1250 = vshll.u32 %v1145, 16
      %v1252 = vor.u32 %v1249, %v1250
      %v1253 = vsel %vm1187, %v1245, %v1252
      %v1255 = vshrl.u32 %v1146, 16
      %v1257 = vrot.slane %v1255, 7
      %v1258 = vrot.slane %v1257, 4
      %v1260 = vshrl.u32 %v1147, 16
      %v1262 = vrot.slane %v1260, 7
      %v1263 = vshll.u32 %v1147, 16
      %v1265 = vor.u32 %v1262, %v1263
      %v1266 = vsel %vm1187, %v1258, %v1265
      %v1267 = vrot.slane %v1262, 4
      %v1269 = vshrl.u32 %v1148, 16
      %v1271 = vrot.slane %v1269, 7
      %v1272 = vshll.u32 %v1148, 16
      %v1274 = vor.u32 %v1271, %v1272
      %v1275 = vsel %vm1187, %v1267, %v1274
      %v1277 = vshrl.u32 %v1149, 16
      %v1279 = vrot.slane %v1277, 7
      %v1280 = vrot.slane %v1279, 4
      %v1282 = vshrl.u32 %v1150, 16
      %v1284 = vrot.slane %v1282, 7
      %v1285 = vshll.u32 %v1150, 16
      %v1287 = vor.u32 %v1284, %v1285
      %v1288 = vsel %vm1187, %v1280, %v1287
      %v1289 = vrot.slane %v1284, 4
      %v1291 = vshrl.u32 %v1151, 16
      %v1293 = vrot.slane %v1291, 7
      %v1294 = vshll.u32 %v1151, 16
      %v1296 = vor.u32 %v1293, %v1294
      %v1297 = vsel %vm1187, %v1289, %v1296
      %v1299 = vshrl.u32 %v1152, 16
      %v1301 = vrot.slane %v1299, 7
      %v1302 = vrot.slane %v1301, 4
      %v1304 = vshrl.u32 %v1153, 16
      %v1306 = vrot.slane %v1304, 7
      %v1307 = vshll.u32 %v1153, 16
      %v1309 = vor.u32 %v1306, %v1307
      %v1310 = vsel %vm1187, %v1302, %v1309
      %v1311 = vrot.slane %v1306, 4
      %v1313 = vshrl.u32 %v1154, 16
      %v1315 = vrot.slane %v1313, 7
      %v1316 = vshll.u32 %v1154, 16
      %v1318 = vor.u32 %v1315, %v1316
      %v1319 = vsel %vm1187, %v1311, %v1318
      %v1321 = vshrl.u32 %v1155, 16
      %v1323 = vrot.slane %v1321, 7
      %v1324 = vrot.slane %v1323, 4
      %v1326 = vshrl.u32 %v1156, 16
      %v1328 = vrot.slane %v1326, 7
      %v1329 = vshll.u32 %v1156, 16
      %v1331 = vor.u32 %v1328, %v1329
      %v1332 = vsel %vm1187, %v1324, %v1331
      %v1333 = vrot.slane %v1328, 4
      %v1335 = vshrl.u32 %v1157, 16
      %v1337 = vrot.slane %v1335, 7
      %v1338 = vshll.u32 %v1157, 16
      %v1340 = vor.u32 %v1337, %v1338
      %v1341 = vsel %vm1187, %v1333, %v1340
      %v1343 = vshrl.u32 %v1158, 16
      %v1345 = vrot.slane %v1343, 7
      %v1346 = vrot.slane %v1345, 4
      %v1348 = vshrl.u32 %v1159, 16
      %v1350 = vrot.slane %v1348, 7
      %v1351 = vshll.u32 %v1159, 16
      %v1353 = vor.u32 %v1350, %v1351
      %v1354 = vsel %vm1187, %v1346, %v1353
      %v1355 = vrot.slane %v1350, 4
      %v1357 = vshrl.u32 %v1160, 16
      %v1359 = vrot.slane %v1357, 7
      %v1360 = vshll.u32 %v1160, 16
      %v1362 = vor.u32 %v1359, %v1360
      %v1363 = vsel %vm1187, %v1355, %v1362
      %v1365 = vshrl.u32 %v1161, 16
      %v1367 = vrot.slane %v1365, 7
      %v1368 = vrot.slane %v1367, 4
      %v1370 = vshrl.u32 %v1162, 16
      %v1372 = vrot.slane %v1370, 7
      %v1373 = vshll.u32 %v1162, 16
      %v1375 = vor.u32 %v1372, %v1373
      %v1376 = vsel %vm1187, %v1368, %v1375
      %v1377 = vrot.slane %v1372, 4
      %v1379 = vshrl.u32 %v1163, 16
      %v1381 = vrot.slane %v1379, 7
      %v1382 = vshll.u32 %v1163, 16
      %v1384 = vor.u32 %v1381, %v1382
      %v1385 = vsel %vm1187, %v1377, %v1384
      %v1387 = vshrl.u32 %v1164, 16
      %v1389 = vrot.slane %v1387, 7
      %v1390 = vrot.slane %v1389, 4
      %v1392 = vshrl.u32 %v1165, 16
      %v1394 = vrot.slane %v1392, 7
      %v1395 = vshll.u32 %v1165, 16
      %v1397 = vor.u32 %v1394, %v1395
      %v1398 = vsel %vm1187, %v1390, %v1397
      %v1399 = vrot.slane %v1394, 4
      %v1401 = vshrl.u32 %v1166, 16
      %v1403 = vrot.slane %v1401, 7
      %v1404 = vshll.u32 %v1166, 16
      %v1406 = vor.u32 %v1403, %v1404
      %v1407 = vsel %vm1187, %v1399, %v1406
      %v1409 = vshrl.u32 %v1167, 16
      %v1411 = vrot.slane %v1409, 7
      %v1412 = vrot.slane %v1411, 4
      %v1414 = vshrl.u32 %v1168, 16
      %v1416 = vrot.slane %v1414, 7
      %v1417 = vshll.u32 %v1168, 16
      %v1419 = vor.u32 %v1416, %v1417
      %v1420 = vsel %vm1187, %v1412, %v1419
      %v1421 = vrot.slane %v1416, 4
      %v1423 = vshrl.u32 %v1169, 16
      %v1425 = vrot.slane %v1423, 7
      %v1426 = vshll.u32 %v1169, 16
      %v1428 = vor.u32 %v1425, %v1426
      %v1429 = vsel %vm1187, %v1421, %v1428
      %v1431 = vshrl.u32 %v1170, 16
      %v1433 = vrot.slane %v1431, 7
      %v1434 = vrot.slane %v1433, 4
      %v1436 = vshrl.u32 %v1171, 16
      %v1438 = vrot.slane %v1436, 7
      %v1439 = vshll.u32 %v1171, 16
      %v1441 = vor.u32 %v1438, %v1439
      %v1442 = vsel %vm1187, %v1434, %v1441
      %v1443 = vrot.slane %v1438, 4
      %v1445 = vshrl.u32 %v1172, 16
      %v1447 = vrot.slane %v1445, 7
      %v1448 = vshll.u32 %v1172, 16
      %v1450 = vor.u32 %v1447, %v1448
      %v1451 = vsel %vm1187, %v1443, %v1450
      %v1453 = vshrl.u32 %v1173, 16
      %v1455 = vrot.slane %v1453, 7
      %v1456 = vrot.slane %v1455, 4
      %v1458 = vshrl.u32 %v1174, 16
      %v1460 = vrot.slane %v1458, 7
      %v1461 = vshll.u32 %v1174, 16
      %v1463 = vor.u32 %v1460, %v1461
      %v1464 = vsel %vm1187, %v1456, %v1463
      %v1465 = vrot.slane %v1460, 4
      %v1467 = vshrl.u32 %v1175, 16
      %v1469 = vrot.slane %v1467, 7
      %v1470 = vshll.u32 %v1175, 16
      %v1472 = vor.u32 %v1469, %v1470
      %v1473 = vsel %vm1187, %v1465, %v1472
      %v1475 = vshrl.u32 %v1176, 16
      %v1477 = vrot.slane %v1475, 7
      %v1478 = vrot.slane %v1477, 4
      %v1480 = vshrl.u32 %v1177, 16
      %v1482 = vrot.slane %v1480, 7
      %v1483 = vshll.u32 %v1177, 16
      %v1485 = vor.u32 %v1482, %v1483
      %v1486 = vsel %vm1187, %v1478, %v1485
      %v1487 = vrot.slane %v1482, 4
      %v1489 = vshrl.u32 %v1178, 16
      %v1491 = vrot.slane %v1489, 7
      %v1492 = vshll.u32 %v1178, 16
      %v1494 = vor.u32 %v1491, %v1492
      %v1495 = vsel %vm1187, %v1487, %v1494
      %v1497 = vshrl.u32 %v1179, 16
      %v1499 = vrot.slane %v1497, 7
      %v1500 = vrot.slane %v1499, 4
      %v1502 = vshrl.u32 %v1180, 16
      %v1504 = vrot.slane %v1502, 7
      %v1505 = vshll.u32 %v1180, 16
      %v1507 = vor.u32 %v1504, %v1505
      %v1508 = vsel %vm1187, %v1500, %v1507
      %v1509 = vrot.slane %v1504, 4
      %v1511 = vshrl.u32 %v1181, 16
      %v1513 = vrot.slane %v1511, 7
      %v1514 = vshll.u32 %v1181, 16
      %v1516 = vor.u32 %v1513, %v1514
      %v1517 = vsel %vm1187, %v1509, %v1516
      %v1519 = vshrl.u32 %v1182, 16
      %v1521 = vrot.slane %v1519, 7
      %v1522 = vrot.slane %v1521, 4
      %v1524 = vshrl.u32 %v1183, 16
      %v1526 = vrot.slane %v1524, 7
      %v1527 = vshll.u32 %v1183, 16
      %v1529 = vor.u32 %v1526, %v1527
      %v1530 = vsel %vm1187, %v1522, %v1529
      %v1531 = vrot.slane %v1526, 4
      %v1533 = vshrl.u32 %v1184, 16
      %v1535 = vrot.slane %v1533, 7
      %v1536 = vshll.u32 %v1184, 16
      %v1538 = vor.u32 %v1535, %v1536
      %v1539 = vsel %vm1187, %v1531, %v1538
      %v1540 = vld [vmem:[%s6] sm:$0xf]
      %v1541 = vld [vmem:[%s6 + $0x4] sm:$0xf]
      %v1542 = vld [vmem:[%s6 + $0x8] sm:$0xf]
      %v1543 = vld [vmem:[%s6 + $0xc] sm:$0xf]
      %v1544 = vld [vmem:[%s6 + $0x10] sm:$0x3]
      %s1545 = scalar_lea.vmem %s6, 20
      %v1546 = vld [vmem:[%s1545] sm:$0xf]
      %v1547 = vld [vmem:[%s1545 + $0x4] sm:$0xf]
      %v1548 = vld [vmem:[%s1545 + $0x8] sm:$0xf]
      %v1549 = vld [vmem:[%s1545 + $0xc] sm:$0xf]
      %v1550 = vld [vmem:[%s1545 + $0x10] sm:$0x3]
      %v1583 = vunpack.c.l.b16 %v1138
      %v1584 = vunpack.c.l.b16 %v1139
      %v1585 = vunpack.c.l.b16 %v1141
      %v1586 = vunpack.c.l.b16 %v1142
      %v1587 = vunpack.c.l.b16 %v1144
      %v1588 = vunpack.c.l.b16 %v1145
      %v1589 = vunpack.c.l.b16 %v1147
      %v1590 = vunpack.c.l.b16 %v1148
      %v1591 = vunpack.c.l.b16 %v1150
      %v1592 = vunpack.c.l.b16 %v1151
      %v1593 = vunpack.c.l.b16 %v1153
      %v1594 = vunpack.c.l.b16 %v1154
      %v1595 = vunpack.c.l.b16 %v1156
      %v1596 = vunpack.c.l.b16 %v1157
      %v1597 = vunpack.c.l.b16 %v1159
      %v1598 = vunpack.c.l.b16 %v1160
      %v1599 = vunpack.c.l.b16 %v1162
      %v1600 = vunpack.c.l.b16 %v1163
      %v1601 = vunpack.c.l.b16 %v1165
      %v1602 = vunpack.c.l.b16 %v1166
      %v1603 = vunpack.c.l.b16 %v1168
      %v1604 = vunpack.c.l.b16 %v1169
      %v1605 = vunpack.c.l.b16 %v1171
      %v1606 = vunpack.c.l.b16 %v1172
      %v1607 = vunpack.c.l.b16 %v1174
      %v1608 = vunpack.c.l.b16 %v1175
      %v1609 = vunpack.c.l.b16 %v1177
      %v1610 = vunpack.c.l.b16 %v1178
      %v1611 = vunpack.c.l.b16 %v1180
      %v1612 = vunpack.c.l.b16 %v1181
      %v1613 = vunpack.c.l.b16 %v1183
      %v1614 = vunpack.c.l.b16 %v1184
      %v1615 = vpack.c.b16 %v1584, %v1583
      %v1616 = vpack.c.b16 %v1586, %v1585
      %v1617 = vpack.c.b16 %v1588, %v1587
      %v1618 = vpack.c.b16 %v1590, %v1589
      %v1619 = vpack.c.b16 %v1592, %v1591
      %v1620 = vpack.c.b16 %v1594, %v1593
      %v1621 = vpack.c.b16 %v1596, %v1595
      %v1622 = vpack.c.b16 %v1598, %v1597
      %v1623 = vpack.c.b16 %v1600, %v1599
      %v1624 = vpack.c.b16 %v1602, %v1601
      %v1625 = vpack.c.b16 %v1604, %v1603
      %v1626 = vpack.c.b16 %v1606, %v1605
      %v1627 = vpack.c.b16 %v1608, %v1607
      %v1628 = vpack.c.b16 %v1610, %v1609
      %v1629 = vpack.c.b16 %v1612, %v1611
      %v1630 = vpack.c.b16 %v1614, %v1613
      %v1636 = vunpack.c.l.b16 %v1546
      %v1637 = vunpack.c.l.b16 %v1547
      %v1638 = vunpack.c.l.b16 %v1548
      %v1639 = vunpack.c.l.b16 %v1549
      %v1640 = vunpack.c.l.b16 %v1550
      %v1641 = vpack.c.b16 %v1637, %v1636
      %v1642 = vpack.c.b16 %v1639, %v1638
      %v1643 = vpack.c.b16 %v1640, %v1640
      %vm1646 = vcmask 293888
      %v1648 = vsel %vm1646, %v1615, 0
      %v1651 = vsel %vm1646, %v1616, 0
      %v1654 = vsel %vm1646, %v1617, 0
      %v1657 = vsel %vm1646, %v1618, 0
      %v1660 = vsel %vm1646, %v1619, 0
      %v1663 = vsel %vm1646, %v1620, 0
      %v1666 = vsel %vm1646, %v1621, 0
      %v1669 = vsel %vm1646, %v1622, 0
      %v1672 = vsel %vm1646, %v1623, 0
      %v1675 = vsel %vm1646, %v1624, 0
      %v1678 = vsel %vm1646, %v1625, 0
      %v1681 = vsel %vm1646, %v1626, 0
      %v1684 = vsel %vm1646, %v1627, 0
      %v1687 = vsel %vm1646, %v1628, 0
      %v1690 = vsel %vm1646, %v1629, 0
      %v1693 = vsel %vm1646, %v1630, 0
      %v1696 = vsel %vm557, %v1643, 0
      %1698 = vmatpush.bf16.msra.mxu0 0
      %1699 = vmatpush.bf16.msra.mxu0 0
      %1700 = vmatpush.bf16.msra.mxu0 0
      %1701 = vmatpush.bf16.msra.mxu0 0
      %1702 = vmatpush.bf16.msra.mxu0 0
      %1703 = vmatpush.bf16.msra.mxu0 %v1696
      %1704 = vmatpush.bf16.msra.mxu0 %v1642
      %1705 = vmatpush.bf16.msra.mxu0 %v1641
      %1706 = vmatmul.bf16.gmra.mxu0 %v1648
      %v1707 = vpop.f32.mrf.mxu0
      %v1708 = vadd.f32 0.0, %v1707
      %v1709 = vpop.f32.mrf.mxu0
      %v1710 = vadd.f32 0.0, %v1709
      %1711 = vmatmul.bf16.gmra.mxu0 %v1651
      %v1712 = vpop.f32.mrf.mxu0
      %v1713 = vadd.f32 0.0, %v1712
      %v1714 = vpop.f32.mrf.mxu0
      %v1715 = vadd.f32 0.0, %v1714
      %1716 = vmatmul.bf16.gmra.mxu0 %v1654
      %v1717 = vpop.f32.mrf.mxu0
      %v1718 = vadd.f32 0.0, %v1717
      %v1719 = vpop.f32.mrf.mxu0
      %v1720 = vadd.f32 0.0, %v1719
      %1721 = vmatmul.bf16.gmra.mxu0 %v1657
      %v1722 = vpop.f32.mrf.mxu0
      %v1723 = vadd.f32 0.0, %v1722
      %v1724 = vpop.f32.mrf.mxu0
      %v1725 = vadd.f32 0.0, %v1724
      %1726 = vmatmul.bf16.gmra.mxu0 %v1660
      %v1727 = vpop.f32.mrf.mxu0
      %v1728 = vadd.f32 0.0, %v1727
      %v1729 = vpop.f32.mrf.mxu0
      %v1730 = vadd.f32 0.0, %v1729
      %1731 = vmatmul.bf16.gmra.mxu0 %v1663
      %v1732 = vpop.f32.mrf.mxu0
      %v1733 = vadd.f32 0.0, %v1732
      %v1734 = vpop.f32.mrf.mxu0
      %v1735 = vadd.f32 0.0, %v1734
      %1736 = vmatmul.bf16.gmra.mxu0 %v1666
      %v1737 = vpop.f32.mrf.mxu0
      %v1738 = vadd.f32 0.0, %v1737
      %v1739 = vpop.f32.mrf.mxu0
      %v1740 = vadd.f32 0.0, %v1739
      %1741 = vmatmul.bf16.gmra.mxu0 %v1669
      %v1742 = vpop.f32.mrf.mxu0
      %v1743 = vadd.f32 0.0, %v1742
      %v1744 = vpop.f32.mrf.mxu0
      %v1745 = vadd.f32 0.0, %v1744
      %1746 = vmatmul.bf16.gmra.mxu0 %v1672
      %v1747 = vpop.f32.mrf.mxu0
      %v1748 = vadd.f32 0.0, %v1747
      %v1749 = vpop.f32.mrf.mxu0
      %v1750 = vadd.f32 0.0, %v1749
      %1751 = vmatmul.bf16.gmra.mxu0 %v1675
      %v1752 = vpop.f32.mrf.mxu0
      %v1753 = vadd.f32 0.0, %v1752
      %v1754 = vpop.f32.mrf.mxu0
      %v1755 = vadd.f32 0.0, %v1754
      %1756 = vmatmul.bf16.gmra.mxu0 %v1678
      %v1757 = vpop.f32.mrf.mxu0
      %v1758 = vadd.f32 0.0, %v1757
      %v1759 = vpop.f32.mrf.mxu0
      %v1760 = vadd.f32 0.0, %v1759
      %1761 = vmatmul.bf16.gmra.mxu0 %v1681
      %v1762 = vpop.f32.mrf.mxu0
      %v1763 = vadd.f32 0.0, %v1762
      %v1764 = vpop.f32.mrf.mxu0
      %v1765 = vadd.f32 0.0, %v1764
      %1766 = vmatmul.bf16.gmra.mxu0 %v1684
      %v1767 = vpop.f32.mrf.mxu0
      %v1768 = vadd.f32 0.0, %v1767
      %v1769 = vpop.f32.mrf.mxu0
      %v1770 = vadd.f32 0.0, %v1769
      %1771 = vmatmul.bf16.gmra.mxu0 %v1687
      %v1772 = vpop.f32.mrf.mxu0
      %v1773 = vadd.f32 0.0, %v1772
      %v1774 = vpop.f32.mrf.mxu0
      %v1775 = vadd.f32 0.0, %v1774
      %1776 = vmatmul.bf16.gmra.mxu0 %v1690
      %v1777 = vpop.f32.mrf.mxu0
      %v1778 = vadd.f32 0.0, %v1777
      %v1779 = vpop.f32.mrf.mxu0
      %v1780 = vadd.f32 0.0, %v1779
      %1781 = vmatmul.bf16.gmra.mxu0 %v1693
      %v1782 = vpop.f32.mrf.mxu0
      %v1783 = vadd.f32 0.0, %v1782
      %v1784 = vpop.f32.mrf.mxu0
      %v1785 = vadd.f32 0.0, %v1784
      %1786 = vdwg.mxu0
      %v1787 = vunpack.c.l.b16 %v1200
      %v1788 = vunpack.c.l.b16 %v1209
      %v1789 = vunpack.c.l.b16 %v1222
      %v1790 = vunpack.c.l.b16 %v1231
      %v1791 = vunpack.c.l.b16 %v1244
      %v1792 = vunpack.c.l.b16 %v1253
      %v1793 = vunpack.c.l.b16 %v1266
      %v1794 = vunpack.c.l.b16 %v1275
      %v1795 = vunpack.c.l.b16 %v1288
      %v1796 = vunpack.c.l.b16 %v1297
      %v1797 = vunpack.c.l.b16 %v1310
      %v1798 = vunpack.c.l.b16 %v1319
      %v1799 = vunpack.c.l.b16 %v1332
      %v1800 = vunpack.c.l.b16 %v1341
      %v1801 = vunpack.c.l.b16 %v1354
      %v1802 = vunpack.c.l.b16 %v1363
      %v1803 = vunpack.c.l.b16 %v1376
      %v1804 = vunpack.c.l.b16 %v1385
      %v1805 = vunpack.c.l.b16 %v1398
      %v1806 = vunpack.c.l.b16 %v1407
      %v1807 = vunpack.c.l.b16 %v1420
      %v1808 = vunpack.c.l.b16 %v1429
      %v1809 = vunpack.c.l.b16 %v1442
      %v1810 = vunpack.c.l.b16 %v1451
      %v1811 = vunpack.c.l.b16 %v1464
      %v1812 = vunpack.c.l.b16 %v1473
      %v1813 = vunpack.c.l.b16 %v1486
      %v1814 = vunpack.c.l.b16 %v1495
      %v1815 = vunpack.c.l.b16 %v1508
      %v1816 = vunpack.c.l.b16 %v1517
      %v1817 = vunpack.c.l.b16 %v1530
      %v1818 = vunpack.c.l.b16 %v1539
      %v1819 = vpack.c.b16 %v1788, %v1787
      %v1820 = vpack.c.b16 %v1790, %v1789
      %v1821 = vpack.c.b16 %v1792, %v1791
      %v1822 = vpack.c.b16 %v1794, %v1793
      %v1823 = vpack.c.b16 %v1796, %v1795
      %v1824 = vpack.c.b16 %v1798, %v1797
      %v1825 = vpack.c.b16 %v1800, %v1799
      %v1826 = vpack.c.b16 %v1802, %v1801
      %v1827 = vpack.c.b16 %v1804, %v1803
      %v1828 = vpack.c.b16 %v1806, %v1805
      %v1829 = vpack.c.b16 %v1808, %v1807
      %v1830 = vpack.c.b16 %v1810, %v1809
      %v1831 = vpack.c.b16 %v1812, %v1811
      %v1832 = vpack.c.b16 %v1814, %v1813
      %v1833 = vpack.c.b16 %v1816, %v1815
      %v1834 = vpack.c.b16 %v1818, %v1817
      %v1840 = vunpack.c.l.b16 %v1540
      %v1841 = vunpack.c.l.b16 %v1541
      %v1842 = vunpack.c.l.b16 %v1542
      %v1843 = vunpack.c.l.b16 %v1543
      %v1844 = vunpack.c.l.b16 %v1544
      %v1845 = vpack.c.b16 %v1841, %v1840
      %v1846 = vpack.c.b16 %v1843, %v1842
      %v1847 = vpack.c.b16 %v1844, %v1844
      %v1851 = vsel %vm1646, %v1819, 0
      %v1854 = vsel %vm1646, %v1820, 0
      %v1857 = vsel %vm1646, %v1821, 0
      %v1860 = vsel %vm1646, %v1822, 0
      %v1863 = vsel %vm1646, %v1823, 0
      %v1866 = vsel %vm1646, %v1824, 0
      %v1869 = vsel %vm1646, %v1825, 0
      %v1872 = vsel %vm1646, %v1826, 0
      %v1875 = vsel %vm1646, %v1827, 0
      %v1878 = vsel %vm1646, %v1828, 0
      %v1881 = vsel %vm1646, %v1829, 0
      %v1884 = vsel %vm1646, %v1830, 0
      %v1887 = vsel %vm1646, %v1831, 0
      %v1890 = vsel %vm1646, %v1832, 0
      %v1893 = vsel %vm1646, %v1833, 0
      %v1896 = vsel %vm1646, %v1834, 0
      %v1899 = vsel %vm557, %v1847, 0
      %1901 = vmatpush.bf16.msra.mxu0 0
      %1902 = vmatpush.bf16.msra.mxu0 0
      %1903 = vmatpush.bf16.msra.mxu0 0
      %1904 = vmatpush.bf16.msra.mxu0 0
      %1905 = vmatpush.bf16.msra.mxu0 0
      %1906 = vmatpush.bf16.msra.mxu0 %v1899
      %1907 = vmatpush.bf16.msra.mxu0 %v1846
      %1908 = vmatpush.bf16.msra.mxu0 %v1845
      %1909 = vmatmul.bf16.gmra.mxu0 %v1851
      %v1910 = vpop.f32.mrf.mxu0
      %v1911 = vadd.f32 %v1708, %v1910
      %v1912 = vpop.f32.mrf.mxu0
      %v1913 = vadd.f32 %v1710, %v1912
      %1914 = vmatmul.bf16.gmra.mxu0 %v1854
      %v1915 = vpop.f32.mrf.mxu0
      %v1916 = vadd.f32 %v1713, %v1915
      %v1917 = vpop.f32.mrf.mxu0
      %v1918 = vadd.f32 %v1715, %v1917
      %1919 = vmatmul.bf16.gmra.mxu0 %v1857
      %v1920 = vpop.f32.mrf.mxu0
      %v1921 = vadd.f32 %v1718, %v1920
      %v1922 = vpop.f32.mrf.mxu0
      %v1923 = vadd.f32 %v1720, %v1922
      %1924 = vmatmul.bf16.gmra.mxu0 %v1860
      %v1925 = vpop.f32.mrf.mxu0
      %v1926 = vadd.f32 %v1723, %v1925
      %v1927 = vpop.f32.mrf.mxu0
      %v1928 = vadd.f32 %v1725, %v1927
      %1929 = vmatmul.bf16.gmra.mxu0 %v1863
      %v1930 = vpop.f32.mrf.mxu0
      %v1931 = vadd.f32 %v1728, %v1930
      %v1932 = vpop.f32.mrf.mxu0
      %v1933 = vadd.f32 %v1730, %v1932
      %1934 = vmatmul.bf16.gmra.mxu0 %v1866
      %v1935 = vpop.f32.mrf.mxu0
      %v1936 = vadd.f32 %v1733, %v1935
      %v1937 = vpop.f32.mrf.mxu0
      %v1938 = vadd.f32 %v1735, %v1937
      %1939 = vmatmul.bf16.gmra.mxu0 %v1869
      %v1940 = vpop.f32.mrf.mxu0
      %v1941 = vadd.f32 %v1738, %v1940
      %v1942 = vpop.f32.mrf.mxu0
      %v1943 = vadd.f32 %v1740, %v1942
      %1944 = vmatmul.bf16.gmra.mxu0 %v1872
      %v1945 = vpop.f32.mrf.mxu0
      %v1946 = vadd.f32 %v1743, %v1945
      %v1947 = vpop.f32.mrf.mxu0
      %v1948 = vadd.f32 %v1745, %v1947
      %1949 = vmatmul.bf16.gmra.mxu0 %v1875
      %v1950 = vpop.f32.mrf.mxu0
      %v1951 = vadd.f32 %v1748, %v1950
      %v1952 = vpop.f32.mrf.mxu0
      %v1953 = vadd.f32 %v1750, %v1952
      %1954 = vmatmul.bf16.gmra.mxu0 %v1878
      %v1955 = vpop.f32.mrf.mxu0
      %v1956 = vadd.f32 %v1753, %v1955
      %v1957 = vpop.f32.mrf.mxu0
      %v1958 = vadd.f32 %v1755, %v1957
      %1959 = vmatmul.bf16.gmra.mxu0 %v1881
      %v1960 = vpop.f32.mrf.mxu0
      %v1961 = vadd.f32 %v1758, %v1960
      %v1962 = vpop.f32.mrf.mxu0
      %v1963 = vadd.f32 %v1760, %v1962
      %1964 = vmatmul.bf16.gmra.mxu0 %v1884
      %v1965 = vpop.f32.mrf.mxu0
      %v1966 = vadd.f32 %v1763, %v1965
      %v1967 = vpop.f32.mrf.mxu0
      %v1968 = vadd.f32 %v1765, %v1967
      %1969 = vmatmul.bf16.gmra.mxu0 %v1887
      %v1970 = vpop.f32.mrf.mxu0
      %v1971 = vadd.f32 %v1768, %v1970
      %v1972 = vpop.f32.mrf.mxu0
      %v1973 = vadd.f32 %v1770, %v1972
      %1974 = vmatmul.bf16.gmra.mxu0 %v1890
      %v1975 = vpop.f32.mrf.mxu0
      %v1976 = vadd.f32 %v1773, %v1975
      %v1977 = vpop.f32.mrf.mxu0
      %v1978 = vadd.f32 %v1775, %v1977
      %1979 = vmatmul.bf16.gmra.mxu0 %v1893
      %v1980 = vpop.f32.mrf.mxu0
      %v1981 = vadd.f32 %v1778, %v1980
      %v1982 = vpop.f32.mrf.mxu0
      %v1983 = vadd.f32 %v1780, %v1982
      %1984 = vmatmul.bf16.gmra.mxu0 %v1896
      %v1985 = vpop.f32.mrf.mxu0
      %v1986 = vadd.f32 %v1783, %v1985
      %v1987 = vpop.f32.mrf.mxu0
      %v1988 = vadd.f32 %v1785, %v1987
      %1989 = vdwg.mxu0
      %v1990 = vld [vmem:[#allocation2 + $0x4] sm:$0xf]
      %v1991 = vld [vmem:[#allocation2 + $0x8] sm:$0xf]
      %v1992 = vld [vmem:[#allocation2 + $0xc] sm:$0x1]
      %v1993 = vld [vmem:[#allocation2 + $0x14] sm:$0xf]
      %v1994 = vld [vmem:[#allocation2 + $0x18] sm:$0xf]
      %v1995 = vld [vmem:[#allocation2 + $0x1c] sm:$0x1]
      %v1996 = vld [vmem:[#allocation2 + $0x24] sm:$0xf]
      %v1997 = vld [vmem:[#allocation2 + $0x28] sm:$0xf]
      %v1998 = vld [vmem:[#allocation2 + $0x2c] sm:$0x1]
      %v1999 = vld [vmem:[#allocation2 + $0x34] sm:$0xf]
      %v2000 = vld [vmem:[#allocation2 + $0x38] sm:$0xf]
      %v2001 = vld [vmem:[#allocation2 + $0x3c] sm:$0x1]
      %v2002 = vld [vmem:[#allocation2 + $0x44] sm:$0xf]
      %v2003 = vld [vmem:[#allocation2 + $0x48] sm:$0xf]
      %v2004 = vld [vmem:[#allocation2 + $0x4c] sm:$0x1]
      %v2005 = vld [vmem:[#allocation2 + $0x54] sm:$0xf]
      %v2006 = vld [vmem:[#allocation2 + $0x58] sm:$0xf]
      %v2007 = vld [vmem:[#allocation2 + $0x5c] sm:$0x1]
      %v2008 = vld [vmem:[#allocation2 + $0x64] sm:$0xf]
      %v2009 = vld [vmem:[#allocation2 + $0x68] sm:$0xf]
      %v2010 = vld [vmem:[#allocation2 + $0x6c] sm:$0x1]
      %v2011 = vld [vmem:[#allocation2 + $0x74] sm:$0xf]
      %v2012 = vld [vmem:[#allocation2 + $0x78] sm:$0xf]
      %v2013 = vld [vmem:[#allocation2 + $0x7c] sm:$0x1]
      %v2014 = vld [vmem:[#allocation2 + $0x84] sm:$0xf]
      %v2015 = vld [vmem:[#allocation2 + $0x88] sm:$0xf]
      %v2016 = vld [vmem:[#allocation2 + $0x8c] sm:$0x1]
      %v2017 = vld [vmem:[#allocation2 + $0x94] sm:$0xf]
      %v2018 = vld [vmem:[#allocation2 + $0x98] sm:$0xf]
      %v2019 = vld [vmem:[#allocation2 + $0x9c] sm:$0x1]
      %v2020 = vld [vmem:[#allocation2 + $0xa4] sm:$0xf]
      %v2021 = vld [vmem:[#allocation2 + $0xa8] sm:$0xf]
      %v2022 = vld [vmem:[#allocation2 + $0xac] sm:$0x1]
      %v2023 = vld [vmem:[#allocation2 + $0xb4] sm:$0xf]
      %v2024 = vld [vmem:[#allocation2 + $0xb8] sm:$0xf]
      %v2025 = vld [vmem:[#allocation2 + $0xbc] sm:$0x1]
      %v2026 = vld [vmem:[#allocation2 + $0xc4] sm:$0xf]
      %v2027 = vld [vmem:[#allocation2 + $0xc8] sm:$0xf]
      %v2028 = vld [vmem:[#allocation2 + $0xcc] sm:$0x1]
      %v2029 = vld [vmem:[#allocation2 + $0xd4] sm:$0xf]
      %v2030 = vld [vmem:[#allocation2 + $0xd8] sm:$0xf]
      %v2031 = vld [vmem:[#allocation2 + $0xdc] sm:$0x1]
      %v2032 = vld [vmem:[#allocation2 + $0xe4] sm:$0xf]
      %v2033 = vld [vmem:[#allocation2 + $0xe8] sm:$0xf]
      %v2034 = vld [vmem:[#allocation2 + $0xec] sm:$0x1]
      %v2035 = vld [vmem:[#allocation2 + $0xf4] sm:$0xf]
      %v2036 = vld [vmem:[#allocation2 + $0xf8] sm:$0xf]
      %v2037 = vld [vmem:[#allocation2 + $0xfc] sm:$0x1]
      %vm2038 = vsmask.f32 3328
      %vm2039 = vsmask.f32 7440
      %vm2040 = vmor %vm2038, %vm2039
      %v2042 = vshrl.u32 %v1990, 16
      %v2044 = vrot.slane %v2042, 4
      %v2045 = vshll.u32 %v1990, 16
      %v2047 = vrot.slane %v2045, 5
      %v2048 = vor.u32 %v2044, %v2047
      %v2049 = vrot.slane %v2048, 4
      %v2051 = vshll.u32 %v1991, 16
      %v2053 = vrot.slane %v2051, 5
      %v2054 = vsel %vm2040, %v2049, %v2053
      %v2055 = vshrl.u32 %v1991, 16
      %v2057 = vrot.slane %v2055, 4
      %v2058 = vor.u32 %v2057, %v2053
      %v2059 = vrot.slane %v2058, 4
      %v2061 = vshll.u32 %v1992, 16
      %v2063 = vrot.slane %v2061, 5
      %v2064 = vsel %vm2040, %v2059, %v2063
      %v2066 = vshrl.u32 %v1993, 16
      %v2068 = vrot.slane %v2066, 4
      %v2069 = vshll.u32 %v1993, 16
      %v2071 = vrot.slane %v2069, 5
      %v2072 = vor.u32 %v2068, %v2071
      %v2073 = vrot.slane %v2072, 4
      %v2075 = vshll.u32 %v1994, 16
      %v2077 = vrot.slane %v2075, 5
      %v2078 = vsel %vm2040, %v2073, %v2077
      %v2079 = vshrl.u32 %v1994, 16
      %v2081 = vrot.slane %v2079, 4
      %v2082 = vor.u32 %v2081, %v2077
      %v2083 = vrot.slane %v2082, 4
      %v2085 = vshll.u32 %v1995, 16
      %v2087 = vrot.slane %v2085, 5
      %v2088 = vsel %vm2040, %v2083, %v2087
      %v2090 = vshrl.u32 %v1996, 16
      %v2092 = vrot.slane %v2090, 4
      %v2093 = vshll.u32 %v1996, 16
      %v2095 = vrot.slane %v2093, 5
      %v2096 = vor.u32 %v2092, %v2095
      %v2097 = vrot.slane %v2096, 4
      %v2099 = vshll.u32 %v1997, 16
      %v2101 = vrot.slane %v2099, 5
      %v2102 = vsel %vm2040, %v2097, %v2101
      %v2103 = vshrl.u32 %v1997, 16
      %v2105 = vrot.slane %v2103, 4
      %v2106 = vor.u32 %v2105, %v2101
      %v2107 = vrot.slane %v2106, 4
      %v2109 = vshll.u32 %v1998, 16
      %v2111 = vrot.slane %v2109, 5
      %v2112 = vsel %vm2040, %v2107, %v2111
      %v2114 = vshrl.u32 %v1999, 16
      %v2116 = vrot.slane %v2114, 4
      %v2117 = vshll.u32 %v1999, 16
      %v2119 = vrot.slane %v2117, 5
      %v2120 = vor.u32 %v2116, %v2119
      %v2121 = vrot.slane %v2120, 4
      %v2123 = vshll.u32 %v2000, 16
      %v2125 = vrot.slane %v2123, 5
      %v2126 = vsel %vm2040, %v2121, %v2125
      %v2127 = vshrl.u32 %v2000, 16
      %v2129 = vrot.slane %v2127, 4
      %v2130 = vor.u32 %v2129, %v2125
      %v2131 = vrot.slane %v2130, 4
      %v2133 = vshll.u32 %v2001, 16
      %v2135 = vrot.slane %v2133, 5
      %v2136 = vsel %vm2040, %v2131, %v2135
      %v2138 = vshrl.u32 %v2002, 16
      %v2140 = vrot.slane %v2138, 4
      %v2141 = vshll.u32 %v2002, 16
      %v2143 = vrot.slane %v2141, 5
      %v2144 = vor.u32 %v2140, %v2143
      %v2145 = vrot.slane %v2144, 4
      %v2147 = vshll.u32 %v2003, 16
      %v2149 = vrot.slane %v2147, 5
      %v2150 = vsel %vm2040, %v2145, %v2149
      %v2151 = vshrl.u32 %v2003, 16
      %v2153 = vrot.slane %v2151, 4
      %v2154 = vor.u32 %v2153, %v2149
      %v2155 = vrot.slane %v2154, 4
      %v2157 = vshll.u32 %v2004, 16
      %v2159 = vrot.slane %v2157, 5
      %v2160 = vsel %vm2040, %v2155, %v2159
      %v2162 = vshrl.u32 %v2005, 16
      %v2164 = vrot.slane %v2162, 4
      %v2165 = vshll.u32 %v2005, 16
      %v2167 = vrot.slane %v2165, 5
      %v2168 = vor.u32 %v2164, %v2167
      %v2169 = vrot.slane %v2168, 4
      %v2171 = vshll.u32 %v2006, 16
      %v2173 = vrot.slane %v2171, 5
      %v2174 = vsel %vm2040, %v2169, %v2173
      %v2175 = vshrl.u32 %v2006, 16
      %v2177 = vrot.slane %v2175, 4
      %v2178 = vor.u32 %v2177, %v2173
      %v2179 = vrot.slane %v2178, 4
      %v2181 = vshll.u32 %v2007, 16
      %v2183 = vrot.slane %v2181, 5
      %v2184 = vsel %vm2040, %v2179, %v2183
      %v2186 = vshrl.u32 %v2008, 16
      %v2188 = vrot.slane %v2186, 4
      %v2189 = vshll.u32 %v2008, 16
      %v2191 = vrot.slane %v2189, 5
      %v2192 = vor.u32 %v2188, %v2191
      %v2193 = vrot.slane %v2192, 4
      %v2195 = vshll.u32 %v2009, 16
      %v2197 = vrot.slane %v2195, 5
      %v2198 = vsel %vm2040, %v2193, %v2197
      %v2199 = vshrl.u32 %v2009, 16
      %v2201 = vrot.slane %v2199, 4
      %v2202 = vor.u32 %v2201, %v2197
      %v2203 = vrot.slane %v2202, 4
      %v2205 = vshll.u32 %v2010, 16
      %v2207 = vrot.slane %v2205, 5
      %v2208 = vsel %vm2040, %v2203, %v2207
      %v2210 = vshrl.u32 %v2011, 16
      %v2212 = vrot.slane %v2210, 4
      %v2213 = vshll.u32 %v2011, 16
      %v2215 = vrot.slane %v2213, 5
      %v2216 = vor.u32 %v2212, %v2215
      %v2217 = vrot.slane %v2216, 4
      %v2219 = vshll.u32 %v2012, 16
      %v2221 = vrot.slane %v2219, 5
      %v2222 = vsel %vm2040, %v2217, %v2221
      %v2223 = vshrl.u32 %v2012, 16
      %v2225 = vrot.slane %v2223, 4
      %v2226 = vor.u32 %v2225, %v2221
      %v2227 = vrot.slane %v2226, 4
      %v2229 = vshll.u32 %v2013, 16
      %v2231 = vrot.slane %v2229, 5
      %v2232 = vsel %vm2040, %v2227, %v2231
      %v2234 = vshrl.u32 %v2014, 16
      %v2236 = vrot.slane %v2234, 4
      %v2237 = vshll.u32 %v2014, 16
      %v2239 = vrot.slane %v2237, 5
      %v2240 = vor.u32 %v2236, %v2239
      %v2241 = vrot.slane %v2240, 4
      %v2243 = vshll.u32 %v2015, 16
      %v2245 = vrot.slane %v2243, 5
      %v2246 = vsel %vm2040, %v2241, %v2245
      %v2247 = vshrl.u32 %v2015, 16
      %v2249 = vrot.slane %v2247, 4
      %v2250 = vor.u32 %v2249, %v2245
      %v2251 = vrot.slane %v2250, 4
      %v2253 = vshll.u32 %v2016, 16
      %v2255 = vrot.slane %v2253, 5
      %v2256 = vsel %vm2040, %v2251, %v2255
      %v2258 = vshrl.u32 %v2017, 16
      %v2260 = vrot.slane %v2258, 4
      %v2261 = vshll.u32 %v2017, 16
      %v2263 = vrot.slane %v2261, 5
      %v2264 = vor.u32 %v2260, %v2263
      %v2265 = vrot.slane %v2264, 4
      %v2267 = vshll.u32 %v2018, 16
      %v2269 = vrot.slane %v2267, 5
      %v2270 = vsel %vm2040, %v2265, %v2269
      %v2271 = vshrl.u32 %v2018, 16
      %v2273 = vrot.slane %v2271, 4
      %v2274 = vor.u32 %v2273, %v2269
      %v2275 = vrot.slane %v2274, 4
      %v2277 = vshll.u32 %v2019, 16
      %v2279 = vrot.slane %v2277, 5
      %v2280 = vsel %vm2040, %v2275, %v2279
      %v2282 = vshrl.u32 %v2020, 16
      %v2284 = vrot.slane %v2282, 4
      %v2285 = vshll.u32 %v2020, 16
      %v2287 = vrot.slane %v2285, 5
      %v2288 = vor.u32 %v2284, %v2287
      %v2289 = vrot.slane %v2288, 4
      %v2291 = vshll.u32 %v2021, 16
      %v2293 = vrot.slane %v2291, 5
      %v2294 = vsel %vm2040, %v2289, %v2293
      %v2295 = vshrl.u32 %v2021, 16
      %v2297 = vrot.slane %v2295, 4
      %v2298 = vor.u32 %v2297, %v2293
      %v2299 = vrot.slane %v2298, 4
      %v2301 = vshll.u32 %v2022, 16
      %v2303 = vrot.slane %v2301, 5
      %v2304 = vsel %vm2040, %v2299, %v2303
      %v2306 = vshrl.u32 %v2023, 16
      %v2308 = vrot.slane %v2306, 4
      %v2309 = vshll.u32 %v2023, 16
      %v2311 = vrot.slane %v2309, 5
      %v2312 = vor.u32 %v2308, %v2311
      %v2313 = vrot.slane %v2312, 4
      %v2315 = vshll.u32 %v2024, 16
      %v2317 = vrot.slane %v2315, 5
      %v2318 = vsel %vm2040, %v2313, %v2317
      %v2319 = vshrl.u32 %v2024, 16
      %v2321 = vrot.slane %v2319, 4
      %v2322 = vor.u32 %v2321, %v2317
      %v2323 = vrot.slane %v2322, 4
      %v2325 = vshll.u32 %v2025, 16
      %v2327 = vrot.slane %v2325, 5
      %v2328 = vsel %vm2040, %v2323, %v2327
      %v2330 = vshrl.u32 %v2026, 16
      %v2332 = vrot.slane %v2330, 4
      %v2333 = vshll.u32 %v2026, 16
      %v2335 = vrot.slane %v2333, 5
      %v2336 = vor.u32 %v2332, %v2335
      %v2337 = vrot.slane %v2336, 4
      %v2339 = vshll.u32 %v2027, 16
      %v2341 = vrot.slane %v2339, 5
      %v2342 = vsel %vm2040, %v2337, %v2341
      %v2343 = vshrl.u32 %v2027, 16
      %v2345 = vrot.slane %v2343, 4
      %v2346 = vor.u32 %v2345, %v2341
      %v2347 = vrot.slane %v2346, 4
      %v2349 = vshll.u32 %v2028, 16
      %v2351 = vrot.slane %v2349, 5
      %v2352 = vsel %vm2040, %v2347, %v2351
      %v2354 = vshrl.u32 %v2029, 16
      %v2356 = vrot.slane %v2354, 4
      %v2357 = vshll.u32 %v2029, 16
      %v2359 = vrot.slane %v2357, 5
      %v2360 = vor.u32 %v2356, %v2359
      %v2361 = vrot.slane %v2360, 4
      %v2363 = vshll.u32 %v2030, 16
      %v2365 = vrot.slane %v2363, 5
      %v2366 = vsel %vm2040, %v2361, %v2365
      %v2367 = vshrl.u32 %v2030, 16
      %v2369 = vrot.slane %v2367, 4
      %v2370 = vor.u32 %v2369, %v2365
      %v2371 = vrot.slane %v2370, 4
      %v2373 = vshll.u32 %v2031, 16
      %v2375 = vrot.slane %v2373, 5
      %v2376 = vsel %vm2040, %v2371, %v2375
      %v2378 = vshrl.u32 %v2032, 16
      %v2380 = vrot.slane %v2378, 4
      %v2381 = vshll.u32 %v2032, 16
      %v2383 = vrot.slane %v2381, 5
      %v2384 = vor.u32 %v2380, %v2383
      %v2385 = vrot.slane %v2384, 4
      %v2387 = vshll.u32 %v2033, 16
      %v2389 = vrot.slane %v2387, 5
      %v2390 = vsel %vm2040, %v2385, %v2389
      %v2391 = vshrl.u32 %v2033, 16
      %v2393 = vrot.slane %v2391, 4
      %v2394 = vor.u32 %v2393, %v2389
      %v2395 = vrot.slane %v2394, 4
      %v2397 = vshll.u32 %v2034, 16
      %v2399 = vrot.slane %v2397, 5
      %v2400 = vsel %vm2040, %v2395, %v2399
      %v2402 = vshrl.u32 %v2035, 16
      %v2404 = vrot.slane %v2402, 4
      %v2405 = vshll.u32 %v2035, 16
      %v2407 = vrot.slane %v2405, 5
      %v2408 = vor.u32 %v2404, %v2407
      %v2409 = vrot.slane %v2408, 4
      %v2411 = vshll.u32 %v2036, 16
      %v2413 = vrot.slane %v2411, 5
      %v2414 = vsel %vm2040, %v2409, %v2413
      %v2415 = vshrl.u32 %v2036, 16
      %v2417 = vrot.slane %v2415, 4
      %v2418 = vor.u32 %v2417, %v2413
      %v2419 = vrot.slane %v2418, 4
      %v2421 = vshll.u32 %v2037, 16
      %v2423 = vrot.slane %v2421, 5
      %v2424 = vsel %vm2040, %v2419, %v2423
      %s2425 = scalar_lea.vmem %s6, 40
      %v2426 = vld [vmem:[%s2425] sm:$0xf]
      %v2427 = vld [vmem:[%s2425 + $0x4] sm:$0xf]
      %v2428 = vld [vmem:[%s2425 + $0x8] sm:$0xf]
      %v2429 = vld [vmem:[%s2425 + $0xc] sm:$0xf]
      %v2430 = vld [vmem:[%s2425 + $0x10] sm:$0x3]
      %v2431 = vunpack.c.l.b16 %v2054
      %v2432 = vunpack.c.l.b16 %v2064
      %v2433 = vunpack.c.l.b16 %v2078
      %v2434 = vunpack.c.l.b16 %v2088
      %v2435 = vunpack.c.l.b16 %v2102
      %v2436 = vunpack.c.l.b16 %v2112
      %v2437 = vunpack.c.l.b16 %v2126
      %v2438 = vunpack.c.l.b16 %v2136
      %v2439 = vunpack.c.l.b16 %v2150
      %v2440 = vunpack.c.l.b16 %v2160
      %v2441 = vunpack.c.l.b16 %v2174
      %v2442 = vunpack.c.l.b16 %v2184
      %v2443 = vunpack.c.l.b16 %v2198
      %v2444 = vunpack.c.l.b16 %v2208
      %v2445 = vunpack.c.l.b16 %v2222
      %v2446 = vunpack.c.l.b16 %v2232
      %v2447 = vunpack.c.l.b16 %v2246
      %v2448 = vunpack.c.l.b16 %v2256
      %v2449 = vunpack.c.l.b16 %v2270
      %v2450 = vunpack.c.l.b16 %v2280
      %v2451 = vunpack.c.l.b16 %v2294
      %v2452 = vunpack.c.l.b16 %v2304
      %v2453 = vunpack.c.l.b16 %v2318
      %v2454 = vunpack.c.l.b16 %v2328
      %v2455 = vunpack.c.l.b16 %v2342
      %v2456 = vunpack.c.l.b16 %v2352
      %v2457 = vunpack.c.l.b16 %v2366
      %v2458 = vunpack.c.l.b16 %v2376
      %v2459 = vunpack.c.l.b16 %v2390
      %v2460 = vunpack.c.l.b16 %v2400
      %v2461 = vunpack.c.l.b16 %v2414
      %v2462 = vunpack.c.l.b16 %v2424
      %v2463 = vpack.c.b16 %v2432, %v2431
      %v2464 = vpack.c.b16 %v2434, %v2433
      %v2465 = vpack.c.b16 %v2436, %v2435
      %v2466 = vpack.c.b16 %v2438, %v2437
      %v2467 = vpack.c.b16 %v2440, %v2439
      %v2468 = vpack.c.b16 %v2442, %v2441
      %v2469 = vpack.c.b16 %v2444, %v2443
      %v2470 = vpack.c.b16 %v2446, %v2445
      %v2471 = vpack.c.b16 %v2448, %v2447
      %v2472 = vpack.c.b16 %v2450, %v2449
      %v2473 = vpack.c.b16 %v2452, %v2451
      %v2474 = vpack.c.b16 %v2454, %v2453
      %v2475 = vpack.c.b16 %v2456, %v2455
      %v2476 = vpack.c.b16 %v2458, %v2457
      %v2477 = vpack.c.b16 %v2460, %v2459
      %v2478 = vpack.c.b16 %v2462, %v2461
      %v2484 = vunpack.c.l.b16 %v2426
      %v2485 = vunpack.c.l.b16 %v2427
      %v2486 = vunpack.c.l.b16 %v2428
      %v2487 = vunpack.c.l.b16 %v2429
      %v2488 = vunpack.c.l.b16 %v2430
      %v2489 = vpack.c.b16 %v2485, %v2484
      %v2490 = vpack.c.b16 %v2487, %v2486
      %v2491 = vpack.c.b16 %v2488, %v2488
      %v2495 = vsel %vm1646, %v2463, 0
      %v2498 = vsel %vm1646, %v2464, 0
      %v2501 = vsel %vm1646, %v2465, 0
      %v2504 = vsel %vm1646, %v2466, 0
      %v2507 = vsel %vm1646, %v2467, 0
      %v2510 = vsel %vm1646, %v2468, 0
      %v2513 = vsel %vm1646, %v2469, 0
      %v2516 = vsel %vm1646, %v2470, 0
      %v2519 = vsel %vm1646, %v2471, 0
      %v2522 = vsel %vm1646, %v2472, 0
      %v2525 = vsel %vm1646, %v2473, 0
      %v2528 = vsel %vm1646, %v2474, 0
      %v2531 = vsel %vm1646, %v2475, 0
      %v2534 = vsel %vm1646, %v2476, 0
      %v2537 = vsel %vm1646, %v2477, 0
      %v2540 = vsel %vm1646, %v2478, 0
      %v2543 = vsel %vm557, %v2491, 0
      %2545 = vmatpush.bf16.msra.mxu0 0
      %2546 = vmatpush.bf16.msra.mxu0 0
      %2547 = vmatpush.bf16.msra.mxu0 0
      %2548 = vmatpush.bf16.msra.mxu0 0
      %2549 = vmatpush.bf16.msra.mxu0 0
      %2550 = vmatpush.bf16.msra.mxu0 %v2543
      %2551 = vmatpush.bf16.msra.mxu0 %v2490
      %2552 = vmatpush.bf16.msra.mxu0 %v2489
      %2553 = vmatmul.bf16.gmra.mxu0 %v2495
      %v2554 = vpop.f32.mrf.mxu0
      %v2555 = vadd.f32 0.0, %v2554
      %v2556 = vpop.f32.mrf.mxu0
      %v2557 = vadd.f32 0.0, %v2556
      %2558 = vmatmul.bf16.gmra.mxu0 %v2498
      %v2559 = vpop.f32.mrf.mxu0
      %v2560 = vadd.f32 0.0, %v2559
      %v2561 = vpop.f32.mrf.mxu0
      %v2562 = vadd.f32 0.0, %v2561
      %2563 = vmatmul.bf16.gmra.mxu0 %v2501
      %v2564 = vpop.f32.mrf.mxu0
      %v2565 = vadd.f32 0.0, %v2564
      %v2566 = vpop.f32.mrf.mxu0
      %v2567 = vadd.f32 0.0, %v2566
      %2568 = vmatmul.bf16.gmra.mxu0 %v2504
      %v2569 = vpop.f32.mrf.mxu0
      %v2570 = vadd.f32 0.0, %v2569
      %v2571 = vpop.f32.mrf.mxu0
      %v2572 = vadd.f32 0.0, %v2571
      %2573 = vmatmul.bf16.gmra.mxu0 %v2507
      %v2574 = vpop.f32.mrf.mxu0
      %v2575 = vadd.f32 0.0, %v2574
      %v2576 = vpop.f32.mrf.mxu0
      %v2577 = vadd.f32 0.0, %v2576
      %2578 = vmatmul.bf16.gmra.mxu0 %v2510
      %v2579 = vpop.f32.mrf.mxu0
      %v2580 = vadd.f32 0.0, %v2579
      %v2581 = vpop.f32.mrf.mxu0
      %v2582 = vadd.f32 0.0, %v2581
      %2583 = vmatmul.bf16.gmra.mxu0 %v2513
      %v2584 = vpop.f32.mrf.mxu0
      %v2585 = vadd.f32 0.0, %v2584
      %v2586 = vpop.f32.mrf.mxu0
      %v2587 = vadd.f32 0.0, %v2586
      %2588 = vmatmul.bf16.gmra.mxu0 %v2516
      %v2589 = vpop.f32.mrf.mxu0
      %v2590 = vadd.f32 0.0, %v2589
      %v2591 = vpop.f32.mrf.mxu0
      %v2592 = vadd.f32 0.0, %v2591
      %2593 = vmatmul.bf16.gmra.mxu0 %v2519
      %v2594 = vpop.f32.mrf.mxu0
      %v2595 = vadd.f32 0.0, %v2594
      %v2596 = vpop.f32.mrf.mxu0
      %v2597 = vadd.f32 0.0, %v2596
      %2598 = vmatmul.bf16.gmra.mxu0 %v2522
      %v2599 = vpop.f32.mrf.mxu0
      %v2600 = vadd.f32 0.0, %v2599
      %v2601 = vpop.f32.mrf.mxu0
      %v2602 = vadd.f32 0.0, %v2601
      %2603 = vmatmul.bf16.gmra.mxu0 %v2525
      %v2604 = vpop.f32.mrf.mxu0
      %v2605 = vadd.f32 0.0, %v2604
      %v2606 = vpop.f32.mrf.mxu0
      %v2607 = vadd.f32 0.0, %v2606
      %2608 = vmatmul.bf16.gmra.mxu0 %v2528
      %v2609 = vpop.f32.mrf.mxu0
      %v2610 = vadd.f32 0.0, %v2609
      %v2611 = vpop.f32.mrf.mxu0
      %v2612 = vadd.f32 0.0, %v2611
      %2613 = vmatmul.bf16.gmra.mxu0 %v2531
      %v2614 = vpop.f32.mrf.mxu0
      %v2615 = vadd.f32 0.0, %v2614
      %v2616 = vpop.f32.mrf.mxu0
      %v2617 = vadd.f32 0.0, %v2616
      %2618 = vmatmul.bf16.gmra.mxu0 %v2534
      %v2619 = vpop.f32.mrf.mxu0
      %v2620 = vadd.f32 0.0, %v2619
      %v2621 = vpop.f32.mrf.mxu0
      %v2622 = vadd.f32 0.0, %v2621
      %2623 = vmatmul.bf16.gmra.mxu0 %v2537
      %v2624 = vpop.f32.mrf.mxu0
      %v2625 = vadd.f32 0.0, %v2624
      %v2626 = vpop.f32.mrf.mxu0
      %v2627 = vadd.f32 0.0, %v2626
      %2628 = vmatmul.bf16.gmra.mxu0 %v2540
      %v2629 = vpop.f32.mrf.mxu0
      %v2630 = vadd.f32 0.0, %v2629
      %v2631 = vpop.f32.mrf.mxu0
      %v2632 = vadd.f32 0.0, %v2631
      %2633 = vdwg.mxu0
      %v2634 = vadd.f32 %v1911, %v2555
      %v2635 = vadd.f32 %v1913, %v2557
      %v2636 = vadd.f32 %v1916, %v2560
      %v2637 = vadd.f32 %v1918, %v2562
      %v2638 = vadd.f32 %v1921, %v2565
      %v2639 = vadd.f32 %v1923, %v2567
      %v2640 = vadd.f32 %v1926, %v2570
      %v2641 = vadd.f32 %v1928, %v2572
      %v2642 = vadd.f32 %v1931, %v2575
      %v2643 = vadd.f32 %v1933, %v2577
      %v2644 = vadd.f32 %v1936, %v2580
      %v2645 = vadd.f32 %v1938, %v2582
      %v2646 = vadd.f32 %v1941, %v2585
      %v2647 = vadd.f32 %v1943, %v2587
      %v2648 = vadd.f32 %v1946, %v2590
      %v2649 = vadd.f32 %v1948, %v2592
      %v2650 = vadd.f32 %v1951, %v2595
      %v2651 = vadd.f32 %v1953, %v2597
      %v2652 = vadd.f32 %v1956, %v2600
      %v2653 = vadd.f32 %v1958, %v2602
      %v2654 = vadd.f32 %v1961, %v2605
      %v2655 = vadd.f32 %v1963, %v2607
      %v2656 = vadd.f32 %v1966, %v2610
      %v2657 = vadd.f32 %v1968, %v2612
      %v2658 = vadd.f32 %v1971, %v2615
      %v2659 = vadd.f32 %v1973, %v2617
      %v2660 = vadd.f32 %v1976, %v2620
      %v2661 = vadd.f32 %v1978, %v2622
      %v2662 = vadd.f32 %v1981, %v2625
      %v2663 = vadd.f32 %v1983, %v2627
      %v2664 = vadd.f32 %v1986, %v2630
      %v2665 = vadd.f32 %v1988, %v2632
      %v2666 = vld [vmem:[%s878] sm:$0x8]
      %v2667 = vld [vmem:[%s878 + $0x4] sm:$0xf]
      %v2668 = vld [vmem:[%s878 + $0x8] sm:$0xf]
      %v2669 = vld [vmem:[%s878 + $0x10] sm:$0x8]
      %v2670 = vld [vmem:[%s878 + $0x14] sm:$0xf]
      %v2671 = vld [vmem:[%s878 + $0x18] sm:$0xf]
      %v2672 = vld [vmem:[%s878 + $0x20] sm:$0x8]
      %v2673 = vld [vmem:[%s878 + $0x24] sm:$0xf]
      %v2674 = vld [vmem:[%s878 + $0x28] sm:$0xf]
      %v2675 = vld [vmem:[%s878 + $0x30] sm:$0x8]
      %v2676 = vld [vmem:[%s878 + $0x34] sm:$0xf]
      %v2677 = vld [vmem:[%s878 + $0x38] sm:$0xf]
      %v2678 = vld [vmem:[%s878 + $0x40] sm:$0x8]
      %v2679 = vld [vmem:[%s878 + $0x44] sm:$0xf]
      %v2680 = vld [vmem:[%s878 + $0x48] sm:$0xf]
      %v2681 = vld [vmem:[%s878 + $0x50] sm:$0x8]
      %v2682 = vld [vmem:[%s878 + $0x54] sm:$0xf]
      %v2683 = vld [vmem:[%s878 + $0x58] sm:$0xf]
      %v2684 = vld [vmem:[%s878 + $0x60] sm:$0x8]
      %v2685 = vld [vmem:[%s878 + $0x64] sm:$0xf]
      %v2686 = vld [vmem:[%s878 + $0x68] sm:$0xf]
      %v2687 = vld [vmem:[%s878 + $0x70] sm:$0x8]
      %v2688 = vld [vmem:[%s878 + $0x74] sm:$0xf]
      %v2689 = vld [vmem:[%s878 + $0x78] sm:$0xf]
      %v2690 = vld [vmem:[%s878 + $0x80] sm:$0x8]
      %v2691 = vld [vmem:[%s878 + $0x84] sm:$0xf]
      %v2692 = vld [vmem:[%s878 + $0x88] sm:$0xf]
      %v2693 = vld [vmem:[%s878 + $0x90] sm:$0x8]
      %v2694 = vld [vmem:[%s878 + $0x94] sm:$0xf]
      %v2695 = vld [vmem:[%s878 + $0x98] sm:$0xf]
      %v2696 = vld [vmem:[%s878 + $0xa0] sm:$0x8]
      %v2697 = vld [vmem:[%s878 + $0xa4] sm:$0xf]
      %v2698 = vld [vmem:[%s878 + $0xa8] sm:$0xf]
      %v2699 = vld [vmem:[%s878 + $0xb0] sm:$0x8]
      %v2700 = vld [vmem:[%s878 + $0xb4] sm:$0xf]
      %v2701 = vld [vmem:[%s878 + $0xb8] sm:$0xf]
      %v2702 = vld [vmem:[%s878 + $0xc0] sm:$0x8]
      %v2703 = vld [vmem:[%s878 + $0xc4] sm:$0xf]
      %v2704 = vld [vmem:[%s878 + $0xc8] sm:$0xf]
      %v2705 = vld [vmem:[%s878 + $0xd0] sm:$0x8]
      %v2706 = vld [vmem:[%s878 + $0xd4] sm:$0xf]
      %v2707 = vld [vmem:[%s878 + $0xd8] sm:$0xf]
      %v2708 = vld [vmem:[%s878 + $0xe0] sm:$0x8]
      %v2709 = vld [vmem:[%s878 + $0xe4] sm:$0xf]
      %v2710 = vld [vmem:[%s878 + $0xe8] sm:$0xf]
      %v2711 = vld [vmem:[%s878 + $0xf0] sm:$0x8]
      %v2712 = vld [vmem:[%s878 + $0xf4] sm:$0xf]
      %v2713 = vld [vmem:[%s878 + $0xf8] sm:$0xf]
      %v2715 = vshrl.u32 %v2666, 16
      %v2717 = vrot.slane %v2715, 7
      %v2718 = vrot.slane %v2717, 4
      %v2720 = vshrl.u32 %v2667, 16
      %v2722 = vrot.slane %v2720, 7
      %v2723 = vshll.u32 %v2667, 16
      %v2725 = vor.u32 %v2722, %v2723
      %v2726 = vsel %vm1187, %v2718, %v2725
      %v2727 = vrot.slane %v2722, 4
      %v2729 = vshrl.u32 %v2668, 16
      %v2731 = vrot.slane %v2729, 7
      %v2732 = vshll.u32 %v2668, 16
      %v2734 = vor.u32 %v2731, %v2732
      %v2735 = vsel %vm1187, %v2727, %v2734
      %v2737 = vshrl.u32 %v2669, 16
      %v2739 = vrot.slane %v2737, 7
      %v2740 = vrot.slane %v2739, 4
      %v2742 = vshrl.u32 %v2670, 16
      %v2744 = vrot.slane %v2742, 7
      %v2745 = vshll.u32 %v2670, 16
      %v2747 = vor.u32 %v2744, %v2745
      %v2748 = vsel %vm1187, %v2740, %v2747
      %v2749 = vrot.slane %v2744, 4
      %v2751 = vshrl.u32 %v2671, 16
      %v2753 = vrot.slane %v2751, 7
      %v2754 = vshll.u32 %v2671, 16
      %v2756 = vor.u32 %v2753, %v2754
      %v2757 = vsel %vm1187, %v2749, %v2756
      %v2759 = vshrl.u32 %v2672, 16
      %v2761 = vrot.slane %v2759, 7
      %v2762 = vrot.slane %v2761, 4
      %v2764 = vshrl.u32 %v2673, 16
      %v2766 = vrot.slane %v2764, 7
      %v2767 = vshll.u32 %v2673, 16
      %v2769 = vor.u32 %v2766, %v2767
      %v2770 = vsel %vm1187, %v2762, %v2769
      %v2771 = vrot.slane %v2766, 4
      %v2773 = vshrl.u32 %v2674, 16
      %v2775 = vrot.slane %v2773, 7
      %v2776 = vshll.u32 %v2674, 16
      %v2778 = vor.u32 %v2775, %v2776
      %v2779 = vsel %vm1187, %v2771, %v2778
      %v2781 = vshrl.u32 %v2675, 16
      %v2783 = vrot.slane %v2781, 7
      %v2784 = vrot.slane %v2783, 4
      %v2786 = vshrl.u32 %v2676, 16
      %v2788 = vrot.slane %v2786, 7
      %v2789 = vshll.u32 %v2676, 16
      %v2791 = vor.u32 %v2788, %v2789
      %v2792 = vsel %vm1187, %v2784, %v2791
      %v2793 = vrot.slane %v2788, 4
      %v2795 = vshrl.u32 %v2677, 16
      %v2797 = vrot.slane %v2795, 7
      %v2798 = vshll.u32 %v2677, 16
      %v2800 = vor.u32 %v2797, %v2798
      %v2801 = vsel %vm1187, %v2793, %v2800
      %v2803 = vshrl.u32 %v2678, 16
      %v2805 = vrot.slane %v2803, 7
      %v2806 = vrot.slane %v2805, 4
      %v2808 = vshrl.u32 %v2679, 16
      %v2810 = vrot.slane %v2808, 7
      %v2811 = vshll.u32 %v2679, 16
      %v2813 = vor.u32 %v2810, %v2811
      %v2814 = vsel %vm1187, %v2806, %v2813
      %v2815 = vrot.slane %v2810, 4
      %v2817 = vshrl.u32 %v2680, 16
      %v2819 = vrot.slane %v2817, 7
      %v2820 = vshll.u32 %v2680, 16
      %v2822 = vor.u32 %v2819, %v2820
      %v2823 = vsel %vm1187, %v2815, %v2822
      %v2825 = vshrl.u32 %v2681, 16
      %v2827 = vrot.slane %v2825, 7
      %v2828 = vrot.slane %v2827, 4
      %v2830 = vshrl.u32 %v2682, 16
      %v2832 = vrot.slane %v2830, 7
      %v2833 = vshll.u32 %v2682, 16
      %v2835 = vor.u32 %v2832, %v2833
      %v2836 = vsel %vm1187, %v2828, %v2835
      %v2837 = vrot.slane %v2832, 4
      %v2839 = vshrl.u32 %v2683, 16
      %v2841 = vrot.slane %v2839, 7
      %v2842 = vshll.u32 %v2683, 16
      %v2844 = vor.u32 %v2841, %v2842
      %v2845 = vsel %vm1187, %v2837, %v2844
      %v2847 = vshrl.u32 %v2684, 16
      %v2849 = vrot.slane %v2847, 7
      %v2850 = vrot.slane %v2849, 4
      %v2852 = vshrl.u32 %v2685, 16
      %v2854 = vrot.slane %v2852, 7
      %v2855 = vshll.u32 %v2685, 16
      %v2857 = vor.u32 %v2854, %v2855
      %v2858 = vsel %vm1187, %v2850, %v2857
      %v2859 = vrot.slane %v2854, 4
      %v2861 = vshrl.u32 %v2686, 16
      %v2863 = vrot.slane %v2861, 7
      %v2864 = vshll.u32 %v2686, 16
      %v2866 = vor.u32 %v2863, %v2864
      %v2867 = vsel %vm1187, %v2859, %v2866
      %v2869 = vshrl.u32 %v2687, 16
      %v2871 = vrot.slane %v2869, 7
      %v2872 = vrot.slane %v2871, 4
      %v2874 = vshrl.u32 %v2688, 16
      %v2876 = vrot.slane %v2874, 7
      %v2877 = vshll.u32 %v2688, 16
      %v2879 = vor.u32 %v2876, %v2877
      %v2880 = vsel %vm1187, %v2872, %v2879
      %v2881 = vrot.slane %v2876, 4
      %v2883 = vshrl.u32 %v2689, 16
      %v2885 = vrot.slane %v2883, 7
      %v2886 = vshll.u32 %v2689, 16
      %v2888 = vor.u32 %v2885, %v2886
      %v2889 = vsel %vm1187, %v2881, %v2888
      %v2891 = vshrl.u32 %v2690, 16
      %v2893 = vrot.slane %v2891, 7
      %v2894 = vrot.slane %v2893, 4
      %v2896 = vshrl.u32 %v2691, 16
      %v2898 = vrot.slane %v2896, 7
      %v2899 = vshll.u32 %v2691, 16
      %v2901 = vor.u32 %v2898, %v2899
      %v2902 = vsel %vm1187, %v2894, %v2901
      %v2903 = vrot.slane %v2898, 4
      %v2905 = vshrl.u32 %v2692, 16
      %v2907 = vrot.slane %v2905, 7
      %v2908 = vshll.u32 %v2692, 16
      %v2910 = vor.u32 %v2907, %v2908
      %v2911 = vsel %vm1187, %v2903, %v2910
      %v2913 = vshrl.u32 %v2693, 16
      %v2915 = vrot.slane %v2913, 7
      %v2916 = vrot.slane %v2915, 4
      %v2918 = vshrl.u32 %v2694, 16
      %v2920 = vrot.slane %v2918, 7
      %v2921 = vshll.u32 %v2694, 16
      %v2923 = vor.u32 %v2920, %v2921
      %v2924 = vsel %vm1187, %v2916, %v2923
      %v2925 = vrot.slane %v2920, 4
      %v2927 = vshrl.u32 %v2695, 16
      %v2929 = vrot.slane %v2927, 7
      %v2930 = vshll.u32 %v2695, 16
      %v2932 = vor.u32 %v2929, %v2930
      %v2933 = vsel %vm1187, %v2925, %v2932
      %v2935 = vshrl.u32 %v2696, 16
      %v2937 = vrot.slane %v2935, 7
      %v2938 = vrot.slane %v2937, 4
      %v2940 = vshrl.u32 %v2697, 16
      %v2942 = vrot.slane %v2940, 7
      %v2943 = vshll.u32 %v2697, 16
      %v2945 = vor.u32 %v2942, %v2943
      %v2946 = vsel %vm1187, %v2938, %v2945
      %v2947 = vrot.slane %v2942, 4
      %v2949 = vshrl.u32 %v2698, 16
      %v2951 = vrot.slane %v2949, 7
      %v2952 = vshll.u32 %v2698, 16
      %v2954 = vor.u32 %v2951, %v2952
      %v2955 = vsel %vm1187, %v2947, %v2954
      %v2957 = vshrl.u32 %v2699, 16
      %v2959 = vrot.slane %v2957, 7
      %v2960 = vrot.slane %v2959, 4
      %v2962 = vshrl.u32 %v2700, 16
      %v2964 = vrot.slane %v2962, 7
      %v2965 = vshll.u32 %v2700, 16
      %v2967 = vor.u32 %v2964, %v2965
      %v2968 = vsel %vm1187, %v2960, %v2967
      %v2969 = vrot.slane %v2964, 4
      %v2971 = vshrl.u32 %v2701, 16
      %v2973 = vrot.slane %v2971, 7
      %v2974 = vshll.u32 %v2701, 16
      %v2976 = vor.u32 %v2973, %v2974
      %v2977 = vsel %vm1187, %v2969, %v2976
      %v2979 = vshrl.u32 %v2702, 16
      %v2981 = vrot.slane %v2979, 7
      %v2982 = vrot.slane %v2981, 4
      %v2984 = vshrl.u32 %v2703, 16
      %v2986 = vrot.slane %v2984, 7
      %v2987 = vshll.u32 %v2703, 16
      %v2989 = vor.u32 %v2986, %v2987
      %v2990 = vsel %vm1187, %v2982, %v2989
      %v2991 = vrot.slane %v2986, 4
      %v2993 = vshrl.u32 %v2704, 16
      %v2995 = vrot.slane %v2993, 7
      %v2996 = vshll.u32 %v2704, 16
      %v2998 = vor.u32 %v2995, %v2996
      %v2999 = vsel %vm1187, %v2991, %v2998
      %v3001 = vshrl.u32 %v2705, 16
      %v3003 = vrot.slane %v3001, 7
      %v3004 = vrot.slane %v3003, 4
      %v3006 = vshrl.u32 %v2706, 16
      %v3008 = vrot.slane %v3006, 7
      %v3009 = vshll.u32 %v2706, 16
      %v3011 = vor.u32 %v3008, %v3009
      %v3012 = vsel %vm1187, %v3004, %v3011
      %v3013 = vrot.slane %v3008, 4
      %v3015 = vshrl.u32 %v2707, 16
      %v3017 = vrot.slane %v3015, 7
      %v3018 = vshll.u32 %v2707, 16
      %v3020 = vor.u32 %v3017, %v3018
      %v3021 = vsel %vm1187, %v3013, %v3020
      %v3023 = vshrl.u32 %v2708, 16
      %v3025 = vrot.slane %v3023, 7
      %v3026 = vrot.slane %v3025, 4
      %v3028 = vshrl.u32 %v2709, 16
      %v3030 = vrot.slane %v3028, 7
      %v3031 = vshll.u32 %v2709, 16
      %v3033 = vor.u32 %v3030, %v3031
      %v3034 = vsel %vm1187, %v3026, %v3033
      %v3035 = vrot.slane %v3030, 4
      %v3037 = vshrl.u32 %v2710, 16
      %v3039 = vrot.slane %v3037, 7
      %v3040 = vshll.u32 %v2710, 16
      %v3042 = vor.u32 %v3039, %v3040
      %v3043 = vsel %vm1187, %v3035, %v3042
      %v3045 = vshrl.u32 %v2711, 16
      %v3047 = vrot.slane %v3045, 7
      %v3048 = vrot.slane %v3047, 4
      %v3050 = vshrl.u32 %v2712, 16
      %v3052 = vrot.slane %v3050, 7
      %v3053 = vshll.u32 %v2712, 16
      %v3055 = vor.u32 %v3052, %v3053
      %v3056 = vsel %vm1187, %v3048, %v3055
      %v3057 = vrot.slane %v3052, 4
      %v3059 = vshrl.u32 %v2713, 16
      %v3061 = vrot.slane %v3059, 7
      %v3062 = vshll.u32 %v2713, 16
      %v3064 = vor.u32 %v3061, %v3062
      %v3065 = vsel %vm1187, %v3057, %v3064
      %s3066 = scalar_lea.vmem %s6, 60
      %v3067 = vld [vmem:[%s3066] sm:$0xf]
      %v3068 = vld [vmem:[%s3066 + $0x4] sm:$0xf]
      %v3069 = vld [vmem:[%s3066 + $0x8] sm:$0xf]
      %v3070 = vld [vmem:[%s3066 + $0xc] sm:$0xf]
      %v3071 = vld [vmem:[%s3066 + $0x10] sm:$0x3]
      %v3072 = vunpack.c.l.b16 %v2726
      %v3073 = vunpack.c.l.b16 %v2735
      %v3074 = vunpack.c.l.b16 %v2748
      %v3075 = vunpack.c.l.b16 %v2757
      %v3076 = vunpack.c.l.b16 %v2770
      %v3077 = vunpack.c.l.b16 %v2779
      %v3078 = vunpack.c.l.b16 %v2792
      %v3079 = vunpack.c.l.b16 %v2801
      %v3080 = vunpack.c.l.b16 %v2814
      %v3081 = vunpack.c.l.b16 %v2823
      %v3082 = vunpack.c.l.b16 %v2836
      %v3083 = vunpack.c.l.b16 %v2845
      %v3084 = vunpack.c.l.b16 %v2858
      %v3085 = vunpack.c.l.b16 %v2867
      %v3086 = vunpack.c.l.b16 %v2880
      %v3087 = vunpack.c.l.b16 %v2889
      %v3088 = vunpack.c.l.b16 %v2902
      %v3089 = vunpack.c.l.b16 %v2911
      %v3090 = vunpack.c.l.b16 %v2924
      %v3091 = vunpack.c.l.b16 %v2933
      %v3092 = vunpack.c.l.b16 %v2946
      %v3093 = vunpack.c.l.b16 %v2955
      %v3094 = vunpack.c.l.b16 %v2968
      %v3095 = vunpack.c.l.b16 %v2977
      %v3096 = vunpack.c.l.b16 %v2990
      %v3097 = vunpack.c.l.b16 %v2999
      %v3098 = vunpack.c.l.b16 %v3012
      %v3099 = vunpack.c.l.b16 %v3021
      %v3100 = vunpack.c.l.b16 %v3034
      %v3101 = vunpack.c.l.b16 %v3043
      %v3102 = vunpack.c.l.b16 %v3056
      %v3103 = vunpack.c.l.b16 %v3065
      %v3104 = vpack.c.b16 %v3073, %v3072
      %v3105 = vpack.c.b16 %v3075, %v3074
      %v3106 = vpack.c.b16 %v3077, %v3076
      %v3107 = vpack.c.b16 %v3079, %v3078
      %v3108 = vpack.c.b16 %v3081, %v3080
      %v3109 = vpack.c.b16 %v3083, %v3082
      %v3110 = vpack.c.b16 %v3085, %v3084
      %v3111 = vpack.c.b16 %v3087, %v3086
      %v3112 = vpack.c.b16 %v3089, %v3088
      %v3113 = vpack.c.b16 %v3091, %v3090
      %v3114 = vpack.c.b16 %v3093, %v3092
      %v3115 = vpack.c.b16 %v3095, %v3094
      %v3116 = vpack.c.b16 %v3097, %v3096
      %v3117 = vpack.c.b16 %v3099, %v3098
      %v3118 = vpack.c.b16 %v3101, %v3100
      %v3119 = vpack.c.b16 %v3103, %v3102
      %v3125 = vunpack.c.l.b16 %v3067
      %v3126 = vunpack.c.l.b16 %v3068
      %v3127 = vunpack.c.l.b16 %v3069
      %v3128 = vunpack.c.l.b16 %v3070
      %v3129 = vunpack.c.l.b16 %v3071
      %v3130 = vpack.c.b16 %v3126, %v3125
      %v3131 = vpack.c.b16 %v3128, %v3127
      %v3132 = vpack.c.b16 %v3129, %v3129
      %v3136 = vsel %vm1646, %v3104, 0
      %v3139 = vsel %vm1646, %v3105, 0
      %v3142 = vsel %vm1646, %v3106, 0
      %v3145 = vsel %vm1646, %v3107, 0
      %v3148 = vsel %vm1646, %v3108, 0
      %v3151 = vsel %vm1646, %v3109, 0
      %v3154 = vsel %vm1646, %v3110, 0
      %v3157 = vsel %vm1646, %v3111, 0
      %v3160 = vsel %vm1646, %v3112, 0
      %v3163 = vsel %vm1646, %v3113, 0
      %v3166 = vsel %vm1646, %v3114, 0
      %v3169 = vsel %vm1646, %v3115, 0
      %v3172 = vsel %vm1646, %v3116, 0
      %v3175 = vsel %vm1646, %v3117, 0
      %v3178 = vsel %vm1646, %v3118, 0
      %v3181 = vsel %vm1646, %v3119, 0
      %v3184 = vsel %vm557, %v3132, 0
      %3186 = vmatpush.bf16.msra.mxu0 0
      %3187 = vmatpush.bf16.msra.mxu0 0
      %3188 = vmatpush.bf16.msra.mxu0 0
      %3189 = vmatpush.bf16.msra.mxu0 0
      %3190 = vmatpush.bf16.msra.mxu0 0
      %3191 = vmatpush.bf16.msra.mxu0 %v3184
      %3192 = vmatpush.bf16.msra.mxu0 %v3131
      %3193 = vmatpush.bf16.msra.mxu0 %v3130
      %3194 = vmatmul.bf16.gmra.mxu0 %v3136
      %v3195 = vpop.f32.mrf.mxu0
      %v3196 = vadd.f32 0.0, %v3195
      %v3197 = vpop.f32.mrf.mxu0
      %v3198 = vadd.f32 0.0, %v3197
      %3199 = vmatmul.bf16.gmra.mxu0 %v3139
      %v3200 = vpop.f32.mrf.mxu0
      %v3201 = vadd.f32 0.0, %v3200
      %v3202 = vpop.f32.mrf.mxu0
      %v3203 = vadd.f32 0.0, %v3202
      %3204 = vmatmul.bf16.gmra.mxu0 %v3142
      %v3205 = vpop.f32.mrf.mxu0
      %v3206 = vadd.f32 0.0, %v3205
      %v3207 = vpop.f32.mrf.mxu0
      %v3208 = vadd.f32 0.0, %v3207
      %3209 = vmatmul.bf16.gmra.mxu0 %v3145
      %v3210 = vpop.f32.mrf.mxu0
      %v3211 = vadd.f32 0.0, %v3210
      %v3212 = vpop.f32.mrf.mxu0
      %v3213 = vadd.f32 0.0, %v3212
      %3214 = vmatmul.bf16.gmra.mxu0 %v3148
      %v3215 = vpop.f32.mrf.mxu0
      %v3216 = vadd.f32 0.0, %v3215
      %v3217 = vpop.f32.mrf.mxu0
      %v3218 = vadd.f32 0.0, %v3217
      %3219 = vmatmul.bf16.gmra.mxu0 %v3151
      %v3220 = vpop.f32.mrf.mxu0
      %v3221 = vadd.f32 0.0, %v3220
      %v3222 = vpop.f32.mrf.mxu0
      %v3223 = vadd.f32 0.0, %v3222
      %3224 = vmatmul.bf16.gmra.mxu0 %v3154
      %v3225 = vpop.f32.mrf.mxu0
      %v3226 = vadd.f32 0.0, %v3225
      %v3227 = vpop.f32.mrf.mxu0
      %v3228 = vadd.f32 0.0, %v3227
      %3229 = vmatmul.bf16.gmra.mxu0 %v3157
      %v3230 = vpop.f32.mrf.mxu0
      %v3231 = vadd.f32 0.0, %v3230
      %v3232 = vpop.f32.mrf.mxu0
      %v3233 = vadd.f32 0.0, %v3232
      %3234 = vmatmul.bf16.gmra.mxu0 %v3160
      %v3235 = vpop.f32.mrf.mxu0
      %v3236 = vadd.f32 0.0, %v3235
      %v3237 = vpop.f32.mrf.mxu0
      %v3238 = vadd.f32 0.0, %v3237
      %3239 = vmatmul.bf16.gmra.mxu0 %v3163
      %v3240 = vpop.f32.mrf.mxu0
      %v3241 = vadd.f32 0.0, %v3240
      %v3242 = vpop.f32.mrf.mxu0
      %v3243 = vadd.f32 0.0, %v3242
      %3244 = vmatmul.bf16.gmra.mxu0 %v3166
      %v3245 = vpop.f32.mrf.mxu0
      %v3246 = vadd.f32 0.0, %v3245
      %v3247 = vpop.f32.mrf.mxu0
      %v3248 = vadd.f32 0.0, %v3247
      %3249 = vmatmul.bf16.gmra.mxu0 %v3169
      %v3250 = vpop.f32.mrf.mxu0
      %v3251 = vadd.f32 0.0, %v3250
      %v3252 = vpop.f32.mrf.mxu0
      %v3253 = vadd.f32 0.0, %v3252
      %3254 = vmatmul.bf16.gmra.mxu0 %v3172
      %v3255 = vpop.f32.mrf.mxu0
      %v3256 = vadd.f32 0.0, %v3255
      %v3257 = vpop.f32.mrf.mxu0
      %v3258 = vadd.f32 0.0, %v3257
      %3259 = vmatmul.bf16.gmra.mxu0 %v3175
      %v3260 = vpop.f32.mrf.mxu0
      %v3261 = vadd.f32 0.0, %v3260
      %v3262 = vpop.f32.mrf.mxu0
      %v3263 = vadd.f32 0.0, %v3262
      %3264 = vmatmul.bf16.gmra.mxu0 %v3178
      %v3265 = vpop.f32.mrf.mxu0
      %v3266 = vadd.f32 0.0, %v3265
      %v3267 = vpop.f32.mrf.mxu0
      %v3268 = vadd.f32 0.0, %v3267
      %3269 = vmatmul.bf16.gmra.mxu0 %v3181
      %v3270 = vpop.f32.mrf.mxu0
      %v3271 = vadd.f32 0.0, %v3270
      %v3272 = vpop.f32.mrf.mxu0
      %v3273 = vadd.f32 0.0, %v3272
      %3274 = vdwg.mxu0
      %v3275 = vadd.f32 %v2634, %v3196
      %v3276 = vadd.f32 %v2635, %v3198
      %v3277 = vadd.f32 %v2636, %v3201
      %v3278 = vadd.f32 %v2637, %v3203
      %v3279 = vadd.f32 %v2638, %v3206
      %v3280 = vadd.f32 %v2639, %v3208
      %v3281 = vadd.f32 %v2640, %v3211
      %v3282 = vadd.f32 %v2641, %v3213
      %v3283 = vadd.f32 %v2642, %v3216
      %v3284 = vadd.f32 %v2643, %v3218
      %v3285 = vadd.f32 %v2644, %v3221
      %v3286 = vadd.f32 %v2645, %v3223
      %v3287 = vadd.f32 %v2646, %v3226
      %v3288 = vadd.f32 %v2647, %v3228
      %v3289 = vadd.f32 %v2648, %v3231
      %v3290 = vadd.f32 %v2649, %v3233
      %v3291 = vadd.f32 %v2650, %v3236
      %v3292 = vadd.f32 %v2651, %v3238
      %v3293 = vadd.f32 %v2652, %v3241
      %v3294 = vadd.f32 %v2653, %v3243
      %v3295 = vadd.f32 %v2654, %v3246
      %v3296 = vadd.f32 %v2655, %v3248
      %v3297 = vadd.f32 %v2656, %v3251
      %v3298 = vadd.f32 %v2657, %v3253
      %v3299 = vadd.f32 %v2658, %v3256
      %v3300 = vadd.f32 %v2659, %v3258
      %v3301 = vadd.f32 %v2660, %v3261
      %v3302 = vadd.f32 %v2661, %v3263
      %v3303 = vadd.f32 %v2662, %v3266
      %v3304 = vadd.f32 %v2663, %v3268
      %v3305 = vadd.f32 %v2664, %v3271
      %v3306 = vadd.f32 %v2665, %v3273
      %s3307 = scalar_lea.vmem %s6, 80
      %v3308 = vld [vmem:[%s3307] sm:$0xf]
      %v3309 = vld [vmem:[%s3307 + $0x4] sm:$0xf]
      %v3310 = vld [vmem:[%s3307 + $0x8] sm:$0xf]
      %v3311 = vld [vmem:[%s3307 + $0xc] sm:$0xf]
      %v3312 = vld [vmem:[%s3307 + $0x10] sm:$0x3]
      %v3345 = vunpack.c.l.b16 %v2667
      %v3346 = vunpack.c.l.b16 %v2668
      %v3347 = vunpack.c.l.b16 %v2670
      %v3348 = vunpack.c.l.b16 %v2671
      %v3349 = vunpack.c.l.b16 %v2673
      %v3350 = vunpack.c.l.b16 %v2674
      %v3351 = vunpack.c.l.b16 %v2676
      %v3352 = vunpack.c.l.b16 %v2677
      %v3353 = vunpack.c.l.b16 %v2679
      %v3354 = vunpack.c.l.b16 %v2680
      %v3355 = vunpack.c.l.b16 %v2682
      %v3356 = vunpack.c.l.b16 %v2683
      %v3357 = vunpack.c.l.b16 %v2685
      %v3358 = vunpack.c.l.b16 %v2686
      %v3359 = vunpack.c.l.b16 %v2688
      %v3360 = vunpack.c.l.b16 %v2689
      %v3361 = vunpack.c.l.b16 %v2691
      %v3362 = vunpack.c.l.b16 %v2692
      %v3363 = vunpack.c.l.b16 %v2694
      %v3364 = vunpack.c.l.b16 %v2695
      %v3365 = vunpack.c.l.b16 %v2697
      %v3366 = vunpack.c.l.b16 %v2698
      %v3367 = vunpack.c.l.b16 %v2700
      %v3368 = vunpack.c.l.b16 %v2701
      %v3369 = vunpack.c.l.b16 %v2703
      %v3370 = vunpack.c.l.b16 %v2704
      %v3371 = vunpack.c.l.b16 %v2706
      %v3372 = vunpack.c.l.b16 %v2707
      %v3373 = vunpack.c.l.b16 %v2709
      %v3374 = vunpack.c.l.b16 %v2710
      %v3375 = vunpack.c.l.b16 %v2712
      %v3376 = vunpack.c.l.b16 %v2713
      %v3377 = vpack.c.b16 %v3346, %v3345
      %v3378 = vpack.c.b16 %v3348, %v3347
      %v3379 = vpack.c.b16 %v3350, %v3349
      %v3380 = vpack.c.b16 %v3352, %v3351
      %v3381 = vpack.c.b16 %v3354, %v3353
      %v3382 = vpack.c.b16 %v3356, %v3355
      %v3383 = vpack.c.b16 %v3358, %v3357
      %v3384 = vpack.c.b16 %v3360, %v3359
      %v3385 = vpack.c.b16 %v3362, %v3361
      %v3386 = vpack.c.b16 %v3364, %v3363
      %v3387 = vpack.c.b16 %v3366, %v3365
      %v3388 = vpack.c.b16 %v3368, %v3367
      %v3389 = vpack.c.b16 %v3370, %v3369
      %v3390 = vpack.c.b16 %v3372, %v3371
      %v3391 = vpack.c.b16 %v3374, %v3373
      %v3392 = vpack.c.b16 %v3376, %v3375
      %v3398 = vunpack.c.l.b16 %v3308
      %v3399 = vunpack.c.l.b16 %v3309
      %v3400 = vunpack.c.l.b16 %v3310
      %v3401 = vunpack.c.l.b16 %v3311
      %v3402 = vunpack.c.l.b16 %v3312
      %v3403 = vpack.c.b16 %v3399, %v3398
      %v3404 = vpack.c.b16 %v3401, %v3400
      %v3405 = vpack.c.b16 %v3402, %v3402
      %v3409 = vsel %vm1646, %v3377, 0
      %v3412 = vsel %vm1646, %v3378, 0
      %v3415 = vsel %vm1646, %v3379, 0
      %v3418 = vsel %vm1646, %v3380, 0
      %v3421 = vsel %vm1646, %v3381, 0
      %v3424 = vsel %vm1646, %v3382, 0
      %v3427 = vsel %vm1646, %v3383, 0
      %v3430 = vsel %vm1646, %v3384, 0
      %v3433 = vsel %vm1646, %v3385, 0
      %v3436 = vsel %vm1646, %v3386, 0
      %v3439 = vsel %vm1646, %v3387, 0
      %v3442 = vsel %vm1646, %v3388, 0
      %v3445 = vsel %vm1646, %v3389, 0
      %v3448 = vsel %vm1646, %v3390, 0
      %v3451 = vsel %vm1646, %v3391, 0
      %v3454 = vsel %vm1646, %v3392, 0
      %v3457 = vsel %vm557, %v3405, 0
      %3459 = vmatpush.bf16.msra.mxu0 0
      %3460 = vmatpush.bf16.msra.mxu0 0
      %3461 = vmatpush.bf16.msra.mxu0 0
      %3462 = vmatpush.bf16.msra.mxu0 0
      %3463 = vmatpush.bf16.msra.mxu0 0
      %3464 = vmatpush.bf16.msra.mxu0 %v3457
      %3465 = vmatpush.bf16.msra.mxu0 %v3404
      %3466 = vmatpush.bf16.msra.mxu0 %v3403
      %3467 = vmatmul.bf16.gmra.mxu0 %v3409
      %v3468 = vpop.f32.mrf.mxu0
      %v3469 = vadd.f32 0.0, %v3468
      %v3470 = vpop.f32.mrf.mxu0
      %v3471 = vadd.f32 0.0, %v3470
      %3472 = vmatmul.bf16.gmra.mxu0 %v3412
      %v3473 = vpop.f32.mrf.mxu0
      %v3474 = vadd.f32 0.0, %v3473
      %v3475 = vpop.f32.mrf.mxu0
      %v3476 = vadd.f32 0.0, %v3475
      %3477 = vmatmul.bf16.gmra.mxu0 %v3415
      %v3478 = vpop.f32.mrf.mxu0
      %v3479 = vadd.f32 0.0, %v3478
      %v3480 = vpop.f32.mrf.mxu0
      %v3481 = vadd.f32 0.0, %v3480
      %3482 = vmatmul.bf16.gmra.mxu0 %v3418
      %v3483 = vpop.f32.mrf.mxu0
      %v3484 = vadd.f32 0.0, %v3483
      %v3485 = vpop.f32.mrf.mxu0
      %v3486 = vadd.f32 0.0, %v3485
      %3487 = vmatmul.bf16.gmra.mxu0 %v3421
      %v3488 = vpop.f32.mrf.mxu0
      %v3489 = vadd.f32 0.0, %v3488
      %v3490 = vpop.f32.mrf.mxu0
      %v3491 = vadd.f32 0.0, %v3490
      %3492 = vmatmul.bf16.gmra.mxu0 %v3424
      %v3493 = vpop.f32.mrf.mxu0
      %v3494 = vadd.f32 0.0, %v3493
      %v3495 = vpop.f32.mrf.mxu0
      %v3496 = vadd.f32 0.0, %v3495
      %3497 = vmatmul.bf16.gmra.mxu0 %v3427
      %v3498 = vpop.f32.mrf.mxu0
      %v3499 = vadd.f32 0.0, %v3498
      %v3500 = vpop.f32.mrf.mxu0
      %v3501 = vadd.f32 0.0, %v3500
      %3502 = vmatmul.bf16.gmra.mxu0 %v3430
      %v3503 = vpop.f32.mrf.mxu0
      %v3504 = vadd.f32 0.0, %v3503
      %v3505 = vpop.f32.mrf.mxu0
      %v3506 = vadd.f32 0.0, %v3505
      %3507 = vmatmul.bf16.gmra.mxu0 %v3433
      %v3508 = vpop.f32.mrf.mxu0
      %v3509 = vadd.f32 0.0, %v3508
      %v3510 = vpop.f32.mrf.mxu0
      %v3511 = vadd.f32 0.0, %v3510
      %3512 = vmatmul.bf16.gmra.mxu0 %v3436
      %v3513 = vpop.f32.mrf.mxu0
      %v3514 = vadd.f32 0.0, %v3513
      %v3515 = vpop.f32.mrf.mxu0
      %v3516 = vadd.f32 0.0, %v3515
      %3517 = vmatmul.bf16.gmra.mxu0 %v3439
      %v3518 = vpop.f32.mrf.mxu0
      %v3519 = vadd.f32 0.0, %v3518
      %v3520 = vpop.f32.mrf.mxu0
      %v3521 = vadd.f32 0.0, %v3520
      %3522 = vmatmul.bf16.gmra.mxu0 %v3442
      %v3523 = vpop.f32.mrf.mxu0
      %v3524 = vadd.f32 0.0, %v3523
      %v3525 = vpop.f32.mrf.mxu0
      %v3526 = vadd.f32 0.0, %v3525
      %3527 = vmatmul.bf16.gmra.mxu0 %v3445
      %v3528 = vpop.f32.mrf.mxu0
      %v3529 = vadd.f32 0.0, %v3528
      %v3530 = vpop.f32.mrf.mxu0
      %v3531 = vadd.f32 0.0, %v3530
      %3532 = vmatmul.bf16.gmra.mxu0 %v3448
      %v3533 = vpop.f32.mrf.mxu0
      %v3534 = vadd.f32 0.0, %v3533
      %v3535 = vpop.f32.mrf.mxu0
      %v3536 = vadd.f32 0.0, %v3535
      %3537 = vmatmul.bf16.gmra.mxu0 %v3451
      %v3538 = vpop.f32.mrf.mxu0
      %v3539 = vadd.f32 0.0, %v3538
      %v3540 = vpop.f32.mrf.mxu0
      %v3541 = vadd.f32 0.0, %v3540
      %3542 = vmatmul.bf16.gmra.mxu0 %v3454
      %v3543 = vpop.f32.mrf.mxu0
      %v3544 = vadd.f32 0.0, %v3543
      %v3545 = vpop.f32.mrf.mxu0
      %v3546 = vadd.f32 0.0, %v3545
      %3547 = vdwg.mxu0
      %v3548 = vadd.f32 %v3275, %v3469
      %v3549 = vadd.f32 %v3276, %v3471
      %v3550 = vadd.f32 %v3277, %v3474
      %v3551 = vadd.f32 %v3278, %v3476
      %v3552 = vadd.f32 %v3279, %v3479
      %v3553 = vadd.f32 %v3280, %v3481
      %v3554 = vadd.f32 %v3281, %v3484
      %v3555 = vadd.f32 %v3282, %v3486
      %v3556 = vadd.f32 %v3283, %v3489
      %v3557 = vadd.f32 %v3284, %v3491
      %v3558 = vadd.f32 %v3285, %v3494
      %v3559 = vadd.f32 %v3286, %v3496
      %v3560 = vadd.f32 %v3287, %v3499
      %v3561 = vadd.f32 %v3288, %v3501
      %v3562 = vadd.f32 %v3289, %v3504
      %v3563 = vadd.f32 %v3290, %v3506
      %v3564 = vadd.f32 %v3291, %v3509
      %v3565 = vadd.f32 %v3292, %v3511
      %v3566 = vadd.f32 %v3293, %v3514
      %v3567 = vadd.f32 %v3294, %v3516
      %v3568 = vadd.f32 %v3295, %v3519
      %v3569 = vadd.f32 %v3296, %v3521
      %v3570 = vadd.f32 %v3297, %v3524
      %v3571 = vadd.f32 %v3298, %v3526
      %v3572 = vadd.f32 %v3299, %v3529
      %v3573 = vadd.f32 %v3300, %v3531
      %v3574 = vadd.f32 %v3301, %v3534
      %v3575 = vadd.f32 %v3302, %v3536
      %v3576 = vadd.f32 %v3303, %v3539
      %v3577 = vadd.f32 %v3304, %v3541
      %v3578 = vadd.f32 %v3305, %v3544
      %v3579 = vadd.f32 %v3306, %v3546
      %v3580 = vld [vmem:[%s878 + $0x4] sm:$0xf]
      %v3581 = vld [vmem:[%s878 + $0x8] sm:$0xf]
      %v3582 = vld [vmem:[%s878 + $0xc] sm:$0x1]
      %v3583 = vld [vmem:[%s878 + $0x14] sm:$0xf]
      %v3584 = vld [vmem:[%s878 + $0x18] sm:$0xf]
      %v3585 = vld [vmem:[%s878 + $0x1c] sm:$0x1]
      %v3586 = vld [vmem:[%s878 + $0x24] sm:$0xf]
      %v3587 = vld [vmem:[%s878 + $0x28] sm:$0xf]
      %v3588 = vld [vmem:[%s878 + $0x2c] sm:$0x1]
      %v3589 = vld [vmem:[%s878 + $0x34] sm:$0xf]
      %v3590 = vld [vmem:[%s878 + $0x38] sm:$0xf]
      %v3591 = vld [vmem:[%s878 + $0x3c] sm:$0x1]
      %v3592 = vld [vmem:[%s878 + $0x44] sm:$0xf]
      %v3593 = vld [vmem:[%s878 + $0x48] sm:$0xf]
      %v3594 = vld [vmem:[%s878 + $0x4c] sm:$0x1]
      %v3595 = vld [vmem:[%s878 + $0x54] sm:$0xf]
      %v3596 = vld [vmem:[%s878 + $0x58] sm:$0xf]
      %v3597 = vld [vmem:[%s878 + $0x5c] sm:$0x1]
      %v3598 = vld [vmem:[%s878 + $0x64] sm:$0xf]
      %v3599 = vld [vmem:[%s878 + $0x68] sm:$0xf]
      %v3600 = vld [vmem:[%s878 + $0x6c] sm:$0x1]
      %v3601 = vld [vmem:[%s878 + $0x74] sm:$0xf]
      %v3602 = vld [vmem:[%s878 + $0x78] sm:$0xf]
      %v3603 = vld [vmem:[%s878 + $0x7c] sm:$0x1]
      %v3604 = vld [vmem:[%s878 + $0x84] sm:$0xf]
      %v3605 = vld [vmem:[%s878 + $0x88] sm:$0xf]
      %v3606 = vld [vmem:[%s878 + $0x8c] sm:$0x1]
      %v3607 = vld [vmem:[%s878 + $0x94] sm:$0xf]
      %v3608 = vld [vmem:[%s878 + $0x98] sm:$0xf]
      %v3609 = vld [vmem:[%s878 + $0x9c] sm:$0x1]
      %v3610 = vld [vmem:[%s878 + $0xa4] sm:$0xf]
      %v3611 = vld [vmem:[%s878 + $0xa8] sm:$0xf]
      %v3612 = vld [vmem:[%s878 + $0xac] sm:$0x1]
      %v3613 = vld [vmem:[%s878 + $0xb4] sm:$0xf]
      %v3614 = vld [vmem:[%s878 + $0xb8] sm:$0xf]
      %v3615 = vld [vmem:[%s878 + $0xbc] sm:$0x1]
      %v3616 = vld [vmem:[%s878 + $0xc4] sm:$0xf]
      %v3617 = vld [vmem:[%s878 + $0xc8] sm:$0xf]
      %v3618 = vld [vmem:[%s878 + $0xcc] sm:$0x1]
      %v3619 = vld [vmem:[%s878 + $0xd4] sm:$0xf]
      %v3620 = vld [vmem:[%s878 + $0xd8] sm:$0xf]
      %v3621 = vld [vmem:[%s878 + $0xdc] sm:$0x1]
      %v3622 = vld [vmem:[%s878 + $0xe4] sm:$0xf]
      %v3623 = vld [vmem:[%s878 + $0xe8] sm:$0xf]
      %v3624 = vld [vmem:[%s878 + $0xec] sm:$0x1]
      %v3625 = vld [vmem:[%s878 + $0xf4] sm:$0xf]
      %v3626 = vld [vmem:[%s878 + $0xf8] sm:$0xf]
      %v3627 = vld [vmem:[%s878 + $0xfc] sm:$0x1]
      %v3629 = vshrl.u32 %v3580, 16
      %v3631 = vrot.slane %v3629, 4
      %v3632 = vshll.u32 %v3580, 16
      %v3634 = vrot.slane %v3632, 5
      %v3635 = vor.u32 %v3631, %v3634
      %v3636 = vrot.slane %v3635, 4
      %v3638 = vshll.u32 %v3581, 16
      %v3640 = vrot.slane %v3638, 5
      %v3641 = vsel %vm2040, %v3636, %v3640
      %v3642 = vshrl.u32 %v3581, 16
      %v3644 = vrot.slane %v3642, 4
      %v3645 = vor.u32 %v3644, %v3640
      %v3646 = vrot.slane %v3645, 4
      %v3648 = vshll.u32 %v3582, 16
      %v3650 = vrot.slane %v3648, 5
      %v3651 = vsel %vm2040, %v3646, %v3650
      %v3653 = vshrl.u32 %v3583, 16
      %v3655 = vrot.slane %v3653, 4
      %v3656 = vshll.u32 %v3583, 16
      %v3658 = vrot.slane %v3656, 5
      %v3659 = vor.u32 %v3655, %v3658
      %v3660 = vrot.slane %v3659, 4
      %v3662 = vshll.u32 %v3584, 16
      %v3664 = vrot.slane %v3662, 5
      %v3665 = vsel %vm2040, %v3660, %v3664
      %v3666 = vshrl.u32 %v3584, 16
      %v3668 = vrot.slane %v3666, 4
      %v3669 = vor.u32 %v3668, %v3664
      %v3670 = vrot.slane %v3669, 4
      %v3672 = vshll.u32 %v3585, 16
      %v3674 = vrot.slane %v3672, 5
      %v3675 = vsel %vm2040, %v3670, %v3674
      %v3677 = vshrl.u32 %v3586, 16
      %v3679 = vrot.slane %v3677, 4
      %v3680 = vshll.u32 %v3586, 16
      %v3682 = vrot.slane %v3680, 5
      %v3683 = vor.u32 %v3679, %v3682
      %v3684 = vrot.slane %v3683, 4
      %v3686 = vshll.u32 %v3587, 16
      %v3688 = vrot.slane %v3686, 5
      %v3689 = vsel %vm2040, %v3684, %v3688
      %v3690 = vshrl.u32 %v3587, 16
      %v3692 = vrot.slane %v3690, 4
      %v3693 = vor.u32 %v3692, %v3688
      %v3694 = vrot.slane %v3693, 4
      %v3696 = vshll.u32 %v3588, 16
      %v3698 = vrot.slane %v3696, 5
      %v3699 = vsel %vm2040, %v3694, %v3698
      %v3701 = vshrl.u32 %v3589, 16
      %v3703 = vrot.slane %v3701, 4
      %v3704 = vshll.u32 %v3589, 16
      %v3706 = vrot.slane %v3704, 5
      %v3707 = vor.u32 %v3703, %v3706
      %v3708 = vrot.slane %v3707, 4
      %v3710 = vshll.u32 %v3590, 16
      %v3712 = vrot.slane %v3710, 5
      %v3713 = vsel %vm2040, %v3708, %v3712
      %v3714 = vshrl.u32 %v3590, 16
      %v3716 = vrot.slane %v3714, 4
      %v3717 = vor.u32 %v3716, %v3712
      %v3718 = vrot.slane %v3717, 4
      %v3720 = vshll.u32 %v3591, 16
      %v3722 = vrot.slane %v3720, 5
      %v3723 = vsel %vm2040, %v3718, %v3722
      %v3725 = vshrl.u32 %v3592, 16
      %v3727 = vrot.slane %v3725, 4
      %v3728 = vshll.u32 %v3592, 16
      %v3730 = vrot.slane %v3728, 5
      %v3731 = vor.u32 %v3727, %v3730
      %v3732 = vrot.slane %v3731, 4
      %v3734 = vshll.u32 %v3593, 16
      %v3736 = vrot.slane %v3734, 5
      %v3737 = vsel %vm2040, %v3732, %v3736
      %v3738 = vshrl.u32 %v3593, 16
      %v3740 = vrot.slane %v3738, 4
      %v3741 = vor.u32 %v3740, %v3736
      %v3742 = vrot.slane %v3741, 4
      %v3744 = vshll.u32 %v3594, 16
      %v3746 = vrot.slane %v3744, 5
      %v3747 = vsel %vm2040, %v3742, %v3746
      %v3749 = vshrl.u32 %v3595, 16
      %v3751 = vrot.slane %v3749, 4
      %v3752 = vshll.u32 %v3595, 16
      %v3754 = vrot.slane %v3752, 5
      %v3755 = vor.u32 %v3751, %v3754
      %v3756 = vrot.slane %v3755, 4
      %v3758 = vshll.u32 %v3596, 16
      %v3760 = vrot.slane %v3758, 5
      %v3761 = vsel %vm2040, %v3756, %v3760
      %v3762 = vshrl.u32 %v3596, 16
      %v3764 = vrot.slane %v3762, 4
      %v3765 = vor.u32 %v3764, %v3760
      %v3766 = vrot.slane %v3765, 4
      %v3768 = vshll.u32 %v3597, 16
      %v3770 = vrot.slane %v3768, 5
      %v3771 = vsel %vm2040, %v3766, %v3770
      %v3773 = vshrl.u32 %v3598, 16
      %v3775 = vrot.slane %v3773, 4
      %v3776 = vshll.u32 %v3598, 16
      %v3778 = vrot.slane %v3776, 5
      %v3779 = vor.u32 %v3775, %v3778
      %v3780 = vrot.slane %v3779, 4
      %v3782 = vshll.u32 %v3599, 16
      %v3784 = vrot.slane %v3782, 5
      %v3785 = vsel %vm2040, %v3780, %v3784
      %v3786 = vshrl.u32 %v3599, 16
      %v3788 = vrot.slane %v3786, 4
      %v3789 = vor.u32 %v3788, %v3784
      %v3790 = vrot.slane %v3789, 4
      %v3792 = vshll.u32 %v3600, 16
      %v3794 = vrot.slane %v3792, 5
      %v3795 = vsel %vm2040, %v3790, %v3794
      %v3797 = vshrl.u32 %v3601, 16
      %v3799 = vrot.slane %v3797, 4
      %v3800 = vshll.u32 %v3601, 16
      %v3802 = vrot.slane %v3800, 5
      %v3803 = vor.u32 %v3799, %v3802
      %v3804 = vrot.slane %v3803, 4
      %v3806 = vshll.u32 %v3602, 16
      %v3808 = vrot.slane %v3806, 5
      %v3809 = vsel %vm2040, %v3804, %v3808
      %v3810 = vshrl.u32 %v3602, 16
      %v3812 = vrot.slane %v3810, 4
      %v3813 = vor.u32 %v3812, %v3808
      %v3814 = vrot.slane %v3813, 4
      %v3816 = vshll.u32 %v3603, 16
      %v3818 = vrot.slane %v3816, 5
      %v3819 = vsel %vm2040, %v3814, %v3818
      %v3821 = vshrl.u32 %v3604, 16
      %v3823 = vrot.slane %v3821, 4
      %v3824 = vshll.u32 %v3604, 16
      %v3826 = vrot.slane %v3824, 5
      %v3827 = vor.u32 %v3823, %v3826
      %v3828 = vrot.slane %v3827, 4
      %v3830 = vshll.u32 %v3605, 16
      %v3832 = vrot.slane %v3830, 5
      %v3833 = vsel %vm2040, %v3828, %v3832
      %v3834 = vshrl.u32 %v3605, 16
      %v3836 = vrot.slane %v3834, 4
      %v3837 = vor.u32 %v3836, %v3832
      %v3838 = vrot.slane %v3837, 4
      %v3840 = vshll.u32 %v3606, 16
      %v3842 = vrot.slane %v3840, 5
      %v3843 = vsel %vm2040, %v3838, %v3842
      %v3845 = vshrl.u32 %v3607, 16
      %v3847 = vrot.slane %v3845, 4
      %v3848 = vshll.u32 %v3607, 16
      %v3850 = vrot.slane %v3848, 5
      %v3851 = vor.u32 %v3847, %v3850
      %v3852 = vrot.slane %v3851, 4
      %v3854 = vshll.u32 %v3608, 16
      %v3856 = vrot.slane %v3854, 5
      %v3857 = vsel %vm2040, %v3852, %v3856
      %v3858 = vshrl.u32 %v3608, 16
      %v3860 = vrot.slane %v3858, 4
      %v3861 = vor.u32 %v3860, %v3856
      %v3862 = vrot.slane %v3861, 4
      %v3864 = vshll.u32 %v3609, 16
      %v3866 = vrot.slane %v3864, 5
      %v3867 = vsel %vm2040, %v3862, %v3866
      %v3869 = vshrl.u32 %v3610, 16
      %v3871 = vrot.slane %v3869, 4
      %v3872 = vshll.u32 %v3610, 16
      %v3874 = vrot.slane %v3872, 5
      %v3875 = vor.u32 %v3871, %v3874
      %v3876 = vrot.slane %v3875, 4
      %v3878 = vshll.u32 %v3611, 16
      %v3880 = vrot.slane %v3878, 5
      %v3881 = vsel %vm2040, %v3876, %v3880
      %v3882 = vshrl.u32 %v3611, 16
      %v3884 = vrot.slane %v3882, 4
      %v3885 = vor.u32 %v3884, %v3880
      %v3886 = vrot.slane %v3885, 4
      %v3888 = vshll.u32 %v3612, 16
      %v3890 = vrot.slane %v3888, 5
      %v3891 = vsel %vm2040, %v3886, %v3890
      %v3893 = vshrl.u32 %v3613, 16
      %v3895 = vrot.slane %v3893, 4
      %v3896 = vshll.u32 %v3613, 16
      %v3898 = vrot.slane %v3896, 5
      %v3899 = vor.u32 %v3895, %v3898
      %v3900 = vrot.slane %v3899, 4
      %v3902 = vshll.u32 %v3614, 16
      %v3904 = vrot.slane %v3902, 5
      %v3905 = vsel %vm2040, %v3900, %v3904
      %v3906 = vshrl.u32 %v3614, 16
      %v3908 = vrot.slane %v3906, 4
      %v3909 = vor.u32 %v3908, %v3904
      %v3910 = vrot.slane %v3909, 4
      %v3912 = vshll.u32 %v3615, 16
      %v3914 = vrot.slane %v3912, 5
      %v3915 = vsel %vm2040, %v3910, %v3914
      %v3917 = vshrl.u32 %v3616, 16
      %v3919 = vrot.slane %v3917, 4
      %v3920 = vshll.u32 %v3616, 16
      %v3922 = vrot.slane %v3920, 5
      %v3923 = vor.u32 %v3919, %v3922
      %v3924 = vrot.slane %v3923, 4
      %v3926 = vshll.u32 %v3617, 16
      %v3928 = vrot.slane %v3926, 5
      %v3929 = vsel %vm2040, %v3924, %v3928
      %v3930 = vshrl.u32 %v3617, 16
      %v3932 = vrot.slane %v3930, 4
      %v3933 = vor.u32 %v3932, %v3928
      %v3934 = vrot.slane %v3933, 4
      %v3936 = vshll.u32 %v3618, 16
      %v3938 = vrot.slane %v3936, 5
      %v3939 = vsel %vm2040, %v3934, %v3938
      %v3941 = vshrl.u32 %v3619, 16
      %v3943 = vrot.slane %v3941, 4
      %v3944 = vshll.u32 %v3619, 16
      %v3946 = vrot.slane %v3944, 5
      %v3947 = vor.u32 %v3943, %v3946
      %v3948 = vrot.slane %v3947, 4
      %v3950 = vshll.u32 %v3620, 16
      %v3952 = vrot.slane %v3950, 5
      %v3953 = vsel %vm2040, %v3948, %v3952
      %v3954 = vshrl.u32 %v3620, 16
      %v3956 = vrot.slane %v3954, 4
      %v3957 = vor.u32 %v3956, %v3952
      %v3958 = vrot.slane %v3957, 4
      %v3960 = vshll.u32 %v3621, 16
      %v3962 = vrot.slane %v3960, 5
      %v3963 = vsel %vm2040, %v3958, %v3962
      %v3965 = vshrl.u32 %v3622, 16
      %v3967 = vrot.slane %v3965, 4
      %v3968 = vshll.u32 %v3622, 16
      %v3970 = vrot.slane %v3968, 5
      %v3971 = vor.u32 %v3967, %v3970
      %v3972 = vrot.slane %v3971, 4
      %v3974 = vshll.u32 %v3623, 16
      %v3976 = vrot.slane %v3974, 5
      %v3977 = vsel %vm2040, %v3972, %v3976
      %v3978 = vshrl.u32 %v3623, 16
      %v3980 = vrot.slane %v3978, 4
      %v3981 = vor.u32 %v3980, %v3976
      %v3982 = vrot.slane %v3981, 4
      %v3984 = vshll.u32 %v3624, 16
      %v3986 = vrot.slane %v3984, 5
      %v3987 = vsel %vm2040, %v3982, %v3986
      %v3989 = vshrl.u32 %v3625, 16
      %v3991 = vrot.slane %v3989, 4
      %v3992 = vshll.u32 %v3625, 16
      %v3994 = vrot.slane %v3992, 5
      %v3995 = vor.u32 %v3991, %v3994
      %v3996 = vrot.slane %v3995, 4
      %v3998 = vshll.u32 %v3626, 16
      %v4000 = vrot.slane %v3998, 5
      %v4001 = vsel %vm2040, %v3996, %v4000
      %v4002 = vshrl.u32 %v3626, 16
      %v4004 = vrot.slane %v4002, 4
      %v4005 = vor.u32 %v4004, %v4000
      %v4006 = vrot.slane %v4005, 4
      %v4008 = vshll.u32 %v3627, 16
      %v4010 = vrot.slane %v4008, 5
      %v4011 = vsel %vm2040, %v4006, %v4010
      %s4012 = scalar_lea.vmem %s6, 100
      %v4013 = vld [vmem:[%s4012] sm:$0xf]
      %v4014 = vld [vmem:[%s4012 + $0x4] sm:$0xf]
      %v4015 = vld [vmem:[%s4012 + $0x8] sm:$0xf]
      %v4016 = vld [vmem:[%s4012 + $0xc] sm:$0xf]
      %v4017 = vld [vmem:[%s4012 + $0x10] sm:$0x3]
      %v4018 = vunpack.c.l.b16 %v3641
      %v4019 = vunpack.c.l.b16 %v3651
      %v4020 = vunpack.c.l.b16 %v3665
      %v4021 = vunpack.c.l.b16 %v3675
      %v4022 = vunpack.c.l.b16 %v3689
      %v4023 = vunpack.c.l.b16 %v3699
      %v4024 = vunpack.c.l.b16 %v3713
      %v4025 = vunpack.c.l.b16 %v3723
      %v4026 = vunpack.c.l.b16 %v3737
      %v4027 = vunpack.c.l.b16 %v3747
      %v4028 = vunpack.c.l.b16 %v3761
      %v4029 = vunpack.c.l.b16 %v3771
      %v4030 = vunpack.c.l.b16 %v3785
      %v4031 = vunpack.c.l.b16 %v3795
      %v4032 = vunpack.c.l.b16 %v3809
      %v4033 = vunpack.c.l.b16 %v3819
      %v4034 = vunpack.c.l.b16 %v3833
      %v4035 = vunpack.c.l.b16 %v3843
      %v4036 = vunpack.c.l.b16 %v3857
      %v4037 = vunpack.c.l.b16 %v3867
      %v4038 = vunpack.c.l.b16 %v3881
      %v4039 = vunpack.c.l.b16 %v3891
      %v4040 = vunpack.c.l.b16 %v3905
      %v4041 = vunpack.c.l.b16 %v3915
      %v4042 = vunpack.c.l.b16 %v3929
      %v4043 = vunpack.c.l.b16 %v3939
      %v4044 = vunpack.c.l.b16 %v3953
      %v4045 = vunpack.c.l.b16 %v3963
      %v4046 = vunpack.c.l.b16 %v3977
      %v4047 = vunpack.c.l.b16 %v3987
      %v4048 = vunpack.c.l.b16 %v4001
      %v4049 = vunpack.c.l.b16 %v4011
      %v4050 = vpack.c.b16 %v4019, %v4018
      %v4051 = vpack.c.b16 %v4021, %v4020
      %v4052 = vpack.c.b16 %v4023, %v4022
      %v4053 = vpack.c.b16 %v4025, %v4024
      %v4054 = vpack.c.b16 %v4027, %v4026
      %v4055 = vpack.c.b16 %v4029, %v4028
      %v4056 = vpack.c.b16 %v4031, %v4030
      %v4057 = vpack.c.b16 %v4033, %v4032
      %v4058 = vpack.c.b16 %v4035, %v4034
      %v4059 = vpack.c.b16 %v4037, %v4036
      %v4060 = vpack.c.b16 %v4039, %v4038
      %v4061 = vpack.c.b16 %v4041, %v4040
      %v4062 = vpack.c.b16 %v4043, %v4042
      %v4063 = vpack.c.b16 %v4045, %v4044
      %v4064 = vpack.c.b16 %v4047, %v4046
      %v4065 = vpack.c.b16 %v4049, %v4048
      %v4071 = vunpack.c.l.b16 %v4013
      %v4072 = vunpack.c.l.b16 %v4014
      %v4073 = vunpack.c.l.b16 %v4015
      %v4074 = vunpack.c.l.b16 %v4016
      %v4075 = vunpack.c.l.b16 %v4017
      %v4076 = vpack.c.b16 %v4072, %v4071
      %v4077 = vpack.c.b16 %v4074, %v4073
      %v4078 = vpack.c.b16 %v4075, %v4075
      %v4082 = vsel %vm1646, %v4050, 0
      %v4085 = vsel %vm1646, %v4051, 0
      %v4088 = vsel %vm1646, %v4052, 0
      %v4091 = vsel %vm1646, %v4053, 0
      %v4094 = vsel %vm1646, %v4054, 0
      %v4097 = vsel %vm1646, %v4055, 0
      %v4100 = vsel %vm1646, %v4056, 0
      %v4103 = vsel %vm1646, %v4057, 0
      %v4106 = vsel %vm1646, %v4058, 0
      %v4109 = vsel %vm1646, %v4059, 0
      %v4112 = vsel %vm1646, %v4060, 0
      %v4115 = vsel %vm1646, %v4061, 0
      %v4118 = vsel %vm1646, %v4062, 0
      %v4121 = vsel %vm1646, %v4063, 0
      %v4124 = vsel %vm1646, %v4064, 0
      %v4127 = vsel %vm1646, %v4065, 0
      %v4130 = vsel %vm557, %v4078, 0
      %4132 = vmatpush.bf16.msra.mxu0 0
      %4133 = vmatpush.bf16.msra.mxu0 0
      %4134 = vmatpush.bf16.msra.mxu0 0
      %4135 = vmatpush.bf16.msra.mxu0 0
      %4136 = vmatpush.bf16.msra.mxu0 0
      %4137 = vmatpush.bf16.msra.mxu0 %v4130
      %4138 = vmatpush.bf16.msra.mxu0 %v4077
      %4139 = vmatpush.bf16.msra.mxu0 %v4076
      %4140 = vmatmul.bf16.gmra.mxu0 %v4082
      %v4141 = vpop.f32.mrf.mxu0
      %v4142 = vadd.f32 0.0, %v4141
      %v4143 = vpop.f32.mrf.mxu0
      %v4144 = vadd.f32 0.0, %v4143
      %4145 = vmatmul.bf16.gmra.mxu0 %v4085
      %v4146 = vpop.f32.mrf.mxu0
      %v4147 = vadd.f32 0.0, %v4146
      %v4148 = vpop.f32.mrf.mxu0
      %v4149 = vadd.f32 0.0, %v4148
      %4150 = vmatmul.bf16.gmra.mxu0 %v4088
      %v4151 = vpop.f32.mrf.mxu0
      %v4152 = vadd.f32 0.0, %v4151
      %v4153 = vpop.f32.mrf.mxu0
      %v4154 = vadd.f32 0.0, %v4153
      %4155 = vmatmul.bf16.gmra.mxu0 %v4091
      %v4156 = vpop.f32.mrf.mxu0
      %v4157 = vadd.f32 0.0, %v4156
      %v4158 = vpop.f32.mrf.mxu0
      %v4159 = vadd.f32 0.0, %v4158
      %4160 = vmatmul.bf16.gmra.mxu0 %v4094
      %v4161 = vpop.f32.mrf.mxu0
      %v4162 = vadd.f32 0.0, %v4161
      %v4163 = vpop.f32.mrf.mxu0
      %v4164 = vadd.f32 0.0, %v4163
      %4165 = vmatmul.bf16.gmra.mxu0 %v4097
      %v4166 = vpop.f32.mrf.mxu0
      %v4167 = vadd.f32 0.0, %v4166
      %v4168 = vpop.f32.mrf.mxu0
      %v4169 = vadd.f32 0.0, %v4168
      %4170 = vmatmul.bf16.gmra.mxu0 %v4100
      %v4171 = vpop.f32.mrf.mxu0
      %v4172 = vadd.f32 0.0, %v4171
      %v4173 = vpop.f32.mrf.mxu0
      %v4174 = vadd.f32 0.0, %v4173
      %4175 = vmatmul.bf16.gmra.mxu0 %v4103
      %v4176 = vpop.f32.mrf.mxu0
      %v4177 = vadd.f32 0.0, %v4176
      %v4178 = vpop.f32.mrf.mxu0
      %v4179 = vadd.f32 0.0, %v4178
      %4180 = vmatmul.bf16.gmra.mxu0 %v4106
      %v4181 = vpop.f32.mrf.mxu0
      %v4182 = vadd.f32 0.0, %v4181
      %v4183 = vpop.f32.mrf.mxu0
      %v4184 = vadd.f32 0.0, %v4183
      %4185 = vmatmul.bf16.gmra.mxu0 %v4109
      %v4186 = vpop.f32.mrf.mxu0
      %v4187 = vadd.f32 0.0, %v4186
      %v4188 = vpop.f32.mrf.mxu0
      %v4189 = vadd.f32 0.0, %v4188
      %4190 = vmatmul.bf16.gmra.mxu0 %v4112
      %v4191 = vpop.f32.mrf.mxu0
      %v4192 = vadd.f32 0.0, %v4191
      %v4193 = vpop.f32.mrf.mxu0
      %v4194 = vadd.f32 0.0, %v4193
      %4195 = vmatmul.bf16.gmra.mxu0 %v4115
      %v4196 = vpop.f32.mrf.mxu0
      %v4197 = vadd.f32 0.0, %v4196
      %v4198 = vpop.f32.mrf.mxu0
      %v4199 = vadd.f32 0.0, %v4198
      %4200 = vmatmul.bf16.gmra.mxu0 %v4118
      %v4201 = vpop.f32.mrf.mxu0
      %v4202 = vadd.f32 0.0, %v4201
      %v4203 = vpop.f32.mrf.mxu0
      %v4204 = vadd.f32 0.0, %v4203
      %4205 = vmatmul.bf16.gmra.mxu0 %v4121
      %v4206 = vpop.f32.mrf.mxu0
      %v4207 = vadd.f32 0.0, %v4206
      %v4208 = vpop.f32.mrf.mxu0
      %v4209 = vadd.f32 0.0, %v4208
      %4210 = vmatmul.bf16.gmra.mxu0 %v4124
      %v4211 = vpop.f32.mrf.mxu0
      %v4212 = vadd.f32 0.0, %v4211
      %v4213 = vpop.f32.mrf.mxu0
      %v4214 = vadd.f32 0.0, %v4213
      %4215 = vmatmul.bf16.gmra.mxu0 %v4127
      %v4216 = vpop.f32.mrf.mxu0
      %v4217 = vadd.f32 0.0, %v4216
      %v4218 = vpop.f32.mrf.mxu0
      %v4219 = vadd.f32 0.0, %v4218
      %4220 = vdwg.mxu0
      %v4221 = vadd.f32 %v3548, %v4142
      %v4222 = vadd.f32 %v3549, %v4144
      %v4223 = vadd.f32 %v3550, %v4147
      %v4224 = vadd.f32 %v3551, %v4149
      %v4225 = vadd.f32 %v3552, %v4152
      %v4226 = vadd.f32 %v3553, %v4154
      %v4227 = vadd.f32 %v3554, %v4157
      %v4228 = vadd.f32 %v3555, %v4159
      %v4229 = vadd.f32 %v3556, %v4162
      %v4230 = vadd.f32 %v3557, %v4164
      %v4231 = vadd.f32 %v3558, %v4167
      %v4232 = vadd.f32 %v3559, %v4169
      %v4233 = vadd.f32 %v3560, %v4172
      %v4234 = vadd.f32 %v3561, %v4174
      %v4235 = vadd.f32 %v3562, %v4177
      %v4236 = vadd.f32 %v3563, %v4179
      %v4237 = vadd.f32 %v3564, %v4182
      %v4238 = vadd.f32 %v3565, %v4184
      %v4239 = vadd.f32 %v3566, %v4187
      %v4240 = vadd.f32 %v3567, %v4189
      %v4241 = vadd.f32 %v3568, %v4192
      %v4242 = vadd.f32 %v3569, %v4194
      %v4243 = vadd.f32 %v3570, %v4197
      %v4244 = vadd.f32 %v3571, %v4199
      %v4245 = vadd.f32 %v3572, %v4202
      %v4246 = vadd.f32 %v3573, %v4204
      %v4247 = vadd.f32 %v3574, %v4207
      %v4248 = vadd.f32 %v3575, %v4209
      %v4249 = vadd.f32 %v3576, %v4212
      %v4250 = vadd.f32 %v3577, %v4214
      %v4251 = vadd.f32 %v3578, %v4217
      %v4252 = vadd.f32 %v3579, %v4219
      %s4253 = scalar_lea.vmem [#allocation2], 32
      %v4254 = vld [vmem:[%s4253] sm:$0x8]
      %v4255 = vld [vmem:[%s4253 + $0x4] sm:$0xf]
      %v4256 = vld [vmem:[%s4253 + $0x8] sm:$0xf]
      %v4257 = vld [vmem:[%s4253 + $0x10] sm:$0x8]
      %v4258 = vld [vmem:[%s4253 + $0x14] sm:$0xf]
      %v4259 = vld [vmem:[%s4253 + $0x18] sm:$0xf]
      %v4260 = vld [vmem:[%s4253 + $0x20] sm:$0x8]
      %v4261 = vld [vmem:[%s4253 + $0x24] sm:$0xf]
      %v4262 = vld [vmem:[%s4253 + $0x28] sm:$0xf]
      %v4263 = vld [vmem:[%s4253 + $0x30] sm:$0x8]
      %v4264 = vld [vmem:[%s4253 + $0x34] sm:$0xf]
      %v4265 = vld [vmem:[%s4253 + $0x38] sm:$0xf]
      %v4266 = vld [vmem:[%s4253 + $0x40] sm:$0x8]
      %v4267 = vld [vmem:[%s4253 + $0x44] sm:$0xf]
      %v4268 = vld [vmem:[%s4253 + $0x48] sm:$0xf]
      %v4269 = vld [vmem:[%s4253 + $0x50] sm:$0x8]
      %v4270 = vld [vmem:[%s4253 + $0x54] sm:$0xf]
      %v4271 = vld [vmem:[%s4253 + $0x58] sm:$0xf]
      %v4272 = vld [vmem:[%s4253 + $0x60] sm:$0x8]
      %v4273 = vld [vmem:[%s4253 + $0x64] sm:$0xf]
      %v4274 = vld [vmem:[%s4253 + $0x68] sm:$0xf]
      %v4275 = vld [vmem:[%s4253 + $0x70] sm:$0x8]
      %v4276 = vld [vmem:[%s4253 + $0x74] sm:$0xf]
      %v4277 = vld [vmem:[%s4253 + $0x78] sm:$0xf]
      %v4278 = vld [vmem:[%s4253 + $0x80] sm:$0x8]
      %v4279 = vld [vmem:[%s4253 + $0x84] sm:$0xf]
      %v4280 = vld [vmem:[%s4253 + $0x88] sm:$0xf]
      %v4281 = vld [vmem:[%s4253 + $0x90] sm:$0x8]
      %v4282 = vld [vmem:[%s4253 + $0x94] sm:$0xf]
      %v4283 = vld [vmem:[%s4253 + $0x98] sm:$0xf]
      %v4284 = vld [vmem:[%s4253 + $0xa0] sm:$0x8]
      %v4285 = vld [vmem:[%s4253 + $0xa4] sm:$0xf]
      %v4286 = vld [vmem:[%s4253 + $0xa8] sm:$0xf]
      %v4287 = vld [vmem:[%s4253 + $0xb0] sm:$0x8]
      %v4288 = vld [vmem:[%s4253 + $0xb4] sm:$0xf]
      %v4289 = vld [vmem:[%s4253 + $0xb8] sm:$0xf]
      %v4290 = vld [vmem:[%s4253 + $0xc0] sm:$0x8]
      %v4291 = vld [vmem:[%s4253 + $0xc4] sm:$0xf]
      %v4292 = vld [vmem:[%s4253 + $0xc8] sm:$0xf]
      %v4293 = vld [vmem:[%s4253 + $0xd0] sm:$0x8]
      %v4294 = vld [vmem:[%s4253 + $0xd4] sm:$0xf]
      %v4295 = vld [vmem:[%s4253 + $0xd8] sm:$0xf]
      %v4296 = vld [vmem:[%s4253 + $0xe0] sm:$0x8]
      %v4297 = vld [vmem:[%s4253 + $0xe4] sm:$0xf]
      %v4298 = vld [vmem:[%s4253 + $0xe8] sm:$0xf]
      %v4299 = vld [vmem:[%s4253 + $0xf0] sm:$0x8]
      %v4300 = vld [vmem:[%s4253 + $0xf4] sm:$0xf]
      %v4301 = vld [vmem:[%s4253 + $0xf8] sm:$0xf]
      %v4303 = vshrl.u32 %v4254, 16
      %v4305 = vrot.slane %v4303, 7
      %v4306 = vrot.slane %v4305, 4
      %v4308 = vshrl.u32 %v4255, 16
      %v4310 = vrot.slane %v4308, 7
      %v4311 = vshll.u32 %v4255, 16
      %v4313 = vor.u32 %v4310, %v4311
      %v4314 = vsel %vm1187, %v4306, %v4313
      %v4315 = vrot.slane %v4310, 4
      %v4317 = vshrl.u32 %v4256, 16
      %v4319 = vrot.slane %v4317, 7
      %v4320 = vshll.u32 %v4256, 16
      %v4322 = vor.u32 %v4319, %v4320
      %v4323 = vsel %vm1187, %v4315, %v4322
      %v4325 = vshrl.u32 %v4257, 16
      %v4327 = vrot.slane %v4325, 7
      %v4328 = vrot.slane %v4327, 4
      %v4330 = vshrl.u32 %v4258, 16
      %v4332 = vrot.slane %v4330, 7
      %v4333 = vshll.u32 %v4258, 16
      %v4335 = vor.u32 %v4332, %v4333
      %v4336 = vsel %vm1187, %v4328, %v4335
      %v4337 = vrot.slane %v4332, 4
      %v4339 = vshrl.u32 %v4259, 16
      %v4341 = vrot.slane %v4339, 7
      %v4342 = vshll.u32 %v4259, 16
      %v4344 = vor.u32 %v4341, %v4342
      %v4345 = vsel %vm1187, %v4337, %v4344
      %v4347 = vshrl.u32 %v4260, 16
      %v4349 = vrot.slane %v4347, 7
      %v4350 = vrot.slane %v4349, 4
      %v4352 = vshrl.u32 %v4261, 16
      %v4354 = vrot.slane %v4352, 7
      %v4355 = vshll.u32 %v4261, 16
      %v4357 = vor.u32 %v4354, %v4355
      %v4358 = vsel %vm1187, %v4350, %v4357
      %v4359 = vrot.slane %v4354, 4
      %v4361 = vshrl.u32 %v4262, 16
      %v4363 = vrot.slane %v4361, 7
      %v4364 = vshll.u32 %v4262, 16
      %v4366 = vor.u32 %v4363, %v4364
      %v4367 = vsel %vm1187, %v4359, %v4366
      %v4369 = vshrl.u32 %v4263, 16
      %v4371 = vrot.slane %v4369, 7
      %v4372 = vrot.slane %v4371, 4
      %v4374 = vshrl.u32 %v4264, 16
      %v4376 = vrot.slane %v4374, 7
      %v4377 = vshll.u32 %v4264, 16
      %v4379 = vor.u32 %v4376, %v4377
      %v4380 = vsel %vm1187, %v4372, %v4379
      %v4381 = vrot.slane %v4376, 4
      %v4383 = vshrl.u32 %v4265, 16
      %v4385 = vrot.slane %v4383, 7
      %v4386 = vshll.u32 %v4265, 16
      %v4388 = vor.u32 %v4385, %v4386
      %v4389 = vsel %vm1187, %v4381, %v4388
      %v4391 = vshrl.u32 %v4266, 16
      %v4393 = vrot.slane %v4391, 7
      %v4394 = vrot.slane %v4393, 4
      %v4396 = vshrl.u32 %v4267, 16
      %v4398 = vrot.slane %v4396, 7
      %v4399 = vshll.u32 %v4267, 16
      %v4401 = vor.u32 %v4398, %v4399
      %v4402 = vsel %vm1187, %v4394, %v4401
      %v4403 = vrot.slane %v4398, 4
      %v4405 = vshrl.u32 %v4268, 16
      %v4407 = vrot.slane %v4405, 7
      %v4408 = vshll.u32 %v4268, 16
      %v4410 = vor.u32 %v4407, %v4408
      %v4411 = vsel %vm1187, %v4403, %v4410
      %v4413 = vshrl.u32 %v4269, 16
      %v4415 = vrot.slane %v4413, 7
      %v4416 = vrot.slane %v4415, 4
      %v4418 = vshrl.u32 %v4270, 16
      %v4420 = vrot.slane %v4418, 7
      %v4421 = vshll.u32 %v4270, 16
      %v4423 = vor.u32 %v4420, %v4421
      %v4424 = vsel %vm1187, %v4416, %v4423
      %v4425 = vrot.slane %v4420, 4
      %v4427 = vshrl.u32 %v4271, 16
      %v4429 = vrot.slane %v4427, 7
      %v4430 = vshll.u32 %v4271, 16
      %v4432 = vor.u32 %v4429, %v4430
      %v4433 = vsel %vm1187, %v4425, %v4432
      %v4435 = vshrl.u32 %v4272, 16
      %v4437 = vrot.slane %v4435, 7
      %v4438 = vrot.slane %v4437, 4
      %v4440 = vshrl.u32 %v4273, 16
      %v4442 = vrot.slane %v4440, 7
      %v4443 = vshll.u32 %v4273, 16
      %v4445 = vor.u32 %v4442, %v4443
      %v4446 = vsel %vm1187, %v4438, %v4445
      %v4447 = vrot.slane %v4442, 4
      %v4449 = vshrl.u32 %v4274, 16
      %v4451 = vrot.slane %v4449, 7
      %v4452 = vshll.u32 %v4274, 16
      %v4454 = vor.u32 %v4451, %v4452
      %v4455 = vsel %vm1187, %v4447, %v4454
      %v4457 = vshrl.u32 %v4275, 16
      %v4459 = vrot.slane %v4457, 7
      %v4460 = vrot.slane %v4459, 4
      %v4462 = vshrl.u32 %v4276, 16
      %v4464 = vrot.slane %v4462, 7
      %v4465 = vshll.u32 %v4276, 16
      %v4467 = vor.u32 %v4464, %v4465
      %v4468 = vsel %vm1187, %v4460, %v4467
      %v4469 = vrot.slane %v4464, 4
      %v4471 = vshrl.u32 %v4277, 16
      %v4473 = vrot.slane %v4471, 7
      %v4474 = vshll.u32 %v4277, 16
      %v4476 = vor.u32 %v4473, %v4474
      %v4477 = vsel %vm1187, %v4469, %v4476
      %v4479 = vshrl.u32 %v4278, 16
      %v4481 = vrot.slane %v4479, 7
      %v4482 = vrot.slane %v4481, 4
      %v4484 = vshrl.u32 %v4279, 16
      %v4486 = vrot.slane %v4484, 7
      %v4487 = vshll.u32 %v4279, 16
      %v4489 = vor.u32 %v4486, %v4487
      %v4490 = vsel %vm1187, %v4482, %v4489
      %v4491 = vrot.slane %v4486, 4
      %v4493 = vshrl.u32 %v4280, 16
      %v4495 = vrot.slane %v4493, 7
      %v4496 = vshll.u32 %v4280, 16
      %v4498 = vor.u32 %v4495, %v4496
      %v4499 = vsel %vm1187, %v4491, %v4498
      %v4501 = vshrl.u32 %v4281, 16
      %v4503 = vrot.slane %v4501, 7
      %v4504 = vrot.slane %v4503, 4
      %v4506 = vshrl.u32 %v4282, 16
      %v4508 = vrot.slane %v4506, 7
      %v4509 = vshll.u32 %v4282, 16
      %v4511 = vor.u32 %v4508, %v4509
      %v4512 = vsel %vm1187, %v4504, %v4511
      %v4513 = vrot.slane %v4508, 4
      %v4515 = vshrl.u32 %v4283, 16
      %v4517 = vrot.slane %v4515, 7
      %v4518 = vshll.u32 %v4283, 16
      %v4520 = vor.u32 %v4517, %v4518
      %v4521 = vsel %vm1187, %v4513, %v4520
      %v4523 = vshrl.u32 %v4284, 16
      %v4525 = vrot.slane %v4523, 7
      %v4526 = vrot.slane %v4525, 4
      %v4528 = vshrl.u32 %v4285, 16
      %v4530 = vrot.slane %v4528, 7
      %v4531 = vshll.u32 %v4285, 16
      %v4533 = vor.u32 %v4530, %v4531
      %v4534 = vsel %vm1187, %v4526, %v4533
      %v4535 = vrot.slane %v4530, 4
      %v4537 = vshrl.u32 %v4286, 16
      %v4539 = vrot.slane %v4537, 7
      %v4540 = vshll.u32 %v4286, 16
      %v4542 = vor.u32 %v4539, %v4540
      %v4543 = vsel %vm1187, %v4535, %v4542
      %v4545 = vshrl.u32 %v4287, 16
      %v4547 = vrot.slane %v4545, 7
      %v4548 = vrot.slane %v4547, 4
      %v4550 = vshrl.u32 %v4288, 16
      %v4552 = vrot.slane %v4550, 7
      %v4553 = vshll.u32 %v4288, 16
      %v4555 = vor.u32 %v4552, %v4553
      %v4556 = vsel %vm1187, %v4548, %v4555
      %v4557 = vrot.slane %v4552, 4
      %v4559 = vshrl.u32 %v4289, 16
      %v4561 = vrot.slane %v4559, 7
      %v4562 = vshll.u32 %v4289, 16
      %v4564 = vor.u32 %v4561, %v4562
      %v4565 = vsel %vm1187, %v4557, %v4564
      %v4567 = vshrl.u32 %v4290, 16
      %v4569 = vrot.slane %v4567, 7
      %v4570 = vrot.slane %v4569, 4
      %v4572 = vshrl.u32 %v4291, 16
      %v4574 = vrot.slane %v4572, 7
      %v4575 = vshll.u32 %v4291, 16
      %v4577 = vor.u32 %v4574, %v4575
      %v4578 = vsel %vm1187, %v4570, %v4577
      %v4579 = vrot.slane %v4574, 4
      %v4581 = vshrl.u32 %v4292, 16
      %v4583 = vrot.slane %v4581, 7
      %v4584 = vshll.u32 %v4292, 16
      %v4586 = vor.u32 %v4583, %v4584
      %v4587 = vsel %vm1187, %v4579, %v4586
      %v4589 = vshrl.u32 %v4293, 16
      %v4591 = vrot.slane %v4589, 7
      %v4592 = vrot.slane %v4591, 4
      %v4594 = vshrl.u32 %v4294, 16
      %v4596 = vrot.slane %v4594, 7
      %v4597 = vshll.u32 %v4294, 16
      %v4599 = vor.u32 %v4596, %v4597
      %v4600 = vsel %vm1187, %v4592, %v4599
      %v4601 = vrot.slane %v4596, 4
      %v4603 = vshrl.u32 %v4295, 16
      %v4605 = vrot.slane %v4603, 7
      %v4606 = vshll.u32 %v4295, 16
      %v4608 = vor.u32 %v4605, %v4606
      %v4609 = vsel %vm1187, %v4601, %v4608
      %v4611 = vshrl.u32 %v4296, 16
      %v4613 = vrot.slane %v4611, 7
      %v4614 = vrot.slane %v4613, 4
      %v4616 = vshrl.u32 %v4297, 16
      %v4618 = vrot.slane %v4616, 7
      %v4619 = vshll.u32 %v4297, 16
      %v4621 = vor.u32 %v4618, %v4619
      %v4622 = vsel %vm1187, %v4614, %v4621
      %v4623 = vrot.slane %v4618, 4
      %v4625 = vshrl.u32 %v4298, 16
      %v4627 = vrot.slane %v4625, 7
      %v4628 = vshll.u32 %v4298, 16
      %v4630 = vor.u32 %v4627, %v4628
      %v4631 = vsel %vm1187, %v4623, %v4630
      %v4633 = vshrl.u32 %v4299, 16
      %v4635 = vrot.slane %v4633, 7
      %v4636 = vrot.slane %v4635, 4
      %v4638 = vshrl.u32 %v4300, 16
      %v4640 = vrot.slane %v4638, 7
      %v4641 = vshll.u32 %v4300, 16
      %v4643 = vor.u32 %v4640, %v4641
      %v4644 = vsel %vm1187, %v4636, %v4643
      %v4645 = vrot.slane %v4640, 4
      %v4647 = vshrl.u32 %v4301, 16
      %v4649 = vrot.slane %v4647, 7
      %v4650 = vshll.u32 %v4301, 16
      %v4652 = vor.u32 %v4649, %v4650
      %v4653 = vsel %vm1187, %v4645, %v4652
      %s4654 = scalar_lea.vmem %s6, 120
      %v4655 = vld [vmem:[%s4654] sm:$0xf]
      %v4656 = vld [vmem:[%s4654 + $0x4] sm:$0xf]
      %v4657 = vld [vmem:[%s4654 + $0x8] sm:$0xf]
      %v4658 = vld [vmem:[%s4654 + $0xc] sm:$0xf]
      %v4659 = vld [vmem:[%s4654 + $0x10] sm:$0x3]
      %v4660 = vunpack.c.l.b16 %v4314
      %v4661 = vunpack.c.l.b16 %v4323
      %v4662 = vunpack.c.l.b16 %v4336
      %v4663 = vunpack.c.l.b16 %v4345
      %v4664 = vunpack.c.l.b16 %v4358
      %v4665 = vunpack.c.l.b16 %v4367
      %v4666 = vunpack.c.l.b16 %v4380
      %v4667 = vunpack.c.l.b16 %v4389
      %v4668 = vunpack.c.l.b16 %v4402
      %v4669 = vunpack.c.l.b16 %v4411
      %v4670 = vunpack.c.l.b16 %v4424
      %v4671 = vunpack.c.l.b16 %v4433
      %v4672 = vunpack.c.l.b16 %v4446
      %v4673 = vunpack.c.l.b16 %v4455
      %v4674 = vunpack.c.l.b16 %v4468
      %v4675 = vunpack.c.l.b16 %v4477
      %v4676 = vunpack.c.l.b16 %v4490
      %v4677 = vunpack.c.l.b16 %v4499
      %v4678 = vunpack.c.l.b16 %v4512
      %v4679 = vunpack.c.l.b16 %v4521
      %v4680 = vunpack.c.l.b16 %v4534
      %v4681 = vunpack.c.l.b16 %v4543
      %v4682 = vunpack.c.l.b16 %v4556
      %v4683 = vunpack.c.l.b16 %v4565
      %v4684 = vunpack.c.l.b16 %v4578
      %v4685 = vunpack.c.l.b16 %v4587
      %v4686 = vunpack.c.l.b16 %v4600
      %v4687 = vunpack.c.l.b16 %v4609
      %v4688 = vunpack.c.l.b16 %v4622
      %v4689 = vunpack.c.l.b16 %v4631
      %v4690 = vunpack.c.l.b16 %v4644
      %v4691 = vunpack.c.l.b16 %v4653
      %v4692 = vpack.c.b16 %v4661, %v4660
      %v4693 = vpack.c.b16 %v4663, %v4662
      %v4694 = vpack.c.b16 %v4665, %v4664
      %v4695 = vpack.c.b16 %v4667, %v4666
      %v4696 = vpack.c.b16 %v4669, %v4668
      %v4697 = vpack.c.b16 %v4671, %v4670
      %v4698 = vpack.c.b16 %v4673, %v4672
      %v4699 = vpack.c.b16 %v4675, %v4674
      %v4700 = vpack.c.b16 %v4677, %v4676
      %v4701 = vpack.c.b16 %v4679, %v4678
      %v4702 = vpack.c.b16 %v4681, %v4680
      %v4703 = vpack.c.b16 %v4683, %v4682
      %v4704 = vpack.c.b16 %v4685, %v4684
      %v4705 = vpack.c.b16 %v4687, %v4686
      %v4706 = vpack.c.b16 %v4689, %v4688
      %v4707 = vpack.c.b16 %v4691, %v4690
      %v4713 = vunpack.c.l.b16 %v4655
      %v4714 = vunpack.c.l.b16 %v4656
      %v4715 = vunpack.c.l.b16 %v4657
      %v4716 = vunpack.c.l.b16 %v4658
      %v4717 = vunpack.c.l.b16 %v4659
      %v4718 = vpack.c.b16 %v4714, %v4713
      %v4719 = vpack.c.b16 %v4716, %v4715
      %v4720 = vpack.c.b16 %v4717, %v4717
      %v4724 = vsel %vm1646, %v4692, 0
      %v4727 = vsel %vm1646, %v4693, 0
      %v4730 = vsel %vm1646, %v4694, 0
      %v4733 = vsel %vm1646, %v4695, 0
      %v4736 = vsel %vm1646, %v4696, 0
      %v4739 = vsel %vm1646, %v4697, 0
      %v4742 = vsel %vm1646, %v4698, 0
      %v4745 = vsel %vm1646, %v4699, 0
      %v4748 = vsel %vm1646, %v4700, 0
      %v4751 = vsel %vm1646, %v4701, 0
      %v4754 = vsel %vm1646, %v4702, 0
      %v4757 = vsel %vm1646, %v4703, 0
      %v4760 = vsel %vm1646, %v4704, 0
      %v4763 = vsel %vm1646, %v4705, 0
      %v4766 = vsel %vm1646, %v4706, 0
      %v4769 = vsel %vm1646, %v4707, 0
      %v4772 = vsel %vm557, %v4720, 0
      %4774 = vmatpush.bf16.msra.mxu0 0
      %4775 = vmatpush.bf16.msra.mxu0 0
      %4776 = vmatpush.bf16.msra.mxu0 0
      %4777 = vmatpush.bf16.msra.mxu0 0
      %4778 = vmatpush.bf16.msra.mxu0 0
      %4779 = vmatpush.bf16.msra.mxu0 %v4772
      %4780 = vmatpush.bf16.msra.mxu0 %v4719
      %4781 = vmatpush.bf16.msra.mxu0 %v4718
      %4782 = vmatmul.bf16.gmra.mxu0 %v4724
      %v4783 = vpop.f32.mrf.mxu0
      %v4784 = vadd.f32 0.0, %v4783
      %v4785 = vpop.f32.mrf.mxu0
      %v4786 = vadd.f32 0.0, %v4785
      %4787 = vmatmul.bf16.gmra.mxu0 %v4727
      %v4788 = vpop.f32.mrf.mxu0
      %v4789 = vadd.f32 0.0, %v4788
      %v4790 = vpop.f32.mrf.mxu0
      %v4791 = vadd.f32 0.0, %v4790
      %4792 = vmatmul.bf16.gmra.mxu0 %v4730
      %v4793 = vpop.f32.mrf.mxu0
      %v4794 = vadd.f32 0.0, %v4793
      %v4795 = vpop.f32.mrf.mxu0
      %v4796 = vadd.f32 0.0, %v4795
      %4797 = vmatmul.bf16.gmra.mxu0 %v4733
      %v4798 = vpop.f32.mrf.mxu0
      %v4799 = vadd.f32 0.0, %v4798
      %v4800 = vpop.f32.mrf.mxu0
      %v4801 = vadd.f32 0.0, %v4800
      %4802 = vmatmul.bf16.gmra.mxu0 %v4736
      %v4803 = vpop.f32.mrf.mxu0
      %v4804 = vadd.f32 0.0, %v4803
      %v4805 = vpop.f32.mrf.mxu0
      %v4806 = vadd.f32 0.0, %v4805
      %4807 = vmatmul.bf16.gmra.mxu0 %v4739
      %v4808 = vpop.f32.mrf.mxu0
      %v4809 = vadd.f32 0.0, %v4808
      %v4810 = vpop.f32.mrf.mxu0
      %v4811 = vadd.f32 0.0, %v4810
      %4812 = vmatmul.bf16.gmra.mxu0 %v4742
      %v4813 = vpop.f32.mrf.mxu0
      %v4814 = vadd.f32 0.0, %v4813
      %v4815 = vpop.f32.mrf.mxu0
      %v4816 = vadd.f32 0.0, %v4815
      %4817 = vmatmul.bf16.gmra.mxu0 %v4745
      %v4818 = vpop.f32.mrf.mxu0
      %v4819 = vadd.f32 0.0, %v4818
      %v4820 = vpop.f32.mrf.mxu0
      %v4821 = vadd.f32 0.0, %v4820
      %4822 = vmatmul.bf16.gmra.mxu0 %v4748
      %v4823 = vpop.f32.mrf.mxu0
      %v4824 = vadd.f32 0.0, %v4823
      %v4825 = vpop.f32.mrf.mxu0
      %v4826 = vadd.f32 0.0, %v4825
      %4827 = vmatmul.bf16.gmra.mxu0 %v4751
      %v4828 = vpop.f32.mrf.mxu0
      %v4829 = vadd.f32 0.0, %v4828
      %v4830 = vpop.f32.mrf.mxu0
      %v4831 = vadd.f32 0.0, %v4830
      %4832 = vmatmul.bf16.gmra.mxu0 %v4754
      %v4833 = vpop.f32.mrf.mxu0
      %v4834 = vadd.f32 0.0, %v4833
      %v4835 = vpop.f32.mrf.mxu0
      %v4836 = vadd.f32 0.0, %v4835
      %4837 = vmatmul.bf16.gmra.mxu0 %v4757
      %v4838 = vpop.f32.mrf.mxu0
      %v4839 = vadd.f32 0.0, %v4838
      %v4840 = vpop.f32.mrf.mxu0
      %v4841 = vadd.f32 0.0, %v4840
      %4842 = vmatmul.bf16.gmra.mxu0 %v4760
      %v4843 = vpop.f32.mrf.mxu0
      %v4844 = vadd.f32 0.0, %v4843
      %v4845 = vpop.f32.mrf.mxu0
      %v4846 = vadd.f32 0.0, %v4845
      %4847 = vmatmul.bf16.gmra.mxu0 %v4763
      %v4848 = vpop.f32.mrf.mxu0
      %v4849 = vadd.f32 0.0, %v4848
      %v4850 = vpop.f32.mrf.mxu0
      %v4851 = vadd.f32 0.0, %v4850
      %4852 = vmatmul.bf16.gmra.mxu0 %v4766
      %v4853 = vpop.f32.mrf.mxu0
      %v4854 = vadd.f32 0.0, %v4853
      %v4855 = vpop.f32.mrf.mxu0
      %v4856 = vadd.f32 0.0, %v4855
      %4857 = vmatmul.bf16.gmra.mxu0 %v4769
      %v4858 = vpop.f32.mrf.mxu0
      %v4859 = vadd.f32 0.0, %v4858
      %v4860 = vpop.f32.mrf.mxu0
      %v4861 = vadd.f32 0.0, %v4860
      %4862 = vdwg.mxu0
      %v4863 = vadd.f32 %v4221, %v4784
      %v4864 = vadd.f32 %v4222, %v4786
      %v4865 = vadd.f32 %v4223, %v4789
      %v4866 = vadd.f32 %v4224, %v4791
      %v4867 = vadd.f32 %v4225, %v4794
      %v4868 = vadd.f32 %v4226, %v4796
      %v4869 = vadd.f32 %v4227, %v4799
      %v4870 = vadd.f32 %v4228, %v4801
      %v4871 = vadd.f32 %v4229, %v4804
      %v4872 = vadd.f32 %v4230, %v4806
      %v4873 = vadd.f32 %v4231, %v4809
      %v4874 = vadd.f32 %v4232, %v4811
      %v4875 = vadd.f32 %v4233, %v4814
      %v4876 = vadd.f32 %v4234, %v4816
      %v4877 = vadd.f32 %v4235, %v4819
      %v4878 = vadd.f32 %v4236, %v4821
      %v4879 = vadd.f32 %v4237, %v4824
      %v4880 = vadd.f32 %v4238, %v4826
      %v4881 = vadd.f32 %v4239, %v4829
      %v4882 = vadd.f32 %v4240, %v4831
      %v4883 = vadd.f32 %v4241, %v4834
      %v4884 = vadd.f32 %v4242, %v4836
      %v4885 = vadd.f32 %v4243, %v4839
      %v4886 = vadd.f32 %v4244, %v4841
      %v4887 = vadd.f32 %v4245, %v4844
      %v4888 = vadd.f32 %v4246, %v4846
      %v4889 = vadd.f32 %v4247, %v4849
      %v4890 = vadd.f32 %v4248, %v4851
      %v4891 = vadd.f32 %v4249, %v4854
      %v4892 = vadd.f32 %v4250, %v4856
      %v4893 = vadd.f32 %v4251, %v4859
      %v4894 = vadd.f32 %v4252, %v4861
      %s4895 = scalar_lea.vmem %s6, 140
      %v4896 = vld [vmem:[%s4895] sm:$0xf]
      %v4897 = vld [vmem:[%s4895 + $0x4] sm:$0xf]
      %v4898 = vld [vmem:[%s4895 + $0x8] sm:$0xf]
      %v4899 = vld [vmem:[%s4895 + $0xc] sm:$0xf]
      %v4900 = vld [vmem:[%s4895 + $0x10] sm:$0x3]
      %v4933 = vunpack.c.l.b16 %v4255
      %v4934 = vunpack.c.l.b16 %v4256
      %v4935 = vunpack.c.l.b16 %v4258
      %v4936 = vunpack.c.l.b16 %v4259
      %v4937 = vunpack.c.l.b16 %v4261
      %v4938 = vunpack.c.l.b16 %v4262
      %v4939 = vunpack.c.l.b16 %v4264
      %v4940 = vunpack.c.l.b16 %v4265
      %v4941 = vunpack.c.l.b16 %v4267
      %v4942 = vunpack.c.l.b16 %v4268
      %v4943 = vunpack.c.l.b16 %v4270
      %v4944 = vunpack.c.l.b16 %v4271
      %v4945 = vunpack.c.l.b16 %v4273
      %v4946 = vunpack.c.l.b16 %v4274
      %v4947 = vunpack.c.l.b16 %v4276
      %v4948 = vunpack.c.l.b16 %v4277
      %v4949 = vunpack.c.l.b16 %v4279
      %v4950 = vunpack.c.l.b16 %v4280
      %v4951 = vunpack.c.l.b16 %v4282
      %v4952 = vunpack.c.l.b16 %v4283
      %v4953 = vunpack.c.l.b16 %v4285
      %v4954 = vunpack.c.l.b16 %v4286
      %v4955 = vunpack.c.l.b16 %v4288
      %v4956 = vunpack.c.l.b16 %v4289
      %v4957 = vunpack.c.l.b16 %v4291
      %v4958 = vunpack.c.l.b16 %v4292
      %v4959 = vunpack.c.l.b16 %v4294
      %v4960 = vunpack.c.l.b16 %v4295
      %v4961 = vunpack.c.l.b16 %v4297
      %v4962 = vunpack.c.l.b16 %v4298
      %v4963 = vunpack.c.l.b16 %v4300
      %v4964 = vunpack.c.l.b16 %v4301
      %v4965 = vpack.c.b16 %v4934, %v4933
      %v4966 = vpack.c.b16 %v4936, %v4935
      %v4967 = vpack.c.b16 %v4938, %v4937
      %v4968 = vpack.c.b16 %v4940, %v4939
      %v4969 = vpack.c.b16 %v4942, %v4941
      %v4970 = vpack.c.b16 %v4944, %v4943
      %v4971 = vpack.c.b16 %v4946, %v4945
      %v4972 = vpack.c.b16 %v4948, %v4947
      %v4973 = vpack.c.b16 %v4950, %v4949
      %v4974 = vpack.c.b16 %v4952, %v4951
      %v4975 = vpack.c.b16 %v4954, %v4953
      %v4976 = vpack.c.b16 %v4956, %v4955
      %v4977 = vpack.c.b16 %v4958, %v4957
      %v4978 = vpack.c.b16 %v4960, %v4959
      %v4979 = vpack.c.b16 %v4962, %v4961
      %v4980 = vpack.c.b16 %v4964, %v4963
      %v4986 = vunpack.c.l.b16 %v4896
      %v4987 = vunpack.c.l.b16 %v4897
      %v4988 = vunpack.c.l.b16 %v4898
      %v4989 = vunpack.c.l.b16 %v4899
      %v4990 = vunpack.c.l.b16 %v4900
      %v4991 = vpack.c.b16 %v4987, %v4986
      %v4992 = vpack.c.b16 %v4989, %v4988
      %v4993 = vpack.c.b16 %v4990, %v4990
      %v4997 = vsel %vm1646, %v4965, 0
      %v5000 = vsel %vm1646, %v4966, 0
      %v5003 = vsel %vm1646, %v4967, 0
      %v5006 = vsel %vm1646, %v4968, 0
      %v5009 = vsel %vm1646, %v4969, 0
      %v5012 = vsel %vm1646, %v4970, 0
      %v5015 = vsel %vm1646, %v4971, 0
      %v5018 = vsel %vm1646, %v4972, 0
      %v5021 = vsel %vm1646, %v4973, 0
      %v5024 = vsel %vm1646, %v4974, 0
      %v5027 = vsel %vm1646, %v4975, 0
      %v5030 = vsel %vm1646, %v4976, 0
      %v5033 = vsel %vm1646, %v4977, 0
      %v5036 = vsel %vm1646, %v4978, 0
      %v5039 = vsel %vm1646, %v4979, 0
      %v5042 = vsel %vm1646, %v4980, 0
      %v5045 = vsel %vm557, %v4993, 0
      %5047 = vmatpush.bf16.msra.mxu0 0
      %5048 = vmatpush.bf16.msra.mxu0 0
      %5049 = vmatpush.bf16.msra.mxu0 0
      %5050 = vmatpush.bf16.msra.mxu0 0
      %5051 = vmatpush.bf16.msra.mxu0 0
      %5052 = vmatpush.bf16.msra.mxu0 %v5045
      %5053 = vmatpush.bf16.msra.mxu0 %v4992
      %5054 = vmatpush.bf16.msra.mxu0 %v4991
      %5055 = vmatmul.bf16.gmra.mxu0 %v4997
      %v5056 = vpop.f32.mrf.mxu0
      %v5057 = vadd.f32 0.0, %v5056
      %v5058 = vpop.f32.mrf.mxu0
      %v5059 = vadd.f32 0.0, %v5058
      %5060 = vmatmul.bf16.gmra.mxu0 %v5000
      %v5061 = vpop.f32.mrf.mxu0
      %v5062 = vadd.f32 0.0, %v5061
      %v5063 = vpop.f32.mrf.mxu0
      %v5064 = vadd.f32 0.0, %v5063
      %5065 = vmatmul.bf16.gmra.mxu0 %v5003
      %v5066 = vpop.f32.mrf.mxu0
      %v5067 = vadd.f32 0.0, %v5066
      %v5068 = vpop.f32.mrf.mxu0
      %v5069 = vadd.f32 0.0, %v5068
      %5070 = vmatmul.bf16.gmra.mxu0 %v5006
      %v5071 = vpop.f32.mrf.mxu0
      %v5072 = vadd.f32 0.0, %v5071
      %v5073 = vpop.f32.mrf.mxu0
      %v5074 = vadd.f32 0.0, %v5073
      %5075 = vmatmul.bf16.gmra.mxu0 %v5009
      %v5076 = vpop.f32.mrf.mxu0
      %v5077 = vadd.f32 0.0, %v5076
      %v5078 = vpop.f32.mrf.mxu0
      %v5079 = vadd.f32 0.0, %v5078
      %5080 = vmatmul.bf16.gmra.mxu0 %v5012
      %v5081 = vpop.f32.mrf.mxu0
      %v5082 = vadd.f32 0.0, %v5081
      %v5083 = vpop.f32.mrf.mxu0
      %v5084 = vadd.f32 0.0, %v5083
      %5085 = vmatmul.bf16.gmra.mxu0 %v5015
      %v5086 = vpop.f32.mrf.mxu0
      %v5087 = vadd.f32 0.0, %v5086
      %v5088 = vpop.f32.mrf.mxu0
      %v5089 = vadd.f32 0.0, %v5088
      %5090 = vmatmul.bf16.gmra.mxu0 %v5018
      %v5091 = vpop.f32.mrf.mxu0
      %v5092 = vadd.f32 0.0, %v5091
      %v5093 = vpop.f32.mrf.mxu0
      %v5094 = vadd.f32 0.0, %v5093
      %5095 = vmatmul.bf16.gmra.mxu0 %v5021
      %v5096 = vpop.f32.mrf.mxu0
      %v5097 = vadd.f32 0.0, %v5096
      %v5098 = vpop.f32.mrf.mxu0
      %v5099 = vadd.f32 0.0, %v5098
      %5100 = vmatmul.bf16.gmra.mxu0 %v5024
      %v5101 = vpop.f32.mrf.mxu0
      %v5102 = vadd.f32 0.0, %v5101
      %v5103 = vpop.f32.mrf.mxu0
      %v5104 = vadd.f32 0.0, %v5103
      %5105 = vmatmul.bf16.gmra.mxu0 %v5027
      %v5106 = vpop.f32.mrf.mxu0
      %v5107 = vadd.f32 0.0, %v5106
      %v5108 = vpop.f32.mrf.mxu0
      %v5109 = vadd.f32 0.0, %v5108
      %5110 = vmatmul.bf16.gmra.mxu0 %v5030
      %v5111 = vpop.f32.mrf.mxu0
      %v5112 = vadd.f32 0.0, %v5111
      %v5113 = vpop.f32.mrf.mxu0
      %v5114 = vadd.f32 0.0, %v5113
      %5115 = vmatmul.bf16.gmra.mxu0 %v5033
      %v5116 = vpop.f32.mrf.mxu0
      %v5117 = vadd.f32 0.0, %v5116
      %v5118 = vpop.f32.mrf.mxu0
      %v5119 = vadd.f32 0.0, %v5118
      %5120 = vmatmul.bf16.gmra.mxu0 %v5036
      %v5121 = vpop.f32.mrf.mxu0
      %v5122 = vadd.f32 0.0, %v5121
      %v5123 = vpop.f32.mrf.mxu0
      %v5124 = vadd.f32 0.0, %v5123
      %5125 = vmatmul.bf16.gmra.mxu0 %v5039
      %v5126 = vpop.f32.mrf.mxu0
      %v5127 = vadd.f32 0.0, %v5126
      %v5128 = vpop.f32.mrf.mxu0
      %v5129 = vadd.f32 0.0, %v5128
      %5130 = vmatmul.bf16.gmra.mxu0 %v5042
      %v5131 = vpop.f32.mrf.mxu0
      %v5132 = vadd.f32 0.0, %v5131
      %v5133 = vpop.f32.mrf.mxu0
      %v5134 = vadd.f32 0.0, %v5133
      %5135 = vdwg.mxu0
      %v5136 = vadd.f32 %v4863, %v5057
      %v5137 = vadd.f32 %v4864, %v5059
      %v5138 = vadd.f32 %v4865, %v5062
      %v5139 = vadd.f32 %v4866, %v5064
      %v5140 = vadd.f32 %v4867, %v5067
      %v5141 = vadd.f32 %v4868, %v5069
      %v5142 = vadd.f32 %v4869, %v5072
      %v5143 = vadd.f32 %v4870, %v5074
      %v5144 = vadd.f32 %v4871, %v5077
      %v5145 = vadd.f32 %v4872, %v5079
      %v5146 = vadd.f32 %v4873, %v5082
      %v5147 = vadd.f32 %v4874, %v5084
      %v5148 = vadd.f32 %v4875, %v5087
      %v5149 = vadd.f32 %v4876, %v5089
      %v5150 = vadd.f32 %v4877, %v5092
      %v5151 = vadd.f32 %v4878, %v5094
      %v5152 = vadd.f32 %v4879, %v5097
      %v5153 = vadd.f32 %v4880, %v5099
      %v5154 = vadd.f32 %v4881, %v5102
      %v5155 = vadd.f32 %v4882, %v5104
      %v5156 = vadd.f32 %v4883, %v5107
      %v5157 = vadd.f32 %v4884, %v5109
      %v5158 = vadd.f32 %v4885, %v5112
      %v5159 = vadd.f32 %v4886, %v5114
      %v5160 = vadd.f32 %v4887, %v5117
      %v5161 = vadd.f32 %v4888, %v5119
      %v5162 = vadd.f32 %v4889, %v5122
      %v5163 = vadd.f32 %v4890, %v5124
      %v5164 = vadd.f32 %v4891, %v5127
      %v5165 = vadd.f32 %v4892, %v5129
      %v5166 = vadd.f32 %v4893, %v5132
      %v5167 = vadd.f32 %v4894, %v5134
      %v5168 = vld [vmem:[%s4253 + $0x4] sm:$0xf]
      %v5169 = vld [vmem:[%s4253 + $0x8] sm:$0xf]
      %v5170 = vld [vmem:[%s4253 + $0xc] sm:$0x1]
      %v5171 = vld [vmem:[%s4253 + $0x14] sm:$0xf]
      %v5172 = vld [vmem:[%s4253 + $0x18] sm:$0xf]
      %v5173 = vld [vmem:[%s4253 + $0x1c] sm:$0x1]
      %v5174 = vld [vmem:[%s4253 + $0x24] sm:$0xf]
      %v5175 = vld [vmem:[%s4253 + $0x28] sm:$0xf]
      %v5176 = vld [vmem:[%s4253 + $0x2c] sm:$0x1]
      %v5177 = vld [vmem:[%s4253 + $0x34] sm:$0xf]
      %v5178 = vld [vmem:[%s4253 + $0x38] sm:$0xf]
      %v5179 = vld [vmem:[%s4253 + $0x3c] sm:$0x1]
      %v5180 = vld [vmem:[%s4253 + $0x44] sm:$0xf]
      %v5181 = vld [vmem:[%s4253 + $0x48] sm:$0xf]
      %v5182 = vld [vmem:[%s4253 + $0x4c] sm:$0x1]
      %v5183 = vld [vmem:[%s4253 + $0x54] sm:$0xf]
      %v5184 = vld [vmem:[%s4253 + $0x58] sm:$0xf]
      %v5185 = vld [vmem:[%s4253 + $0x5c] sm:$0x1]
      %v5186 = vld [vmem:[%s4253 + $0x64] sm:$0xf]
      %v5187 = vld [vmem:[%s4253 + $0x68] sm:$0xf]
      %v5188 = vld [vmem:[%s4253 + $0x6c] sm:$0x1]
      %v5189 = vld [vmem:[%s4253 + $0x74] sm:$0xf]
      %v5190 = vld [vmem:[%s4253 + $0x78] sm:$0xf]
      %v5191 = vld [vmem:[%s4253 + $0x7c] sm:$0x1]
      %v5192 = vld [vmem:[%s4253 + $0x84] sm:$0xf]
      %v5193 = vld [vmem:[%s4253 + $0x88] sm:$0xf]
      %v5194 = vld [vmem:[%s4253 + $0x8c] sm:$0x1]
      %v5195 = vld [vmem:[%s4253 + $0x94] sm:$0xf]
      %v5196 = vld [vmem:[%s4253 + $0x98] sm:$0xf]
      %v5197 = vld [vmem:[%s4253 + $0x9c] sm:$0x1]
      %v5198 = vld [vmem:[%s4253 + $0xa4] sm:$0xf]
      %v5199 = vld [vmem:[%s4253 + $0xa8] sm:$0xf]
      %v5200 = vld [vmem:[%s4253 + $0xac] sm:$0x1]
      %v5201 = vld [vmem:[%s4253 + $0xb4] sm:$0xf]
      %v5202 = vld [vmem:[%s4253 + $0xb8] sm:$0xf]
      %v5203 = vld [vmem:[%s4253 + $0xbc] sm:$0x1]
      %v5204 = vld [vmem:[%s4253 + $0xc4] sm:$0xf]
      %v5205 = vld [vmem:[%s4253 + $0xc8] sm:$0xf]
      %v5206 = vld [vmem:[%s4253 + $0xcc] sm:$0x1]
      %v5207 = vld [vmem:[%s4253 + $0xd4] sm:$0xf]
      %v5208 = vld [vmem:[%s4253 + $0xd8] sm:$0xf]
      %v5209 = vld [vmem:[%s4253 + $0xdc] sm:$0x1]
      %v5210 = vld [vmem:[%s4253 + $0xe4] sm:$0xf]
      %v5211 = vld [vmem:[%s4253 + $0xe8] sm:$0xf]
      %v5212 = vld [vmem:[%s4253 + $0xec] sm:$0x1]
      %v5213 = vld [vmem:[%s4253 + $0xf4] sm:$0xf]
      %v5214 = vld [vmem:[%s4253 + $0xf8] sm:$0xf]
      %v5215 = vld [vmem:[%s4253 + $0xfc] sm:$0x1]
      %v5217 = vshrl.u32 %v5168, 16
      %v5219 = vrot.slane %v5217, 4
      %v5220 = vshll.u32 %v5168, 16
      %v5222 = vrot.slane %v5220, 5
      %v5223 = vor.u32 %v5219, %v5222
      %v5224 = vrot.slane %v5223, 4
      %v5226 = vshll.u32 %v5169, 16
      %v5228 = vrot.slane %v5226, 5
      %v5229 = vsel %vm2040, %v5224, %v5228
      %v5230 = vshrl.u32 %v5169, 16
      %v5232 = vrot.slane %v5230, 4
      %v5233 = vor.u32 %v5232, %v5228
      %v5234 = vrot.slane %v5233, 4
      %v5236 = vshll.u32 %v5170, 16
      %v5238 = vrot.slane %v5236, 5
      %v5239 = vsel %vm2040, %v5234, %v5238
      %v5241 = vshrl.u32 %v5171, 16
      %v5243 = vrot.slane %v5241, 4
      %v5244 = vshll.u32 %v5171, 16
      %v5246 = vrot.slane %v5244, 5
      %v5247 = vor.u32 %v5243, %v5246
      %v5248 = vrot.slane %v5247, 4
      %v5250 = vshll.u32 %v5172, 16
      %v5252 = vrot.slane %v5250, 5
      %v5253 = vsel %vm2040, %v5248, %v5252
      %v5254 = vshrl.u32 %v5172, 16
      %v5256 = vrot.slane %v5254, 4
      %v5257 = vor.u32 %v5256, %v5252
      %v5258 = vrot.slane %v5257, 4
      %v5260 = vshll.u32 %v5173, 16
      %v5262 = vrot.slane %v5260, 5
      %v5263 = vsel %vm2040, %v5258, %v5262
      %v5265 = vshrl.u32 %v5174, 16
      %v5267 = vrot.slane %v5265, 4
      %v5268 = vshll.u32 %v5174, 16
      %v5270 = vrot.slane %v5268, 5
      %v5271 = vor.u32 %v5267, %v5270
      %v5272 = vrot.slane %v5271, 4
      %v5274 = vshll.u32 %v5175, 16
      %v5276 = vrot.slane %v5274, 5
      %v5277 = vsel %vm2040, %v5272, %v5276
      %v5278 = vshrl.u32 %v5175, 16
      %v5280 = vrot.slane %v5278, 4
      %v5281 = vor.u32 %v5280, %v5276
      %v5282 = vrot.slane %v5281, 4
      %v5284 = vshll.u32 %v5176, 16
      %v5286 = vrot.slane %v5284, 5
      %v5287 = vsel %vm2040, %v5282, %v5286
      %v5289 = vshrl.u32 %v5177, 16
      %v5291 = vrot.slane %v5289, 4
      %v5292 = vshll.u32 %v5177, 16
      %v5294 = vrot.slane %v5292, 5
      %v5295 = vor.u32 %v5291, %v5294
      %v5296 = vrot.slane %v5295, 4
      %v5298 = vshll.u32 %v5178, 16
      %v5300 = vrot.slane %v5298, 5
      %v5301 = vsel %vm2040, %v5296, %v5300
      %v5302 = vshrl.u32 %v5178, 16
      %v5304 = vrot.slane %v5302, 4
      %v5305 = vor.u32 %v5304, %v5300
      %v5306 = vrot.slane %v5305, 4
      %v5308 = vshll.u32 %v5179, 16
      %v5310 = vrot.slane %v5308, 5
      %v5311 = vsel %vm2040, %v5306, %v5310
      %v5313 = vshrl.u32 %v5180, 16
      %v5315 = vrot.slane %v5313, 4
      %v5316 = vshll.u32 %v5180, 16
      %v5318 = vrot.slane %v5316, 5
      %v5319 = vor.u32 %v5315, %v5318
      %v5320 = vrot.slane %v5319, 4
      %v5322 = vshll.u32 %v5181, 16
      %v5324 = vrot.slane %v5322, 5
      %v5325 = vsel %vm2040, %v5320, %v5324
      %v5326 = vshrl.u32 %v5181, 16
      %v5328 = vrot.slane %v5326, 4
      %v5329 = vor.u32 %v5328, %v5324
      %v5330 = vrot.slane %v5329, 4
      %v5332 = vshll.u32 %v5182, 16
      %v5334 = vrot.slane %v5332, 5
      %v5335 = vsel %vm2040, %v5330, %v5334
      %v5337 = vshrl.u32 %v5183, 16
      %v5339 = vrot.slane %v5337, 4
      %v5340 = vshll.u32 %v5183, 16
      %v5342 = vrot.slane %v5340, 5
      %v5343 = vor.u32 %v5339, %v5342
      %v5344 = vrot.slane %v5343, 4
      %v5346 = vshll.u32 %v5184, 16
      %v5348 = vrot.slane %v5346, 5
      %v5349 = vsel %vm2040, %v5344, %v5348
      %v5350 = vshrl.u32 %v5184, 16
      %v5352 = vrot.slane %v5350, 4
      %v5353 = vor.u32 %v5352, %v5348
      %v5354 = vrot.slane %v5353, 4
      %v5356 = vshll.u32 %v5185, 16
      %v5358 = vrot.slane %v5356, 5
      %v5359 = vsel %vm2040, %v5354, %v5358
      %v5361 = vshrl.u32 %v5186, 16
      %v5363 = vrot.slane %v5361, 4
      %v5364 = vshll.u32 %v5186, 16
      %v5366 = vrot.slane %v5364, 5
      %v5367 = vor.u32 %v5363, %v5366
      %v5368 = vrot.slane %v5367, 4
      %v5370 = vshll.u32 %v5187, 16
      %v5372 = vrot.slane %v5370, 5
      %v5373 = vsel %vm2040, %v5368, %v5372
      %v5374 = vshrl.u32 %v5187, 16
      %v5376 = vrot.slane %v5374, 4
      %v5377 = vor.u32 %v5376, %v5372
      %v5378 = vrot.slane %v5377, 4
      %v5380 = vshll.u32 %v5188, 16
      %v5382 = vrot.slane %v5380, 5
      %v5383 = vsel %vm2040, %v5378, %v5382
      %v5385 = vshrl.u32 %v5189, 16
      %v5387 = vrot.slane %v5385, 4
      %v5388 = vshll.u32 %v5189, 16
      %v5390 = vrot.slane %v5388, 5
      %v5391 = vor.u32 %v5387, %v5390
      %v5392 = vrot.slane %v5391, 4
      %v5394 = vshll.u32 %v5190, 16
      %v5396 = vrot.slane %v5394, 5
      %v5397 = vsel %vm2040, %v5392, %v5396
      %v5398 = vshrl.u32 %v5190, 16
      %v5400 = vrot.slane %v5398, 4
      %v5401 = vor.u32 %v5400, %v5396
      %v5402 = vrot.slane %v5401, 4
      %v5404 = vshll.u32 %v5191, 16
      %v5406 = vrot.slane %v5404, 5
      %v5407 = vsel %vm2040, %v5402, %v5406
      %v5409 = vshrl.u32 %v5192, 16
      %v5411 = vrot.slane %v5409, 4
      %v5412 = vshll.u32 %v5192, 16
      %v5414 = vrot.slane %v5412, 5
      %v5415 = vor.u32 %v5411, %v5414
      %v5416 = vrot.slane %v5415, 4
      %v5418 = vshll.u32 %v5193, 16
      %v5420 = vrot.slane %v5418, 5
      %v5421 = vsel %vm2040, %v5416, %v5420
      %v5422 = vshrl.u32 %v5193, 16
      %v5424 = vrot.slane %v5422, 4
      %v5425 = vor.u32 %v5424, %v5420
      %v5426 = vrot.slane %v5425, 4
      %v5428 = vshll.u32 %v5194, 16
      %v5430 = vrot.slane %v5428, 5
      %v5431 = vsel %vm2040, %v5426, %v5430
      %v5433 = vshrl.u32 %v5195, 16
      %v5435 = vrot.slane %v5433, 4
      %v5436 = vshll.u32 %v5195, 16
      %v5438 = vrot.slane %v5436, 5
      %v5439 = vor.u32 %v5435, %v5438
      %v5440 = vrot.slane %v5439, 4
      %v5442 = vshll.u32 %v5196, 16
      %v5444 = vrot.slane %v5442, 5
      %v5445 = vsel %vm2040, %v5440, %v5444
      %v5446 = vshrl.u32 %v5196, 16
      %v5448 = vrot.slane %v5446, 4
      %v5449 = vor.u32 %v5448, %v5444
      %v5450 = vrot.slane %v5449, 4
      %v5452 = vshll.u32 %v5197, 16
      %v5454 = vrot.slane %v5452, 5
      %v5455 = vsel %vm2040, %v5450, %v5454
      %v5457 = vshrl.u32 %v5198, 16
      %v5459 = vrot.slane %v5457, 4
      %v5460 = vshll.u32 %v5198, 16
      %v5462 = vrot.slane %v5460, 5
      %v5463 = vor.u32 %v5459, %v5462
      %v5464 = vrot.slane %v5463, 4
      %v5466 = vshll.u32 %v5199, 16
      %v5468 = vrot.slane %v5466, 5
      %v5469 = vsel %vm2040, %v5464, %v5468
      %v5470 = vshrl.u32 %v5199, 16
      %v5472 = vrot.slane %v5470, 4
      %v5473 = vor.u32 %v5472, %v5468
      %v5474 = vrot.slane %v5473, 4
      %v5476 = vshll.u32 %v5200, 16
      %v5478 = vrot.slane %v5476, 5
      %v5479 = vsel %vm2040, %v5474, %v5478
      %v5481 = vshrl.u32 %v5201, 16
      %v5483 = vrot.slane %v5481, 4
      %v5484 = vshll.u32 %v5201, 16
      %v5486 = vrot.slane %v5484, 5
      %v5487 = vor.u32 %v5483, %v5486
      %v5488 = vrot.slane %v5487, 4
      %v5490 = vshll.u32 %v5202, 16
      %v5492 = vrot.slane %v5490, 5
      %v5493 = vsel %vm2040, %v5488, %v5492
      %v5494 = vshrl.u32 %v5202, 16
      %v5496 = vrot.slane %v5494, 4
      %v5497 = vor.u32 %v5496, %v5492
      %v5498 = vrot.slane %v5497, 4
      %v5500 = vshll.u32 %v5203, 16
      %v5502 = vrot.slane %v5500, 5
      %v5503 = vsel %vm2040, %v5498, %v5502
      %v5505 = vshrl.u32 %v5204, 16
      %v5507 = vrot.slane %v5505, 4
      %v5508 = vshll.u32 %v5204, 16
      %v5510 = vrot.slane %v5508, 5
      %v5511 = vor.u32 %v5507, %v5510
      %v5512 = vrot.slane %v5511, 4
      %v5514 = vshll.u32 %v5205, 16
      %v5516 = vrot.slane %v5514, 5
      %v5517 = vsel %vm2040, %v5512, %v5516
      %v5518 = vshrl.u32 %v5205, 16
      %v5520 = vrot.slane %v5518, 4
      %v5521 = vor.u32 %v5520, %v5516
      %v5522 = vrot.slane %v5521, 4
      %v5524 = vshll.u32 %v5206, 16
      %v5526 = vrot.slane %v5524, 5
      %v5527 = vsel %vm2040, %v5522, %v5526
      %v5529 = vshrl.u32 %v5207, 16
      %v5531 = vrot.slane %v5529, 4
      %v5532 = vshll.u32 %v5207, 16
      %v5534 = vrot.slane %v5532, 5
      %v5535 = vor.u32 %v5531, %v5534
      %v5536 = vrot.slane %v5535, 4
      %v5538 = vshll.u32 %v5208, 16
      %v5540 = vrot.slane %v5538, 5
      %v5541 = vsel %vm2040, %v5536, %v5540
      %v5542 = vshrl.u32 %v5208, 16
      %v5544 = vrot.slane %v5542, 4
      %v5545 = vor.u32 %v5544, %v5540
      %v5546 = vrot.slane %v5545, 4
      %v5548 = vshll.u32 %v5209, 16
      %v5550 = vrot.slane %v5548, 5
      %v5551 = vsel %vm2040, %v5546, %v5550
      %v5553 = vshrl.u32 %v5210, 16
      %v5555 = vrot.slane %v5553, 4
      %v5556 = vshll.u32 %v5210, 16
      %v5558 = vrot.slane %v5556, 5
      %v5559 = vor.u32 %v5555, %v5558
      %v5560 = vrot.slane %v5559, 4
      %v5562 = vshll.u32 %v5211, 16
      %v5564 = vrot.slane %v5562, 5
      %v5565 = vsel %vm2040, %v5560, %v5564
      %v5566 = vshrl.u32 %v5211, 16
      %v5568 = vrot.slane %v5566, 4
      %v5569 = vor.u32 %v5568, %v5564
      %v5570 = vrot.slane %v5569, 4
      %v5572 = vshll.u32 %v5212, 16
      %v5574 = vrot.slane %v5572, 5
      %v5575 = vsel %vm2040, %v5570, %v5574
      %v5577 = vshrl.u32 %v5213, 16
      %v5579 = vrot.slane %v5577, 4
      %v5580 = vshll.u32 %v5213, 16
      %v5582 = vrot.slane %v5580, 5
      %v5583 = vor.u32 %v5579, %v5582
      %v5584 = vrot.slane %v5583, 4
      %v5586 = vshll.u32 %v5214, 16
      %v5588 = vrot.slane %v5586, 5
      %v5589 = vsel %vm2040, %v5584, %v5588
      %v5590 = vshrl.u32 %v5214, 16
      %v5592 = vrot.slane %v5590, 4
      %v5593 = vor.u32 %v5592, %v5588
      %v5594 = vrot.slane %v5593, 4
      %v5596 = vshll.u32 %v5215, 16
      %v5598 = vrot.slane %v5596, 5
      %v5599 = vsel %vm2040, %v5594, %v5598
      %s5600 = scalar_lea.vmem %s6, 160
      %v5601 = vld [vmem:[%s5600] sm:$0xf]
      %v5602 = vld [vmem:[%s5600 + $0x4] sm:$0xf]
      %v5603 = vld [vmem:[%s5600 + $0x8] sm:$0xf]
      %v5604 = vld [vmem:[%s5600 + $0xc] sm:$0xf]
      %v5605 = vld [vmem:[%s5600 + $0x10] sm:$0x3]
      %v5606 = vunpack.c.l.b16 %v5229
      %v5607 = vunpack.c.l.b16 %v5239
      %v5608 = vunpack.c.l.b16 %v5253
      %v5609 = vunpack.c.l.b16 %v5263
      %v5610 = vunpack.c.l.b16 %v5277
      %v5611 = vunpack.c.l.b16 %v5287
      %v5612 = vunpack.c.l.b16 %v5301
      %v5613 = vunpack.c.l.b16 %v5311
      %v5614 = vunpack.c.l.b16 %v5325
      %v5615 = vunpack.c.l.b16 %v5335
      %v5616 = vunpack.c.l.b16 %v5349
      %v5617 = vunpack.c.l.b16 %v5359
      %v5618 = vunpack.c.l.b16 %v5373
      %v5619 = vunpack.c.l.b16 %v5383
      %v5620 = vunpack.c.l.b16 %v5397
      %v5621 = vunpack.c.l.b16 %v5407
      %v5622 = vunpack.c.l.b16 %v5421
      %v5623 = vunpack.c.l.b16 %v5431
      %v5624 = vunpack.c.l.b16 %v5445
      %v5625 = vunpack.c.l.b16 %v5455
      %v5626 = vunpack.c.l.b16 %v5469
      %v5627 = vunpack.c.l.b16 %v5479
      %v5628 = vunpack.c.l.b16 %v5493
      %v5629 = vunpack.c.l.b16 %v5503
      %v5630 = vunpack.c.l.b16 %v5517
      %v5631 = vunpack.c.l.b16 %v5527
      %v5632 = vunpack.c.l.b16 %v5541
      %v5633 = vunpack.c.l.b16 %v5551
      %v5634 = vunpack.c.l.b16 %v5565
      %v5635 = vunpack.c.l.b16 %v5575
      %v5636 = vunpack.c.l.b16 %v5589
      %v5637 = vunpack.c.l.b16 %v5599
      %v5638 = vpack.c.b16 %v5607, %v5606
      %v5639 = vpack.c.b16 %v5609, %v5608
      %v5640 = vpack.c.b16 %v5611, %v5610
      %v5641 = vpack.c.b16 %v5613, %v5612
      %v5642 = vpack.c.b16 %v5615, %v5614
      %v5643 = vpack.c.b16 %v5617, %v5616
      %v5644 = vpack.c.b16 %v5619, %v5618
      %v5645 = vpack.c.b16 %v5621, %v5620
      %v5646 = vpack.c.b16 %v5623, %v5622
      %v5647 = vpack.c.b16 %v5625, %v5624
      %v5648 = vpack.c.b16 %v5627, %v5626
      %v5649 = vpack.c.b16 %v5629, %v5628
      %v5650 = vpack.c.b16 %v5631, %v5630
      %v5651 = vpack.c.b16 %v5633, %v5632
      %v5652 = vpack.c.b16 %v5635, %v5634
      %v5653 = vpack.c.b16 %v5637, %v5636
      %v5659 = vunpack.c.l.b16 %v5601
      %v5660 = vunpack.c.l.b16 %v5602
      %v5661 = vunpack.c.l.b16 %v5603
      %v5662 = vunpack.c.l.b16 %v5604
      %v5663 = vunpack.c.l.b16 %v5605
      %v5664 = vpack.c.b16 %v5660, %v5659
      %v5665 = vpack.c.b16 %v5662, %v5661
      %v5666 = vpack.c.b16 %v5663, %v5663
      %v5670 = vsel %vm1646, %v5638, 0
      %v5673 = vsel %vm1646, %v5639, 0
      %v5676 = vsel %vm1646, %v5640, 0
      %v5679 = vsel %vm1646, %v5641, 0
      %v5682 = vsel %vm1646, %v5642, 0
      %v5685 = vsel %vm1646, %v5643, 0
      %v5688 = vsel %vm1646, %v5644, 0
      %v5691 = vsel %vm1646, %v5645, 0
      %v5694 = vsel %vm1646, %v5646, 0
      %v5697 = vsel %vm1646, %v5647, 0
      %v5700 = vsel %vm1646, %v5648, 0
      %v5703 = vsel %vm1646, %v5649, 0
      %v5706 = vsel %vm1646, %v5650, 0
      %v5709 = vsel %vm1646, %v5651, 0
      %v5712 = vsel %vm1646, %v5652, 0
      %v5715 = vsel %vm1646, %v5653, 0
      %v5718 = vsel %vm557, %v5666, 0
      %5720 = vmatpush.bf16.msra.mxu0 0
      %5721 = vmatpush.bf16.msra.mxu0 0
      %5722 = vmatpush.bf16.msra.mxu0 0
      %5723 = vmatpush.bf16.msra.mxu0 0
      %5724 = vmatpush.bf16.msra.mxu0 0
      %5725 = vmatpush.bf16.msra.mxu0 %v5718
      %5726 = vmatpush.bf16.msra.mxu0 %v5665
      %5727 = vmatpush.bf16.msra.mxu0 %v5664
      %5728 = vmatmul.bf16.gmra.mxu0 %v5670
      %v5729 = vpop.f32.mrf.mxu0
      %v5730 = vadd.f32 0.0, %v5729
      %v5731 = vpop.f32.mrf.mxu0
      %v5732 = vadd.f32 0.0, %v5731
      %5733 = vmatmul.bf16.gmra.mxu0 %v5673
      %v5734 = vpop.f32.mrf.mxu0
      %v5735 = vadd.f32 0.0, %v5734
      %v5736 = vpop.f32.mrf.mxu0
      %v5737 = vadd.f32 0.0, %v5736
      %5738 = vmatmul.bf16.gmra.mxu0 %v5676
      %v5739 = vpop.f32.mrf.mxu0
      %v5740 = vadd.f32 0.0, %v5739
      %v5741 = vpop.f32.mrf.mxu0
      %v5742 = vadd.f32 0.0, %v5741
      %5743 = vmatmul.bf16.gmra.mxu0 %v5679
      %v5744 = vpop.f32.mrf.mxu0
      %v5745 = vadd.f32 0.0, %v5744
      %v5746 = vpop.f32.mrf.mxu0
      %v5747 = vadd.f32 0.0, %v5746
      %5748 = vmatmul.bf16.gmra.mxu0 %v5682
      %v5749 = vpop.f32.mrf.mxu0
      %v5750 = vadd.f32 0.0, %v5749
      %v5751 = vpop.f32.mrf.mxu0
      %v5752 = vadd.f32 0.0, %v5751
      %5753 = vmatmul.bf16.gmra.mxu0 %v5685
      %v5754 = vpop.f32.mrf.mxu0
      %v5755 = vadd.f32 0.0, %v5754
      %v5756 = vpop.f32.mrf.mxu0
      %v5757 = vadd.f32 0.0, %v5756
      %5758 = vmatmul.bf16.gmra.mxu0 %v5688
      %v5759 = vpop.f32.mrf.mxu0
      %v5760 = vadd.f32 0.0, %v5759
      %v5761 = vpop.f32.mrf.mxu0
      %v5762 = vadd.f32 0.0, %v5761
      %5763 = vmatmul.bf16.gmra.mxu0 %v5691
      %v5764 = vpop.f32.mrf.mxu0
      %v5765 = vadd.f32 0.0, %v5764
      %v5766 = vpop.f32.mrf.mxu0
      %v5767 = vadd.f32 0.0, %v5766
      %5768 = vmatmul.bf16.gmra.mxu0 %v5694
      %v5769 = vpop.f32.mrf.mxu0
      %v5770 = vadd.f32 0.0, %v5769
      %v5771 = vpop.f32.mrf.mxu0
      %v5772 = vadd.f32 0.0, %v5771
      %5773 = vmatmul.bf16.gmra.mxu0 %v5697
      %v5774 = vpop.f32.mrf.mxu0
      %v5775 = vadd.f32 0.0, %v5774
      %v5776 = vpop.f32.mrf.mxu0
      %v5777 = vadd.f32 0.0, %v5776
      %5778 = vmatmul.bf16.gmra.mxu0 %v5700
      %v5779 = vpop.f32.mrf.mxu0
      %v5780 = vadd.f32 0.0, %v5779
      %v5781 = vpop.f32.mrf.mxu0
      %v5782 = vadd.f32 0.0, %v5781
      %5783 = vmatmul.bf16.gmra.mxu0 %v5703
      %v5784 = vpop.f32.mrf.mxu0
      %v5785 = vadd.f32 0.0, %v5784
      %v5786 = vpop.f32.mrf.mxu0
      %v5787 = vadd.f32 0.0, %v5786
      %5788 = vmatmul.bf16.gmra.mxu0 %v5706
      %v5789 = vpop.f32.mrf.mxu0
      %v5790 = vadd.f32 0.0, %v5789
      %v5791 = vpop.f32.mrf.mxu0
      %v5792 = vadd.f32 0.0, %v5791
      %5793 = vmatmul.bf16.gmra.mxu0 %v5709
      %v5794 = vpop.f32.mrf.mxu0
      %v5795 = vadd.f32 0.0, %v5794
      %v5796 = vpop.f32.mrf.mxu0
      %v5797 = vadd.f32 0.0, %v5796
      %5798 = vmatmul.bf16.gmra.mxu0 %v5712
      %v5799 = vpop.f32.mrf.mxu0
      %v5800 = vadd.f32 0.0, %v5799
      %v5801 = vpop.f32.mrf.mxu0
      %v5802 = vadd.f32 0.0, %v5801
      %5803 = vmatmul.bf16.gmra.mxu0 %v5715
      %v5804 = vpop.f32.mrf.mxu0
      %v5805 = vadd.f32 0.0, %v5804
      %v5806 = vpop.f32.mrf.mxu0
      %v5807 = vadd.f32 0.0, %v5806
      %5808 = vdwg.mxu0
      %v5809 = vadd.f32 %v5136, %v5730
      %v5810 = vadd.f32 %v5137, %v5732
      %v5811 = vadd.f32 %v5138, %v5735
      %v5812 = vadd.f32 %v5139, %v5737
      %v5813 = vadd.f32 %v5140, %v5740
      %v5814 = vadd.f32 %v5141, %v5742
      %v5815 = vadd.f32 %v5142, %v5745
      %v5816 = vadd.f32 %v5143, %v5747
      %v5817 = vadd.f32 %v5144, %v5750
      %v5818 = vadd.f32 %v5145, %v5752
      %v5819 = vadd.f32 %v5146, %v5755
      %v5820 = vadd.f32 %v5147, %v5757
      %v5821 = vadd.f32 %v5148, %v5760
      %v5822 = vadd.f32 %v5149, %v5762
      %v5823 = vadd.f32 %v5150, %v5765
      %v5824 = vadd.f32 %v5151, %v5767
      %v5825 = vadd.f32 %v5152, %v5770
      %v5826 = vadd.f32 %v5153, %v5772
      %v5827 = vadd.f32 %v5154, %v5775
      %v5828 = vadd.f32 %v5155, %v5777
      %v5829 = vadd.f32 %v5156, %v5780
      %v5830 = vadd.f32 %v5157, %v5782
      %v5831 = vadd.f32 %v5158, %v5785
      %v5832 = vadd.f32 %v5159, %v5787
      %v5833 = vadd.f32 %v5160, %v5790
      %v5834 = vadd.f32 %v5161, %v5792
      %v5835 = vadd.f32 %v5162, %v5795
      %v5836 = vadd.f32 %v5163, %v5797
      %v5837 = vadd.f32 %v5164, %v5800
      %v5838 = vadd.f32 %v5165, %v5802
      %v5839 = vadd.f32 %v5166, %v5805
      %v5840 = vadd.f32 %v5167, %v5807
      %v5841 = vld [vmem:[%s7] sm:$0x1]
      %v5843 = vperm.slane %v5841, 0
      %v5845 = vadd.f32 %v5809, %v5843
      %v5846 = vadd.f32 %v5810, %v5843
      %v5847 = vadd.f32 %v5811, %v5843
      %v5848 = vadd.f32 %v5812, %v5843
      %v5849 = vadd.f32 %v5813, %v5843
      %v5850 = vadd.f32 %v5814, %v5843
      %v5851 = vadd.f32 %v5815, %v5843
      %v5852 = vadd.f32 %v5816, %v5843
      %v5853 = vadd.f32 %v5817, %v5843
      %v5854 = vadd.f32 %v5818, %v5843
      %v5855 = vadd.f32 %v5819, %v5843
      %v5856 = vadd.f32 %v5820, %v5843
      %v5857 = vadd.f32 %v5821, %v5843
      %v5858 = vadd.f32 %v5822, %v5843
      %v5859 = vadd.f32 %v5823, %v5843
      %v5860 = vadd.f32 %v5824, %v5843
      %v5861 = vadd.f32 %v5825, %v5843
      %v5862 = vadd.f32 %v5826, %v5843
      %v5863 = vadd.f32 %v5827, %v5843
      %v5864 = vadd.f32 %v5828, %v5843
      %v5865 = vadd.f32 %v5829, %v5843
      %v5866 = vadd.f32 %v5830, %v5843
      %v5867 = vadd.f32 %v5831, %v5843
      %v5868 = vadd.f32 %v5832, %v5843
      %v5869 = vadd.f32 %v5833, %v5843
      %v5870 = vadd.f32 %v5834, %v5843
      %v5871 = vadd.f32 %v5835, %v5843
      %v5872 = vadd.f32 %v5836, %v5843
      %v5873 = vadd.f32 %v5837, %v5843
      %v5874 = vadd.f32 %v5838, %v5843
      %v5875 = vadd.f32 %v5839, %v5843
      %v5876 = vadd.f32 %v5840, %v5843
      %v5877 = vmax.f32 %v5845, 0.0
      %v5878 = vmax.f32 %v5846, 0.0
      %v5879 = vmax.f32 %v5847, 0.0
      %v5880 = vmax.f32 %v5848, 0.0
      %v5881 = vmax.f32 %v5849, 0.0
      %v5882 = vmax.f32 %v5850, 0.0
      %v5883 = vmax.f32 %v5851, 0.0
      %v5884 = vmax.f32 %v5852, 0.0
      %v5885 = vmax.f32 %v5853, 0.0
      %v5886 = vmax.f32 %v5854, 0.0
      %v5887 = vmax.f32 %v5855, 0.0
      %v5888 = vmax.f32 %v5856, 0.0
      %v5889 = vmax.f32 %v5857, 0.0
      %v5890 = vmax.f32 %v5858, 0.0
      %v5891 = vmax.f32 %v5859, 0.0
      %v5892 = vmax.f32 %v5860, 0.0
      %v5893 = vmax.f32 %v5861, 0.0
      %v5894 = vmax.f32 %v5862, 0.0
      %v5895 = vmax.f32 %v5863, 0.0
      %v5896 = vmax.f32 %v5864, 0.0
      %v5897 = vmax.f32 %v5865, 0.0
      %v5898 = vmax.f32 %v5866, 0.0
      %v5899 = vmax.f32 %v5867, 0.0
      %v5900 = vmax.f32 %v5868, 0.0
      %v5901 = vmax.f32 %v5869, 0.0
      %v5902 = vmax.f32 %v5870, 0.0
      %v5903 = vmax.f32 %v5871, 0.0
      %v5904 = vmax.f32 %v5872, 0.0
      %v5905 = vmax.f32 %v5873, 0.0
      %v5906 = vmax.f32 %v5874, 0.0
      %v5907 = vmax.f32 %v5875, 0.0
      %v5908 = vmax.f32 %v5876, 0.0
      %5909 = vst [vmem:[%s305] sm:$0xff] %v5877
      %5910 = vst [vmem:[%s305 + $0x8] sm:$0xff] %v5878
      %5911 = vst [vmem:[%s305 + $0x10] sm:$0xff] %v5879
      %5912 = vst [vmem:[%s305 + $0x18] sm:$0xff] %v5880
      %5913 = vst [vmem:[%s305 + $0x20] sm:$0xff] %v5881
      %5914 = vst [vmem:[%s305 + $0x28] sm:$0xff] %v5882
      %5915 = vst [vmem:[%s305 + $0x30] sm:$0xff] %v5883
      %5916 = vst [vmem:[%s305 + $0x38] sm:$0xff] %v5884
      %5917 = vst [vmem:[%s305 + $0x40] sm:$0xff] %v5885
      %5918 = vst [vmem:[%s305 + $0x48] sm:$0xff] %v5886
      %5919 = vst [vmem:[%s305 + $0x50] sm:$0xff] %v5887
      %5920 = vst [vmem:[%s305 + $0x58] sm:$0xff] %v5888
      %5921 = vst [vmem:[%s305 + $0x60] sm:$0xff] %v5889
      %5922 = vst [vmem:[%s305 + $0x68] sm:$0xff] %v5890
      %5923 = vst [vmem:[%s305 + $0x70] sm:$0xff] %v5891
      %5924 = vst [vmem:[%s305 + $0x78] sm:$0xff] %v5892
      %5925 = vst [vmem:[%s305 + $0x80] sm:$0xff] %v5893
      %5926 = vst [vmem:[%s305 + $0x88] sm:$0xff] %v5894
      %5927 = vst [vmem:[%s305 + $0x90] sm:$0xff] %v5895
      %5928 = vst [vmem:[%s305 + $0x98] sm:$0xff] %v5896
      %5929 = vst [vmem:[%s305 + $0xa0] sm:$0xff] %v5897
      %5930 = vst [vmem:[%s305 + $0xa8] sm:$0xff] %v5898
      %5931 = vst [vmem:[%s305 + $0xb0] sm:$0xff] %v5899
      %5932 = vst [vmem:[%s305 + $0xb8] sm:$0xff] %v5900
      %5933 = vst [vmem:[%s305 + $0xc0] sm:$0xff] %v5901
      %5934 = vst [vmem:[%s305 + $0xc8] sm:$0xff] %v5902
      %5935 = vst [vmem:[%s305 + $0xd0] sm:$0xff] %v5903
      %5936 = vst [vmem:[%s305 + $0xd8] sm:$0xff] %v5904
      %5937 = vst [vmem:[%s305 + $0xe0] sm:$0xff] %v5905
      %5938 = vst [vmem:[%s305 + $0xe8] sm:$0xff] %v5906
      %5939 = vst [vmem:[%s305 + $0xf0] sm:$0xff] %v5907
      %5940 = vst [vmem:[%s305 + $0xf8] sm:$0xff] %v5908
      %p5941 = scmp.lt.s32.totalorder %s19, 1
      %s5942 = scalar_select %p5941, %s19, 1
      %s5943 = smul.addr %s5942, 32
      %s5944 = smul.addr %s5943, 8
      %s5945 = scalar_lea.vmem %s8, %s5944
      // Predicated region
      $region53: #{pyramid_pooling_forward.1} parent=51 // pred_check
        %p5946 = pneg %p210
      $region54: #{pyramid_pooling_forward.1} parent=51 // pred_check_branch
        %5948 = sbr.rel (%p5946) target = $region56
      $region55: #{pyramid_pooling_forward.1} parent=51 // pred_region
        _
      $region56: #{pyramid_pooling_forward.1} parent=51 // pred_fallthru
        _
    $region52: #{pyramid_pooling_forward.1} parent=5 // pred_fallthru
      _
    %p5949 = scmp.le.s32.totalorder 2, %s14
    // Predicated region
    $region57: #{pyramid_pooling_forward.1} parent=5 // pred_check
      %p5950 = pneg %p5949
    $region58: #{pyramid_pooling_forward.1} parent=5 // pred_check_branch
      %5952 = sbr.rel (%p5950) target = $region60
    $region59: #{pyramid_pooling_forward.1} parent=5 // pred_region
      %s5953 = ssub.s32 %s14, 2
      // Predicated region
      $region61: #{pyramid_pooling_forward.1} parent=59 // pred_check
        %p5954 = pneg %p216
      $region62: #{pyramid_pooling_forward.1} parent=59 // pred_check_branch
        %5956 = sbr.rel (%p5954) target = $region64
      $region63: #{pyramid_pooling_forward.1} parent=59 // pred_region
        %p5957 = scmp.lt.s32.totalorder %s20, 1
        %s5958 = scalar_select %p5957, %s20, 1
        %s5959 = smul.addr %s5958, 32
        %s5960 = smul.addr %s5959, 8
        %s5961 = scalar_lea.vmem %s8, %s5960
      $region64: #{pyramid_pooling_forward.1} parent=59 // pred_fallthru
        _
    $region60: #{pyramid_pooling_forward.1} parent=5 // pred_fallthru
      _
  $region6: #{pyramid_pooling_forward.1} parent=0 // loop_footer
    %s18 = sadd.s32 1, %s14
  $region7: #{pyramid_pooling_forward.1} parent=0 // loop_footer_branch
    %13 = sbr.rel target = $region3
  $region8: #{pyramid_pooling_forward.1} parent=0 // loop_exit
    _

</llo_original>
